<compile_context>
chip_gen: v5e
topology: v5e:2x2
jax: 0.10.0
libtpu: 0.0.40
codegen_flags: <defaults>
</compile_context>

<pallas_src>
import math

import jax
import jax.numpy as jnp
from jax.experimental import pallas as pl
from jax.experimental.pallas import tpu as pltpu

# ----------------------------- config --------------------------------------
N_EMBD = 32
N_HEAD = 4
N_LAYER = 2
BLOCK_SIZE = 8          # config.block_size  (attn buffer is 3x this, 'w_key')
MAX_TIMESTEP = 20
STATE_DIM = 8
ACTION_DIM = 6
KEY_DIM = 5
USE_KEY_ENERGY = False
COMMIT = False          # -> action_predictor branch

LN_EPS = 1e-5
QKV_PAD = 128           # lane-padded width of the fused QKV projection
OUT_PAD = 128           # lane-friendly padded predictor output width
NEG_INF = -1e30


# ----------------------------- fused kernel --------------------------------
def fused_forward_kernel(states_ref, keys_ref, actions_ref, gpe_ref,
                         lpe_ref, amask_ref, attn_mask_ref,
                         enc_w0_ref, enc_b0_ref, enc_w1_ref, enc_b1_ref,
                         blk_wA_ref, blk_bA_ref, blk_wB_ref, blk_vec_ref,
                         lnf_ref,
                         pw0_ref, pw1_ref, pw2_ref, pb01_ref, pb2_ref,
                         out_ref):
    C = N_EMBD
    H = N_HEAD
    dh = C // H
    Bb, Tp, _ = states_ref.shape
    S = 3 * Tp
    scale = 1.0 / math.sqrt(dh)

    def dot(a, b):
        return jnp.dot(a, b, preferred_element_type=jnp.float32)

    def layer_norm(z, w, b):
        mu = jnp.mean(z, axis=-1, keepdims=True)
        var = jnp.mean(jnp.square(z - mu), axis=-1, keepdims=True)
        return (z - mu) * jax.lax.rsqrt(var + LN_EPS) * w + b

    def encoder(x2d, g):
        hh = jnp.maximum(dot(x2d, enc_w0_ref[g]) + enc_b0_ref[g], 0.0)
        return dot(hh, enc_w1_ref[g]) + enc_b1_ref[g]

    n_rows = Bb * Tp
    # ---- token embeddings (all B_blk rows flattened into one matmul M-dim) -
    s_emb = encoder(states_ref[...].reshape(n_rows, -1), 0).reshape(Bb, Tp, C)
    k_emb = encoder(keys_ref[...].reshape(n_rows, -1), 1).reshape(Bb, Tp, C)
    a_emb = encoder(actions_ref[...].reshape(n_rows, -1), 2).reshape(Bb, Tp, C)
    a_emb = a_emb * amask_ref[...]          # zero rows t >= T-1 (and padding)

    # positional embedding: local per-timestep + pre-gathered global per-batch
    pe = lpe_ref[...][None, :, :] + gpe_ref[...]                 # (Bb, Tp, C)

    # grouped, 8-aligned layout: rows [0:Tp)=state, [Tp:2Tp)=key, [2Tp:3Tp)=act
    x = jnp.concatenate([s_emb + pe, k_emb + pe, a_emb + pe], axis=1)
    xf = x.reshape(Bb * S, C)

    mask = attn_mask_ref[...][None, :, :]                        # (1, S, S) additive

    # ---- transformer blocks (N_LAYER tiny -> unrolled, static indices) ----
    for l in range(N_LAYER):
        ln1w = blk_vec_ref[l, 0:1, :]
        ln1b = blk_vec_ref[l, 1:2, :]
        ln2w = blk_vec_ref[l, 2:3, :]
        ln2b = blk_vec_ref[l, 3:4, :]
        bp = blk_vec_ref[l, 4:5, :]
        b2 = blk_vec_ref[l, 5:6, :]

        # attention: one fused QKV matmul (lane-padded to 128 output cols)
        xn = layer_norm(xf, ln1w, ln1b)                          # (Bb*S, C)
        qkv = dot(xn, blk_wA_ref[l, :, 0:QKV_PAD]) + blk_bA_ref[l, :, 0:QKV_PAD]
        qkv = qkv.reshape(Bb, S, QKV_PAD)                        # cols [0:3C) valid

        ys = []
        for hd in range(H):
            q = qkv[:, :, hd * dh:(hd + 1) * dh]
            k = qkv[:, :, C + hd * dh:C + (hd + 1) * dh]
            v = qkv[:, :, 2 * C + hd * dh:2 * C + (hd + 1) * dh]
            att = jnp.einsum('bqd,bkd->bqk', q, k,
                             preferred_element_type=jnp.float32) * scale
            att = att + mask
            att = att - jnp.max(att, axis=-1, keepdims=True)
            e = jnp.exp(att)
            p = e * pl.reciprocal(jnp.sum(e, axis=-1, keepdims=True), approx=True)
            ys.append(jnp.einsum('bqk,bkd->bqd', p, v,
                                 preferred_element_type=jnp.float32))
        y = jnp.concatenate(ys, axis=-1).reshape(Bb * S, C)      # head-concat (lanes)
        xf = xf + dot(y, blk_wB_ref[l, 0:C, :]) + bp             # single out-proj

        # MLP (GELU exact, matching torch F.gelu default)
        x2 = layer_norm(xf, ln2w, ln2b)
        m = (dot(x2, blk_wA_ref[l, :, QKV_PAD:QKV_PAD + 4 * C])
             + blk_bA_ref[l, :, QKV_PAD:QKV_PAD + 4 * C])
        m = 0.5 * m * (1.0 + jax.lax.erf(m * (1.0 / math.sqrt(2.0))))
        xf = xf + dot(m, blk_wB_ref[l, C:5 * C, :]) + b2

    # ---- final LN + predictor on the selected token group -----------------
    xf = layer_norm(xf, lnf_ref[0:1, :], lnf_ref[1:2, :])
    x3 = xf.reshape(Bb, S, C)
    sel = x3[:, 0:Tp, :] if COMMIT else x3[:, Tp:2 * Tp, :]      # aligned slice
    sel = sel.reshape(Bb * Tp, C)
    h0 = jnp.maximum(dot(sel, pw0_ref[...]) + pb01_ref[0:1, :], 0.0)
    h1 = jnp.maximum(dot(h0, pw1_ref[...]) + pb01_ref[1:2, :], 0.0)
    out = dot(h1, pw2_ref[...]) + pb2_ref[...]                   # (Bb*Tp, OUT_PAD)
    out_ref[...] = out.reshape(Bb, Tp, OUT_PAD).astype(out_ref.dtype)


# ----------------------------- wrapper --------------------------------------
def act_commit_net_forward(params, states, timesteps, actions, keys):
    B, T, _ = states.shape
    C, L = N_EMBD, N_LAYER
    out_dim = KEY_DIM if COMMIT else ACTION_DIM
    f32 = jnp.float32

    # sequence padding to 8 sublanes; per-encoder feature padding to a common width
    T_pad = ((T + 7) // 8) * 8
    S_pad = 3 * T_pad
    key_in = KEY_DIM + STATE_DIM if USE_KEY_ENERGY else KEY_DIM
    FEAT = max(STATE_DIM, key_in, ACTION_DIM)

    # batch blocking: fill the MXU M-dim, keep >= 2 grid steps for v7x megacore
    B_blk = max(1, min(B, 256 // S_pad))
    if B >= 2:
        B_blk = min(B_blk, (B + 1) // 2)
    B_pad = ((B + B_blk - 1) // B_blk) * B_blk
    n_steps = B_pad // B_blk

    def pad_to(x, shape):
        return jnp.pad(x, [(0, s - d) for s, d in zip(shape, x.shape)])

    # ---- batched data (padded batch rows are garbage-in, sliced off) -------
    states_p = pad_to(states.astype(f32), (B_pad, T_pad, FEAT))
    keys_p = pad_to(keys.astype(f32), (B_pad, T_pad, FEAT))
    actions_p = pad_to(actions.astype(f32), (B_pad, T_pad, FEAT))

    # pre-gathered global positional embedding row per batch element
    ts = timesteps.reshape(B).astype(jnp.int32)
    gpe = params["global_pos_emb"][0][ts].astype(f32)                 # (B, C)
    gpe_p = pad_to(gpe, (B_pad, C)).reshape(B_pad, 1, C)

    lpe = pad_to(params["local_pos_emb"][0].astype(f32), (T_pad, C))  # (T_pad, C)

    # action-group row mask (only rows t < T-1 carry real action embeddings)
    amask = (jnp.arange(T_pad) < (T - 1)).astype(f32).reshape(T_pad, 1)

    # additive causal mask in grouped layout (interleaved positions 3*t + group)
    r = jnp.arange(S_pad)
    pos = 3 * (r % T_pad) + (r // T_pad)
    attn_mask = jnp.where(pos[None, :] <= pos[:, None], 0.0, NEG_INF).astype(f32)

    # ---- packed weight slabs ------------------------------------------------
    def enc_pack(layers):
        (w0, b0), (w1, b1) = layers
        return pad_to(w0, (FEAT, 256)), b0, w1, b1

    enc = [enc_pack(params[n])
           for n in ("state_encoder", "key_encoder", "action_encoder")]
    enc_w0 = jnp.stack([e[0] for e in enc], 0)                    # (3, FEAT, 256)
    enc_b0 = jnp.stack([e[1] for e in enc], 0)                    # (3, 1, 256)
    enc_w1 = jnp.stack([e[2] for e in enc], 0)                    # (3, 256, C)
    enc_b1 = jnp.stack([e[3] for e in enc], 0)                    # (3, 1, C)

    blk = params["blocks"]
    zw = jnp.zeros((L, C, QKV_PAD - 3 * C), f32)
    zb = jnp.zeros((L, 1, QKV_PAD - 3 * C), f32)
    blk_wA = jnp.concatenate([blk["wqkv"], zw, blk["w1"]], axis=2)   # (L, C, 256)
    blk_bA = jnp.concatenate([blk["bqkv"], zb, blk["b1"]], axis=2)   # (L, 1, 256)
    blk_wB = jnp.concatenate([blk["wp"], blk["w2"]], axis=1)         # (L, 5C, C)
    blk_vec = jnp.concatenate([blk["ln1w"], blk["ln1b"], blk["ln2w"],
                               blk["ln2b"], blk["bp"], blk["b2"]], axis=1)  # (L,6,C)

    lnf = jnp.concatenate([params["ln_w"], params["ln_b"]], axis=0)  # (2, C)

    (pw0, pb0), (pw1, pb1), (pw2, pb2) = params["predictor"]
    pw2_p = pad_to(pw2, (256, OUT_PAD))
    pb2_p = pad_to(pb2, (1, OUT_PAD))
    pb01 = jnp.concatenate([pb0, pb1], axis=0)                       # (2, 256)

    batched = [states_p, keys_p, actions_p, gpe_p]
    consts = [lpe, amask, attn_mask,
              enc_w0, enc_b0, enc_w1, enc_b1,
              blk_wA, blk_bA, blk_wB, blk_vec,
              lnf, pw0, pw1, pw2_p, pb01, pb2_p]

    def batch_spec(arr):
        nz = arr.ndim - 1
        return pl.BlockSpec((B_blk,) + tuple(arr.shape[1:]),
                            lambda i, _nz=nz: (i,) + (0,) * _nz)

    def const_spec(arr):
        nd = arr.ndim
        return pl.BlockSpec(tuple(arr.shape), lambda i, _nd=nd: (0,) * _nd)

    out = pl.pallas_call(
        fused_forward_kernel,
        out_shape=jax.ShapeDtypeStruct((B_pad, T_pad, OUT_PAD), f32),
        grid=(n_steps,),
        in_specs=[batch_spec(a) for a in batched] + [const_spec(a) for a in consts],
        out_specs=pl.BlockSpec((B_blk, T_pad, OUT_PAD), lambda i: (i, 0, 0)),
        compiler_params=pltpu.CompilerParams(
            dimension_semantics=("parallel",)),
    )(*batched, *consts)

    return out[:B, :T, :out_dim]


# ----------------------------- params --------------------------------------
def init_params(key):
    keys = jax.random.split(key, 32)
    it = iter(keys)
    C = N_EMBD

    def lin(din, dout):
        w = jax.random.normal(next(it), (din, dout), jnp.float32) * 0.02
        b = jnp.zeros((1, dout), jnp.float32)
        return w, b

    p = {}
    p["state_encoder"] = [lin(STATE_DIM, 256), lin(256, C)]
    p["action_encoder"] = [lin(ACTION_DIM, 256), lin(256, C)]
    key_in = KEY_DIM + STATE_DIM if USE_KEY_ENERGY else KEY_DIM
    p["key_encoder"] = [lin(key_in, 256), lin(256, C)]

    names = ("ln1w", "ln1b", "wqkv", "bqkv", "wp", "bp",
             "ln2w", "ln2b", "w1", "b1", "w2", "b2")
    blocks = {k: [] for k in names}
    for _ in range(N_LAYER):
        wq, bq = lin(C, C)
        wk, bk = lin(C, C)
        wv, bv = lin(C, C)
        blocks["wqkv"].append(jnp.concatenate([wq, wk, wv], axis=1))
        blocks["bqkv"].append(jnp.concatenate([bq, bk, bv], axis=1))
        wp_, bp_ = lin(C, C)
        blocks["wp"].append(wp_); blocks["bp"].append(bp_)
        w1_, b1_ = lin(C, 4 * C)
        blocks["w1"].append(w1_); blocks["b1"].append(b1_)
        w2_, b2_ = lin(4 * C, C)
        blocks["w2"].append(w2_); blocks["b2"].append(b2_)
        blocks["ln1w"].append(jnp.ones((1, C), jnp.float32))
        blocks["ln1b"].append(jnp.zeros((1, C), jnp.float32))
        blocks["ln2w"].append(jnp.ones((1, C), jnp.float32))
        blocks["ln2b"].append(jnp.zeros((1, C), jnp.float32))
    p["blocks"] = {k: jnp.stack(v, axis=0) for k, v in blocks.items()}

    p["ln_w"] = jnp.ones((1, C), jnp.float32)
    p["ln_b"] = jnp.zeros((1, C), jnp.float32)

    if COMMIT:
        p["predictor"] = [lin(C, 256), lin(256, 256), lin(256, KEY_DIM)]
    else:
        p["predictor"] = [lin(C, 256), lin(256, 256), lin(256, ACTION_DIM)]

    # torch inits these nn.Parameters to zeros; small random values here so the
    # positional-embedding path is actually exercised by the reference check.
    p["local_pos_emb"] = jax.random.normal(next(it), (1, BLOCK_SIZE, C), jnp.float32) * 0.02
    p["global_pos_emb"] = jax.random.normal(next(it), (1, MAX_TIMESTEP, C), jnp.float32) * 0.02
    return p


# ----------------------------- pure-JAX reference ---------------------------
def ref_forward(params, states, timesteps, actions, keys):
    B, T, _ = states.shape
    C, H = N_EMBD, N_HEAD
    dh = C // H
    S = 3 * T

    def mlp(x, layers):
        for i, (w, b) in enumerate(layers):
            x = x @ w + b
            if i < len(layers) - 1:
                x = jnp.maximum(x, 0.0)
        return x

    def ln(z, w, b):
        mu = jnp.mean(z, axis=-1, keepdims=True)
        var = jnp.mean(jnp.square(z - mu), axis=-1, keepdims=True)
        return (z - mu) * jax.lax.rsqrt(var + LN_EPS) * w + b

    s_emb = mlp(states.reshape(B * T, -1), params["state_encoder"]).reshape(B, T, C)
    k_emb = mlp(keys.reshape(B * T, -1), params["key_encoder"]).reshape(B, T, C)
    a_emb = mlp(actions[:, :T - 1].reshape(B * (T - 1), -1),
                params["action_encoder"]).reshape(B, T - 1, C)

    tok = jnp.zeros((B, S, C), jnp.float32)
    tok = tok.at[:, 0:S:3].set(s_emb)
    tok = tok.at[:, 1:S:3].set(k_emb)
    tok = tok.at[:, 2:S - 1:3].set(a_emb)

    g_all = jnp.broadcast_to(params["global_pos_emb"], (B, MAX_TIMESTEP, C))
    idx = jnp.broadcast_to(timesteps[:, :, None].astype(jnp.int32), (B, 1, C))
    gpe = jnp.take_along_axis(g_all, idx, axis=1)
    lpe = jnp.repeat(params["local_pos_emb"][:, :T, :], 3, axis=1)
    x = tok + gpe + lpe

    causal = jnp.tril(jnp.ones((S, S), bool))
    blk = params["blocks"]
    scale = 1.0 / math.sqrt(dh)
    for l in range(N_LAYER):
        xn = ln(x, blk["ln1w"][l], blk["ln1b"][l])
        qkv = xn @ blk["wqkv"][l] + blk["bqkv"][l]
        q = qkv[..., 0:C].reshape(B, S, H, dh).transpose(0, 2, 1, 3)
        k = qkv[..., C:2 * C].reshape(B, S, H, dh).transpose(0, 2, 1, 3)
        v = qkv[..., 2 * C:3 * C].reshape(B, S, H, dh).transpose(0, 2, 1, 3)
        att = jnp.einsum('bhqd,bhkd->bhqk', q, k) * scale
        att = jnp.where(causal[None, None], att, -jnp.inf)
        att = att - jnp.max(att, axis=-1, keepdims=True)
        e = jnp.exp(att)
        att = e / jnp.sum(e, axis=-1, keepdims=True)
        y = jnp.einsum('bhqk,bhkd->bhqd', att, v)
        y = y.transpose(0, 2, 1, 3).reshape(B, S, C)
        x = x + y @ blk["wp"][l] + blk["bp"][l]
        x2 = ln(x, blk["ln2w"][l], blk["ln2b"][l])
        m = x2 @ blk["w1"][l] + blk["b1"][l]
        m = 0.5 * m * (1.0 + jax.lax.erf(m * (1.0 / math.sqrt(2.0))))
        x = x + m @ blk["w2"][l] + blk["b2"][l]

    x = ln(x, params["ln_w"], params["ln_b"])
    out_dim = KEY_DIM if COMMIT else ACTION_DIM
    sel = x[:, 0:S:3, :] if COMMIT else x[:, 1:S:3, :]
    return mlp(sel.reshape(B * T, C), params["predictor"]).reshape(B, T, out_dim)


# ----------------------------- main -----------------------------------------
if __name__ == "__main__":
    root = jax.random.PRNGKey(0)
    kp, ks, ka, kk, kt = jax.random.split(root, 5)

    params = init_params(kp)

    B, T = 2, 4
    states = jax.random.normal(ks, (B, T, STATE_DIM), jnp.float32)
    actions = jax.random.normal(ka, (B, T, ACTION_DIM), jnp.float32)
    keys = jax.random.normal(kk, (B, T, KEY_DIM), jnp.float32)
    timesteps = jax.random.randint(kt, (B, 1), 0, MAX_TIMESTEP, jnp.int32)

    fwd = jax.jit(act_commit_net_forward)
    out = jax.block_until_ready(fwd(params, states, timesteps, actions, keys))

    ref = jax.block_until_ready(
        jax.jit(ref_forward)(params, states, timesteps, actions, keys))

    out_dim = KEY_DIM if COMMIT else ACTION_DIM
    assert out.shape == (B, T, out_dim), out.shape
    assert bool(jnp.all(jnp.isfinite(out)))
    err = float(jnp.max(jnp.abs(out - ref)))
    assert err < 2e-3, f"max abs err vs pure-JAX reference: {err}"
    print("KERNEL_OK")
</pallas_src>

<mosaic_0001>
module attributes {stable_mosaic.version = 11 : i64} {
  func.func @fused_forward_kernel(%arg0: i32, %arg1: memref<1x8x8xf32, #tpu.memory_space<vmem>>, %arg2: memref<1x8x8xf32, #tpu.memory_space<vmem>>, %arg3: memref<1x8x8xf32, #tpu.memory_space<vmem>>, %arg4: memref<1x1x32xf32, #tpu.memory_space<vmem>>, %arg5: memref<8x32xf32, #tpu.memory_space<vmem>>, %arg6: memref<8x1xf32, #tpu.memory_space<vmem>>, %arg7: memref<24x24xf32, #tpu.memory_space<vmem>>, %arg8: memref<3x8x256xf32, #tpu.memory_space<vmem>>, %arg9: memref<3x1x256xf32, #tpu.memory_space<vmem>>, %arg10: memref<3x256x32xf32, #tpu.memory_space<vmem>>, %arg11: memref<3x1x32xf32, #tpu.memory_space<vmem>>, %arg12: memref<2x32x256xf32, #tpu.memory_space<vmem>>, %arg13: memref<2x1x256xf32, #tpu.memory_space<vmem>>, %arg14: memref<2x160x32xf32, #tpu.memory_space<vmem>>, %arg15: memref<2x6x32xf32, #tpu.memory_space<vmem>>, %arg16: memref<2x32xf32, #tpu.memory_space<vmem>>, %arg17: memref<32x256xf32, #tpu.memory_space<vmem>>, %arg18: memref<256x256xf32, #tpu.memory_space<vmem>>, %arg19: memref<256x128xf32, #tpu.memory_space<vmem>>, %arg20: memref<2x256xf32, #tpu.memory_space<vmem>>, %arg21: memref<1x128xf32, #tpu.memory_space<vmem>>, %arg22: memref<1x8x128xf32, #tpu.memory_space<vmem>>) attributes {dimension_semantics = [#tpu.dimension_semantics<parallel>], iteration_bounds = array<i64: 2>, scalar_prefetch = 0 : i64, scratch_operands = 0 : i64, tpu.core_type = #tpu.core_type<tc>, window_params = [{transform_indices = @transform_0, window_bounds = array<i64: 1, 8, 8>}, {transform_indices = @transform_1, window_bounds = array<i64: 1, 8, 8>}, {transform_indices = @transform_2, window_bounds = array<i64: 1, 8, 8>}, {transform_indices = @transform_3, window_bounds = array<i64: 1, 1, 32>}, {pipeline_mode = #tpu.pipeline_mode<synchronous>, transform_indices = @transform_4, window_bounds = array<i64: 8, 32>}, {pipeline_mode = #tpu.pipeline_mode<synchronous>, transform_indices = @transform_5, window_bounds = array<i64: 8, 1>}, {pipeline_mode = #tpu.pipeline_mode<synchronous>, transform_indices = @transform_6, window_bounds = array<i64: 24, 24>}, {pipeline_mode = #tpu.pipeline_mode<synchronous>, transform_indices = @transform_7, window_bounds = array<i64: 3, 8, 256>}, {pipeline_mode = #tpu.pipeline_mode<synchronous>, transform_indices = @transform_8, window_bounds = array<i64: 3, 1, 256>}, {pipeline_mode = #tpu.pipeline_mode<synchronous>, transform_indices = @transform_9, window_bounds = array<i64: 3, 256, 32>}, {pipeline_mode = #tpu.pipeline_mode<synchronous>, transform_indices = @transform_10, window_bounds = array<i64: 3, 1, 32>}, {pipeline_mode = #tpu.pipeline_mode<synchronous>, transform_indices = @transform_11, window_bounds = array<i64: 2, 32, 256>}, {pipeline_mode = #tpu.pipeline_mode<synchronous>, transform_indices = @transform_12, window_bounds = array<i64: 2, 1, 256>}, {pipeline_mode = #tpu.pipeline_mode<synchronous>, transform_indices = @transform_13, window_bounds = array<i64: 2, 160, 32>}, {pipeline_mode = #tpu.pipeline_mode<synchronous>, transform_indices = @transform_14, window_bounds = array<i64: 2, 6, 32>}, {pipeline_mode = #tpu.pipeline_mode<synchronous>, transform_indices = @transform_15, window_bounds = array<i64: 2, 32>}, {pipeline_mode = #tpu.pipeline_mode<synchronous>, transform_indices = @transform_16, window_bounds = array<i64: 32, 256>}, {pipeline_mode = #tpu.pipeline_mode<synchronous>, transform_indices = @transform_17, window_bounds = array<i64: 256, 256>}, {pipeline_mode = #tpu.pipeline_mode<synchronous>, transform_indices = @transform_18, window_bounds = array<i64: 256, 128>}, {pipeline_mode = #tpu.pipeline_mode<synchronous>, transform_indices = @transform_19, window_bounds = array<i64: 2, 256>}, {pipeline_mode = #tpu.pipeline_mode<synchronous>, transform_indices = @transform_20, window_bounds = array<i64: 1, 128>}, {transform_indices = @transform_21, window_bounds = array<i64: 1, 8, 128>}]} {
    %c0 = arith.constant 0 : index
    %c0_0 = arith.constant 0 : index
    %c0_1 = arith.constant 0 : index
    %0 = vector.load %arg1[%c0, %c0_0, %c0_1] : memref<1x8x8xf32, #tpu.memory_space<vmem>>, vector<1x8x8xf32>
    %1 = vector.shape_cast %0 : vector<1x8x8xf32> to vector<8x8xf32>
    %c0_2 = arith.constant 0 : index
    %c0_3 = arith.constant 0 : index
    %c0_4 = arith.constant 0 : index
    %2 = vector.load %arg8[%c0_2, %c0_3, %c0_4] : memref<3x8x256xf32, #tpu.memory_space<vmem>>, vector<1x8x256xf32>
    %3 = vector.shape_cast %2 : vector<1x8x256xf32> to vector<8x256xf32>
    %cst = arith.constant dense<0.000000e+00> : vector<8x256xf32>
    %4 = tpu.matmul %1, %3, %cst {dimension_numbers = #tpu.dot_dimension_numbers<[1], [0], [0], [1], [0, 0, 1, 1], [], []>} : vector<8x8xf32>, vector<8x256xf32>, vector<8x256xf32> -> vector<8x256xf32>
    %c0_5 = arith.constant 0 : index
    %c0_6 = arith.constant 0 : index
    %c0_7 = arith.constant 0 : index
    %5 = vector.load %arg9[%c0_5, %c0_6, %c0_7] : memref<3x1x256xf32, #tpu.memory_space<vmem>>, vector<1x1x256xf32>
    %6 = vector.shape_cast %5 : vector<1x1x256xf32> to vector<1x256xf32>
    %7 = vector.broadcast %6 : vector<1x256xf32> to vector<8x256xf32>
    %8 = arith.addf %4, %7 : vector<8x256xf32>
    %cst_8 = arith.constant 0.000000e+00 : f32
    %9 = vector.broadcast %cst_8 : f32 to vector<8x256xf32>
    %10 = arith.maximumf %8, %9 : vector<8x256xf32>
    %c0_9 = arith.constant 0 : index
    %c0_10 = arith.constant 0 : index
    %c0_11 = arith.constant 0 : index
    %11 = vector.load %arg10[%c0_9, %c0_10, %c0_11] : memref<3x256x32xf32, #tpu.memory_space<vmem>>, vector<1x256x32xf32>
    %12 = vector.shape_cast %11 : vector<1x256x32xf32> to vector<256x32xf32>
    %cst_12 = arith.constant dense<0.000000e+00> : vector<8x32xf32>
    %13 = tpu.matmul %10, %12, %cst_12 {dimension_numbers = #tpu.dot_dimension_numbers<[1], [0], [0], [1], [0, 0, 1, 1], [], []>} : vector<8x256xf32>, vector<256x32xf32>, vector<8x32xf32> -> vector<8x32xf32>
    %c0_13 = arith.constant 0 : index
    %c0_14 = arith.constant 0 : index
    %c0_15 = arith.constant 0 : index
    %14 = vector.load %arg11[%c0_13, %c0_14, %c0_15] : memref<3x1x32xf32, #tpu.memory_space<vmem>>, vector<1x1x32xf32>
    %15 = vector.shape_cast %14 : vector<1x1x32xf32> to vector<1x32xf32>
    %16 = vector.broadcast %15 : vector<1x32xf32> to vector<8x32xf32>
    %17 = arith.addf %13, %16 : vector<8x32xf32>
    %18 = vector.shape_cast %17 : vector<8x32xf32> to vector<1x8x32xf32>
    %c0_16 = arith.constant 0 : index
    %c0_17 = arith.constant 0 : index
    %c0_18 = arith.constant 0 : index
    %19 = vector.load %arg2[%c0_16, %c0_17, %c0_18] : memref<1x8x8xf32, #tpu.memory_space<vmem>>, vector<1x8x8xf32>
    %20 = vector.shape_cast %19 : vector<1x8x8xf32> to vector<8x8xf32>
    %c1 = arith.constant 1 : index
    %c0_19 = arith.constant 0 : index
    %c0_20 = arith.constant 0 : index
    %21 = vector.load %arg8[%c1, %c0_19, %c0_20] : memref<3x8x256xf32, #tpu.memory_space<vmem>>, vector<1x8x256xf32>
    %22 = vector.shape_cast %21 : vector<1x8x256xf32> to vector<8x256xf32>
    %cst_21 = arith.constant dense<0.000000e+00> : vector<8x256xf32>
    %23 = tpu.matmul %20, %22, %cst_21 {dimension_numbers = #tpu.dot_dimension_numbers<[1], [0], [0], [1], [0, 0, 1, 1], [], []>} : vector<8x8xf32>, vector<8x256xf32>, vector<8x256xf32> -> vector<8x256xf32>
    %c1_22 = arith.constant 1 : index
    %c0_23 = arith.constant 0 : index
    %c0_24 = arith.constant 0 : index
    %24 = vector.load %arg9[%c1_22, %c0_23, %c0_24] : memref<3x1x256xf32, #tpu.memory_space<vmem>>, vector<1x1x256xf32>
    %25 = vector.shape_cast %24 : vector<1x1x256xf32> to vector<1x256xf32>
    %26 = vector.broadcast %25 : vector<1x256xf32> to vector<8x256xf32>
    %27 = arith.addf %23, %26 : vector<8x256xf32>
    %cst_25 = arith.constant 0.000000e+00 : f32
    %28 = vector.broadcast %cst_25 : f32 to vector<8x256xf32>
    %29 = arith.maximumf %27, %28 : vector<8x256xf32>
    %c1_26 = arith.constant 1 : index
    %c0_27 = arith.constant 0 : index
    %c0_28 = arith.constant 0 : index
    %30 = vector.load %arg10[%c1_26, %c0_27, %c0_28] : memref<3x256x32xf32, #tpu.memory_space<vmem>>, vector<1x256x32xf32>
    %31 = vector.shape_cast %30 : vector<1x256x32xf32> to vector<256x32xf32>
    %cst_29 = arith.constant dense<0.000000e+00> : vector<8x32xf32>
    %32 = tpu.matmul %29, %31, %cst_29 {dimension_numbers = #tpu.dot_dimension_numbers<[1], [0], [0], [1], [0, 0, 1, 1], [], []>} : vector<8x256xf32>, vector<256x32xf32>, vector<8x32xf32> -> vector<8x32xf32>
    %c1_30 = arith.constant 1 : index
    %c0_31 = arith.constant 0 : index
    %c0_32 = arith.constant 0 : index
    %33 = vector.load %arg11[%c1_30, %c0_31, %c0_32] : memref<3x1x32xf32, #tpu.memory_space<vmem>>, vector<1x1x32xf32>
    %34 = vector.shape_cast %33 : vector<1x1x32xf32> to vector<1x32xf32>
    %35 = vector.broadcast %34 : vector<1x32xf32> to vector<8x32xf32>
    %36 = arith.addf %32, %35 : vector<8x32xf32>
    %37 = vector.shape_cast %36 : vector<8x32xf32> to vector<1x8x32xf32>
    %c0_33 = arith.constant 0 : index
    %c0_34 = arith.constant 0 : index
    %c0_35 = arith.constant 0 : index
    %38 = vector.load %arg3[%c0_33, %c0_34, %c0_35] : memref<1x8x8xf32, #tpu.memory_space<vmem>>, vector<1x8x8xf32>
    %39 = vector.shape_cast %38 : vector<1x8x8xf32> to vector<8x8xf32>
    %c2 = arith.constant 2 : index
    %c0_36 = arith.constant 0 : index
    %c0_37 = arith.constant 0 : index
    %40 = vector.load %arg8[%c2, %c0_36, %c0_37] : memref<3x8x256xf32, #tpu.memory_space<vmem>>, vector<1x8x256xf32>
    %41 = vector.shape_cast %40 : vector<1x8x256xf32> to vector<8x256xf32>
    %cst_38 = arith.constant dense<0.000000e+00> : vector<8x256xf32>
    %42 = tpu.matmul %39, %41, %cst_38 {dimension_numbers = #tpu.dot_dimension_numbers<[1], [0], [0], [1], [0, 0, 1, 1], [], []>} : vector<8x8xf32>, vector<8x256xf32>, vector<8x256xf32> -> vector<8x256xf32>
    %c2_39 = arith.constant 2 : index
    %c0_40 = arith.constant 0 : index
    %c0_41 = arith.constant 0 : index
    %43 = vector.load %arg9[%c2_39, %c0_40, %c0_41] : memref<3x1x256xf32, #tpu.memory_space<vmem>>, vector<1x1x256xf32>
    %44 = vector.shape_cast %43 : vector<1x1x256xf32> to vector<1x256xf32>
    %45 = vector.broadcast %44 : vector<1x256xf32> to vector<8x256xf32>
    %46 = arith.addf %42, %45 : vector<8x256xf32>
    %cst_42 = arith.constant 0.000000e+00 : f32
    %47 = vector.broadcast %cst_42 : f32 to vector<8x256xf32>
    %48 = arith.maximumf %46, %47 : vector<8x256xf32>
    %c2_43 = arith.constant 2 : index
    %c0_44 = arith.constant 0 : index
    %c0_45 = arith.constant 0 : index
    %49 = vector.load %arg10[%c2_43, %c0_44, %c0_45] : memref<3x256x32xf32, #tpu.memory_space<vmem>>, vector<1x256x32xf32>
    %50 = vector.shape_cast %49 : vector<1x256x32xf32> to vector<256x32xf32>
    %cst_46 = arith.constant dense<0.000000e+00> : vector<8x32xf32>
    %51 = tpu.matmul %48, %50, %cst_46 {dimension_numbers = #tpu.dot_dimension_numbers<[1], [0], [0], [1], [0, 0, 1, 1], [], []>} : vector<8x256xf32>, vector<256x32xf32>, vector<8x32xf32> -> vector<8x32xf32>
    %c2_47 = arith.constant 2 : index
    %c0_48 = arith.constant 0 : index
    %c0_49 = arith.constant 0 : index
    %52 = vector.load %arg11[%c2_47, %c0_48, %c0_49] : memref<3x1x32xf32, #tpu.memory_space<vmem>>, vector<1x1x32xf32>
    %53 = vector.shape_cast %52 : vector<1x1x32xf32> to vector<1x32xf32>
    %54 = vector.broadcast %53 : vector<1x32xf32> to vector<8x32xf32>
    %55 = arith.addf %51, %54 : vector<8x32xf32>
    %56 = vector.shape_cast %55 : vector<8x32xf32> to vector<1x8x32xf32>
    %c0_50 = arith.constant 0 : index
    %c0_51 = arith.constant 0 : index
    %57 = vector.load %arg6[%c0_50, %c0_51] : memref<8x1xf32, #tpu.memory_space<vmem>>, vector<8x1xf32>
    %58 = vector.shape_cast %57 : vector<8x1xf32> to vector<1x8x1xf32>
    %59 = vector.broadcast %58 : vector<1x8x1xf32> to vector<1x8x32xf32>
    %60 = arith.mulf %56, %59 : vector<1x8x32xf32>
    %c0_52 = arith.constant 0 : index
    %c0_53 = arith.constant 0 : index
    %61 = vector.load %arg5[%c0_52, %c0_53] : memref<8x32xf32, #tpu.memory_space<vmem>>, vector<8x32xf32>
    %62 = vector.shape_cast %61 : vector<8x32xf32> to vector<1x8x32xf32>
    %c0_54 = arith.constant 0 : index
    %c0_55 = arith.constant 0 : index
    %c0_56 = arith.constant 0 : index
    %63 = vector.load %arg4[%c0_54, %c0_55, %c0_56] : memref<1x1x32xf32, #tpu.memory_space<vmem>>, vector<1x1x32xf32>
    %64 = vector.broadcast %63 : vector<1x1x32xf32> to vector<1x8x32xf32>
    %65 = arith.addf %62, %64 : vector<1x8x32xf32>
    %66 = arith.addf %18, %65 : vector<1x8x32xf32>
    %67 = arith.addf %37, %65 : vector<1x8x32xf32>
    %68 = arith.addf %60, %65 : vector<1x8x32xf32>
    %69 = tpu.concatenate %66, %67, %68 in 1 : vector<1x8x32xf32>, vector<1x8x32xf32>, vector<1x8x32xf32> -> vector<1x24x32xf32>
    %70 = vector.shape_cast %69 : vector<1x24x32xf32> to vector<24x32xf32>
    %c0_57 = arith.constant 0 : index
    %c0_58 = arith.constant 0 : index
    %71 = vector.load %arg7[%c0_57, %c0_58] : memref<24x24xf32, #tpu.memory_space<vmem>>, vector<24x24xf32>
    %72 = vector.shape_cast %71 : vector<24x24xf32> to vector<1x24x24xf32>
    %c0_59 = arith.constant 0 : index
    %c0_60 = arith.constant 0 : index
    %c0_61 = arith.constant 0 : index
    %73 = vector.load %arg15[%c0_59, %c0_60, %c0_61] : memref<2x6x32xf32, #tpu.memory_space<vmem>>, vector<1x1x32xf32>
    %74 = vector.shape_cast %73 : vector<1x1x32xf32> to vector<1x32xf32>
    %c0_62 = arith.constant 0 : index
    %c1_63 = arith.constant 1 : index
    %c0_64 = arith.constant 0 : index
    %75 = vector.load %arg15[%c0_62, %c1_63, %c0_64] : memref<2x6x32xf32, #tpu.memory_space<vmem>>, vector<1x1x32xf32>
    %76 = vector.shape_cast %75 : vector<1x1x32xf32> to vector<1x32xf32>
    %c0_65 = arith.constant 0 : index
    %c2_66 = arith.constant 2 : index
    %c0_67 = arith.constant 0 : index
    %77 = vector.load %arg15[%c0_65, %c2_66, %c0_67] : memref<2x6x32xf32, #tpu.memory_space<vmem>>, vector<1x1x32xf32>
    %78 = vector.shape_cast %77 : vector<1x1x32xf32> to vector<1x32xf32>
    %c0_68 = arith.constant 0 : index
    %c3 = arith.constant 3 : index
    %c0_69 = arith.constant 0 : index
    %79 = vector.load %arg15[%c0_68, %c3, %c0_69] : memref<2x6x32xf32, #tpu.memory_space<vmem>>, vector<1x1x32xf32>
    %80 = vector.shape_cast %79 : vector<1x1x32xf32> to vector<1x32xf32>
    %c0_70 = arith.constant 0 : index
    %c4 = arith.constant 4 : index
    %c0_71 = arith.constant 0 : index
    %81 = vector.load %arg15[%c0_70, %c4, %c0_71] : memref<2x6x32xf32, #tpu.memory_space<vmem>>, vector<1x1x32xf32>
    %82 = vector.shape_cast %81 : vector<1x1x32xf32> to vector<1x32xf32>
    %c0_72 = arith.constant 0 : index
    %c5 = arith.constant 5 : index
    %c0_73 = arith.constant 0 : index
    %83 = vector.load %arg15[%c0_72, %c5, %c0_73] : memref<2x6x32xf32, #tpu.memory_space<vmem>>, vector<1x1x32xf32>
    %84 = vector.shape_cast %83 : vector<1x1x32xf32> to vector<1x32xf32>
    %cst_74 = arith.constant dense<0.000000e+00> : vector<24xf32>
    %85 = vector.multi_reduction <add>, %70, %cst_74 [1] : vector<24x32xf32> to vector<24xf32>
    %86 = vector.shape_cast %85 : vector<24xf32> to vector<24x1xf32>
    %cst_75 = arith.constant 3.200000e+01 : f32
    %87 = vector.broadcast %cst_75 : f32 to vector<24x1xf32>
    %88 = arith.divf %86, %87 : vector<24x1xf32>
    %89 = vector.broadcast %88 : vector<24x1xf32> to vector<24x32xf32>
    %90 = arith.subf %70, %89 : vector<24x32xf32>
    %91 = arith.mulf %90, %90 : vector<24x32xf32>
    %cst_76 = arith.constant dense<0.000000e+00> : vector<24xf32>
    %92 = vector.multi_reduction <add>, %91, %cst_76 [1] : vector<24x32xf32> to vector<24xf32>
    %93 = vector.shape_cast %92 : vector<24xf32> to vector<24x1xf32>
    %cst_77 = arith.constant 3.200000e+01 : f32
    %94 = vector.broadcast %cst_77 : f32 to vector<24x1xf32>
    %95 = arith.divf %93, %94 : vector<24x1xf32>
    %96 = vector.broadcast %88 : vector<24x1xf32> to vector<24x32xf32>
    %97 = arith.subf %70, %96 : vector<24x32xf32>
    %cst_78 = arith.constant 9.99999974E-6 : f32
    %98 = vector.broadcast %cst_78 : f32 to vector<24x1xf32>
    %99 = arith.addf %95, %98 : vector<24x1xf32>
    %100 = math.rsqrt %99 : vector<24x1xf32>
    %101 = vector.broadcast %100 : vector<24x1xf32> to vector<24x32xf32>
    %102 = arith.mulf %97, %101 : vector<24x32xf32>
    %103 = vector.broadcast %74 : vector<1x32xf32> to vector<24x32xf32>
    %104 = arith.mulf %102, %103 : vector<24x32xf32>
    %105 = vector.broadcast %76 : vector<1x32xf32> to vector<24x32xf32>
    %106 = arith.addf %104, %105 : vector<24x32xf32>
    %c0_79 = arith.constant 0 : index
    %c0_80 = arith.constant 0 : index
    %c0_81 = arith.constant 0 : index
    %107 = vector.load %arg12[%c0_79, %c0_80, %c0_81] : memref<2x32x256xf32, #tpu.memory_space<vmem>>, vector<1x32x128xf32>
    %108 = vector.shape_cast %107 : vector<1x32x128xf32> to vector<32x128xf32>
    %cst_82 = arith.constant dense<0.000000e+00> : vector<24x128xf32>
    %109 = tpu.matmul %106, %108, %cst_82 {dimension_numbers = #tpu.dot_dimension_numbers<[1], [0], [0], [1], [0, 0, 1, 1], [], []>} : vector<24x32xf32>, vector<32x128xf32>, vector<24x128xf32> -> vector<24x128xf32>
    %c0_83 = arith.constant 0 : index
    %c0_84 = arith.constant 0 : index
    %c0_85 = arith.constant 0 : index
    %110 = vector.load %arg13[%c0_83, %c0_84, %c0_85] : memref<2x1x256xf32, #tpu.memory_space<vmem>>, vector<1x1x128xf32>
    %111 = vector.shape_cast %110 : vector<1x1x128xf32> to vector<1x128xf32>
    %112 = vector.broadcast %111 : vector<1x128xf32> to vector<24x128xf32>
    %113 = arith.addf %109, %112 : vector<24x128xf32>
    %114 = vector.shape_cast %113 : vector<24x128xf32> to vector<1x24x128xf32>
    %115 = vector.extract_strided_slice %114 {offsets = [0, 0, 0], sizes = [1, 24, 8], strides = [1, 1, 1]} : vector<1x24x128xf32> to vector<1x24x8xf32>
    %116 = vector.extract_strided_slice %114 {offsets = [0, 0, 32], sizes = [1, 24, 8], strides = [1, 1, 1]} : vector<1x24x128xf32> to vector<1x24x8xf32>
    %117 = vector.extract_strided_slice %114 {offsets = [0, 0, 64], sizes = [1, 24, 8], strides = [1, 1, 1]} : vector<1x24x128xf32> to vector<1x24x8xf32>
    "tpu.trace_start"() <{level = 10 : i32, message = "bqd,bkd->bqk"}> : () -> ()
    %cst_86 = arith.constant dense<0.000000e+00> : vector<1x24x24xf32>
    %118 = tpu.matmul %115, %116, %cst_86 {dimension_numbers = #tpu.dot_dimension_numbers<[2], [2], [1], [1], [0, 0, 0, 1, 1, 1], [0], [0]>} : vector<1x24x8xf32>, vector<1x24x8xf32>, vector<1x24x24xf32> -> vector<1x24x24xf32>
    "tpu.trace_stop"() : () -> ()
    %cst_87 = arith.constant 0.353553385 : f32
    %119 = vector.broadcast %cst_87 : f32 to vector<1x24x24xf32>
    %120 = arith.mulf %118, %119 : vector<1x24x24xf32>
    %121 = arith.addf %120, %72 : vector<1x24x24xf32>
    %cst_88 = arith.constant dense<0xFF800000> : vector<1x24xf32>
    %122 = vector.multi_reduction <maximumf>, %121, %cst_88 [2] : vector<1x24x24xf32> to vector<1x24xf32>
    %123 = vector.shape_cast %122 : vector<1x24xf32> to vector<1x24x1xf32>
    %124 = vector.broadcast %123 : vector<1x24x1xf32> to vector<1x24x24xf32>
    %125 = arith.subf %121, %124 : vector<1x24x24xf32>
    %126 = math.exp %125 : vector<1x24x24xf32>
    %cst_89 = arith.constant dense<0.000000e+00> : vector<1x24xf32>
    %127 = vector.multi_reduction <add>, %126, %cst_89 [2] : vector<1x24x24xf32> to vector<1x24xf32>
    %128 = vector.shape_cast %127 : vector<1x24xf32> to vector<1x24x1xf32>
    %129 = tpu.reciprocal %128 {approx = true} : vector<1x24x1xf32> -> vector<1x24x1xf32>
    %130 = vector.broadcast %129 : vector<1x24x1xf32> to vector<1x24x24xf32>
    %131 = arith.mulf %126, %130 : vector<1x24x24xf32>
    "tpu.trace_start"() <{level = 10 : i32, message = "bqk,bkd->bqd"}> : () -> ()
    %cst_90 = arith.constant dense<0.000000e+00> : vector<1x24x8xf32>
    %132 = tpu.matmul %131, %117, %cst_90 {dimension_numbers = #tpu.dot_dimension_numbers<[2], [1], [1], [2], [0, 0, 0, 1, 1, 2], [0], [0]>} : vector<1x24x24xf32>, vector<1x24x8xf32>, vector<1x24x8xf32> -> vector<1x24x8xf32>
    "tpu.trace_stop"() : () -> ()
    %133 = vector.extract_strided_slice %114 {offsets = [0, 0, 8], sizes = [1, 24, 8], strides = [1, 1, 1]} : vector<1x24x128xf32> to vector<1x24x8xf32>
    %134 = vector.extract_strided_slice %114 {offsets = [0, 0, 40], sizes = [1, 24, 8], strides = [1, 1, 1]} : vector<1x24x128xf32> to vector<1x24x8xf32>
    %135 = vector.extract_strided_slice %114 {offsets = [0, 0, 72], sizes = [1, 24, 8], strides = [1, 1, 1]} : vector<1x24x128xf32> to vector<1x24x8xf32>
    "tpu.trace_start"() <{level = 10 : i32, message = "bqd,bkd->bqk"}> : () -> ()
    %cst_91 = arith.constant dense<0.000000e+00> : vector<1x24x24xf32>
    %136 = tpu.matmul %133, %134, %cst_91 {dimension_numbers = #tpu.dot_dimension_numbers<[2], [2], [1], [1], [0, 0, 0, 1, 1, 1], [0], [0]>} : vector<1x24x8xf32>, vector<1x24x8xf32>, vector<1x24x24xf32> -> vector<1x24x24xf32>
    "tpu.trace_stop"() : () -> ()
    %cst_92 = arith.constant 0.353553385 : f32
    %137 = vector.broadcast %cst_92 : f32 to vector<1x24x24xf32>
    %138 = arith.mulf %136, %137 : vector<1x24x24xf32>
    %139 = arith.addf %138, %72 : vector<1x24x24xf32>
    %cst_93 = arith.constant dense<0xFF800000> : vector<1x24xf32>
    %140 = vector.multi_reduction <maximumf>, %139, %cst_93 [2] : vector<1x24x24xf32> to vector<1x24xf32>
    %141 = vector.shape_cast %140 : vector<1x24xf32> to vector<1x24x1xf32>
    %142 = vector.broadcast %141 : vector<1x24x1xf32> to vector<1x24x24xf32>
    %143 = arith.subf %139, %142 : vector<1x24x24xf32>
    %144 = math.exp %143 : vector<1x24x24xf32>
    %cst_94 = arith.constant dense<0.000000e+00> : vector<1x24xf32>
    %145 = vector.multi_reduction <add>, %144, %cst_94 [2] : vector<1x24x24xf32> to vector<1x24xf32>
    %146 = vector.shape_cast %145 : vector<1x24xf32> to vector<1x24x1xf32>
    %147 = tpu.reciprocal %146 {approx = true} : vector<1x24x1xf32> -> vector<1x24x1xf32>
    %148 = vector.broadcast %147 : vector<1x24x1xf32> to vector<1x24x24xf32>
    %149 = arith.mulf %144, %148 : vector<1x24x24xf32>
    "tpu.trace_start"() <{level = 10 : i32, message = "bqk,bkd->bqd"}> : () -> ()
    %cst_95 = arith.constant dense<0.000000e+00> : vector<1x24x8xf32>
    %150 = tpu.matmul %149, %135, %cst_95 {dimension_numbers = #tpu.dot_dimension_numbers<[2], [1], [1], [2], [0, 0, 0, 1, 1, 2], [0], [0]>} : vector<1x24x24xf32>, vector<1x24x8xf32>, vector<1x24x8xf32> -> vector<1x24x8xf32>
    "tpu.trace_stop"() : () -> ()
    %151 = vector.extract_strided_slice %114 {offsets = [0, 0, 16], sizes = [1, 24, 8], strides = [1, 1, 1]} : vector<1x24x128xf32> to vector<1x24x8xf32>
    %152 = vector.extract_strided_slice %114 {offsets = [0, 0, 48], sizes = [1, 24, 8], strides = [1, 1, 1]} : vector<1x24x128xf32> to vector<1x24x8xf32>
    %153 = vector.extract_strided_slice %114 {offsets = [0, 0, 80], sizes = [1, 24, 8], strides = [1, 1, 1]} : vector<1x24x128xf32> to vector<1x24x8xf32>
    "tpu.trace_start"() <{level = 10 : i32, message = "bqd,bkd->bqk"}> : () -> ()
    %cst_96 = arith.constant dense<0.000000e+00> : vector<1x24x24xf32>
    %154 = tpu.matmul %151, %152, %cst_96 {dimension_numbers = #tpu.dot_dimension_numbers<[2], [2], [1], [1], [0, 0, 0, 1, 1, 1], [0], [0]>} : vector<1x24x8xf32>, vector<1x24x8xf32>, vector<1x24x24xf32> -> vector<1x24x24xf32>
    "tpu.trace_stop"() : () -> ()
    %cst_97 = arith.constant 0.353553385 : f32
    %155 = vector.broadcast %cst_97 : f32 to vector<1x24x24xf32>
    %156 = arith.mulf %154, %155 : vector<1x24x24xf32>
    %157 = arith.addf %156, %72 : vector<1x24x24xf32>
    %cst_98 = arith.constant dense<0xFF800000> : vector<1x24xf32>
    %158 = vector.multi_reduction <maximumf>, %157, %cst_98 [2] : vector<1x24x24xf32> to vector<1x24xf32>
    %159 = vector.shape_cast %158 : vector<1x24xf32> to vector<1x24x1xf32>
    %160 = vector.broadcast %159 : vector<1x24x1xf32> to vector<1x24x24xf32>
    %161 = arith.subf %157, %160 : vector<1x24x24xf32>
    %162 = math.exp %161 : vector<1x24x24xf32>
    %cst_99 = arith.constant dense<0.000000e+00> : vector<1x24xf32>
    %163 = vector.multi_reduction <add>, %162, %cst_99 [2] : vector<1x24x24xf32> to vector<1x24xf32>
    %164 = vector.shape_cast %163 : vector<1x24xf32> to vector<1x24x1xf32>
    %165 = tpu.reciprocal %164 {approx = true} : vector<1x24x1xf32> -> vector<1x24x1xf32>
    %166 = vector.broadcast %165 : vector<1x24x1xf32> to vector<1x24x24xf32>
    %167 = arith.mulf %162, %166 : vector<1x24x24xf32>
    "tpu.trace_start"() <{level = 10 : i32, message = "bqk,bkd->bqd"}> : () -> ()
    %cst_100 = arith.constant dense<0.000000e+00> : vector<1x24x8xf32>
    %168 = tpu.matmul %167, %153, %cst_100 {dimension_numbers = #tpu.dot_dimension_numbers<[2], [1], [1], [2], [0, 0, 0, 1, 1, 2], [0], [0]>} : vector<1x24x24xf32>, vector<1x24x8xf32>, vector<1x24x8xf32> -> vector<1x24x8xf32>
    "tpu.trace_stop"() : () -> ()
    %169 = vector.extract_strided_slice %114 {offsets = [0, 0, 24], sizes = [1, 24, 8], strides = [1, 1, 1]} : vector<1x24x128xf32> to vector<1x24x8xf32>
    %170 = vector.extract_strided_slice %114 {offsets = [0, 0, 56], sizes = [1, 24, 8], strides = [1, 1, 1]} : vector<1x24x128xf32> to vector<1x24x8xf32>
    %171 = vector.extract_strided_slice %114 {offsets = [0, 0, 88], sizes = [1, 24, 8], strides = [1, 1, 1]} : vector<1x24x128xf32> to vector<1x24x8xf32>
    "tpu.trace_start"() <{level = 10 : i32, message = "bqd,bkd->bqk"}> : () -> ()
    %cst_101 = arith.constant dense<0.000000e+00> : vector<1x24x24xf32>
    %172 = tpu.matmul %169, %170, %cst_101 {dimension_numbers = #tpu.dot_dimension_numbers<[2], [2], [1], [1], [0, 0, 0, 1, 1, 1], [0], [0]>} : vector<1x24x8xf32>, vector<1x24x8xf32>, vector<1x24x24xf32> -> vector<1x24x24xf32>
    "tpu.trace_stop"() : () -> ()
    %cst_102 = arith.constant 0.353553385 : f32
    %173 = vector.broadcast %cst_102 : f32 to vector<1x24x24xf32>
    %174 = arith.mulf %172, %173 : vector<1x24x24xf32>
    %175 = arith.addf %174, %72 : vector<1x24x24xf32>
    %cst_103 = arith.constant dense<0xFF800000> : vector<1x24xf32>
    %176 = vector.multi_reduction <maximumf>, %175, %cst_103 [2] : vector<1x24x24xf32> to vector<1x24xf32>
    %177 = vector.shape_cast %176 : vector<1x24xf32> to vector<1x24x1xf32>
    %178 = vector.broadcast %177 : vector<1x24x1xf32> to vector<1x24x24xf32>
    %179 = arith.subf %175, %178 : vector<1x24x24xf32>
    %180 = math.exp %179 : vector<1x24x24xf32>
    %cst_104 = arith.constant dense<0.000000e+00> : vector<1x24xf32>
    %181 = vector.multi_reduction <add>, %180, %cst_104 [2] : vector<1x24x24xf32> to vector<1x24xf32>
    %182 = vector.shape_cast %181 : vector<1x24xf32> to vector<1x24x1xf32>
    %183 = tpu.reciprocal %182 {approx = true} : vector<1x24x1xf32> -> vector<1x24x1xf32>
    %184 = vector.broadcast %183 : vector<1x24x1xf32> to vector<1x24x24xf32>
    %185 = arith.mulf %180, %184 : vector<1x24x24xf32>
    "tpu.trace_start"() <{level = 10 : i32, message = "bqk,bkd->bqd"}> : () -> ()
    %cst_105 = arith.constant dense<0.000000e+00> : vector<1x24x8xf32>
    %186 = tpu.matmul %185, %171, %cst_105 {dimension_numbers = #tpu.dot_dimension_numbers<[2], [1], [1], [2], [0, 0, 0, 1, 1, 2], [0], [0]>} : vector<1x24x24xf32>, vector<1x24x8xf32>, vector<1x24x8xf32> -> vector<1x24x8xf32>
    "tpu.trace_stop"() : () -> ()
    %187 = tpu.concatenate %132, %150, %168, %186 in 2 : vector<1x24x8xf32>, vector<1x24x8xf32>, vector<1x24x8xf32>, vector<1x24x8xf32> -> vector<1x24x32xf32>
    %188 = vector.shape_cast %187 : vector<1x24x32xf32> to vector<24x32xf32>
    %c0_106 = arith.constant 0 : index
    %c0_107 = arith.constant 0 : index
    %c0_108 = arith.constant 0 : index
    %189 = vector.load %arg14[%c0_106, %c0_107, %c0_108] : memref<2x160x32xf32, #tpu.memory_space<vmem>>, vector<1x32x32xf32>
    %190 = vector.shape_cast %189 : vector<1x32x32xf32> to vector<32x32xf32>
    %cst_109 = arith.constant dense<0.000000e+00> : vector<24x32xf32>
    %191 = tpu.matmul %188, %190, %cst_109 {dimension_numbers = #tpu.dot_dimension_numbers<[1], [0], [0], [1], [0, 0, 1, 1], [], []>} : vector<24x32xf32>, vector<32x32xf32>, vector<24x32xf32> -> vector<24x32xf32>
    %192 = arith.addf %70, %191 : vector<24x32xf32>
    %193 = vector.broadcast %82 : vector<1x32xf32> to vector<24x32xf32>
    %194 = arith.addf %192, %193 : vector<24x32xf32>
    %cst_110 = arith.constant dense<0.000000e+00> : vector<24xf32>
    %195 = vector.multi_reduction <add>, %194, %cst_110 [1] : vector<24x32xf32> to vector<24xf32>
    %196 = vector.shape_cast %195 : vector<24xf32> to vector<24x1xf32>
    %cst_111 = arith.constant 3.200000e+01 : f32
    %197 = vector.broadcast %cst_111 : f32 to vector<24x1xf32>
    %198 = arith.divf %196, %197 : vector<24x1xf32>
    %199 = vector.broadcast %198 : vector<24x1xf32> to vector<24x32xf32>
    %200 = arith.subf %194, %199 : vector<24x32xf32>
    %201 = arith.mulf %200, %200 : vector<24x32xf32>
    %cst_112 = arith.constant dense<0.000000e+00> : vector<24xf32>
    %202 = vector.multi_reduction <add>, %201, %cst_112 [1] : vector<24x32xf32> to vector<24xf32>
    %203 = vector.shape_cast %202 : vector<24xf32> to vector<24x1xf32>
    %cst_113 = arith.constant 3.200000e+01 : f32
    %204 = vector.broadcast %cst_113 : f32 to vector<24x1xf32>
    %205 = arith.divf %203, %204 : vector<24x1xf32>
    %206 = vector.broadcast %198 : vector<24x1xf32> to vector<24x32xf32>
    %207 = arith.subf %194, %206 : vector<24x32xf32>
    %cst_114 = arith.constant 9.99999974E-6 : f32
    %208 = vector.broadcast %cst_114 : f32 to vector<24x1xf32>
    %209 = arith.addf %205, %208 : vector<24x1xf32>
    %210 = math.rsqrt %209 : vector<24x1xf32>
    %211 = vector.broadcast %210 : vector<24x1xf32> to vector<24x32xf32>
    %212 = arith.mulf %207, %211 : vector<24x32xf32>
    %213 = vector.broadcast %78 : vector<1x32xf32> to vector<24x32xf32>
    %214 = arith.mulf %212, %213 : vector<24x32xf32>
    %215 = vector.broadcast %80 : vector<1x32xf32> to vector<24x32xf32>
    %216 = arith.addf %214, %215 : vector<24x32xf32>
    %c0_115 = arith.constant 0 : index
    %c0_116 = arith.constant 0 : index
    %c128 = arith.constant 128 : index
    %217 = vector.load %arg12[%c0_115, %c0_116, %c128] : memref<2x32x256xf32, #tpu.memory_space<vmem>>, vector<1x32x128xf32>
    %218 = vector.shape_cast %217 : vector<1x32x128xf32> to vector<32x128xf32>
    %cst_117 = arith.constant dense<0.000000e+00> : vector<24x128xf32>
    %219 = tpu.matmul %216, %218, %cst_117 {dimension_numbers = #tpu.dot_dimension_numbers<[1], [0], [0], [1], [0, 0, 1, 1], [], []>} : vector<24x32xf32>, vector<32x128xf32>, vector<24x128xf32> -> vector<24x128xf32>
    %c0_118 = arith.constant 0 : index
    %c0_119 = arith.constant 0 : index
    %c128_120 = arith.constant 128 : index
    %220 = vector.load %arg13[%c0_118, %c0_119, %c128_120] : memref<2x1x256xf32, #tpu.memory_space<vmem>>, vector<1x1x128xf32>
    %221 = vector.shape_cast %220 : vector<1x1x128xf32> to vector<1x128xf32>
    %222 = vector.broadcast %221 : vector<1x128xf32> to vector<24x128xf32>
    %223 = arith.addf %219, %222 : vector<24x128xf32>
    %cst_121 = arith.constant 5.000000e-01 : f32
    %224 = vector.broadcast %cst_121 : f32 to vector<24x128xf32>
    %225 = arith.mulf %224, %223 : vector<24x128xf32>
    %cst_122 = arith.constant 0.707106769 : f32
    %226 = vector.broadcast %cst_122 : f32 to vector<24x128xf32>
    %227 = arith.mulf %223, %226 : vector<24x128xf32>
    %228 = math.erf %227 : vector<24x128xf32>
    %cst_123 = arith.constant 1.000000e+00 : f32
    %229 = vector.broadcast %cst_123 : f32 to vector<24x128xf32>
    %230 = arith.addf %229, %228 : vector<24x128xf32>
    %231 = arith.mulf %225, %230 : vector<24x128xf32>
    %c0_124 = arith.constant 0 : index
    %c32 = arith.constant 32 : index
    %c0_125 = arith.constant 0 : index
    %232 = vector.load %arg14[%c0_124, %c32, %c0_125] : memref<2x160x32xf32, #tpu.memory_space<vmem>>, vector<1x128x32xf32>
    %233 = vector.shape_cast %232 : vector<1x128x32xf32> to vector<128x32xf32>
    %cst_126 = arith.constant dense<0.000000e+00> : vector<24x32xf32>
    %234 = tpu.matmul %231, %233, %cst_126 {dimension_numbers = #tpu.dot_dimension_numbers<[1], [0], [0], [1], [0, 0, 1, 1], [], []>} : vector<24x128xf32>, vector<128x32xf32>, vector<24x32xf32> -> vector<24x32xf32>
    %235 = arith.addf %194, %234 : vector<24x32xf32>
    %236 = vector.broadcast %84 : vector<1x32xf32> to vector<24x32xf32>
    %237 = arith.addf %235, %236 : vector<24x32xf32>
    %c1_127 = arith.constant 1 : index
    %c0_128 = arith.constant 0 : index
    %c0_129 = arith.constant 0 : index
    %238 = vector.load %arg15[%c1_127, %c0_128, %c0_129] : memref<2x6x32xf32, #tpu.memory_space<vmem>>, vector<1x1x32xf32>
    %239 = vector.shape_cast %238 : vector<1x1x32xf32> to vector<1x32xf32>
    %c1_130 = arith.constant 1 : index
    %c1_131 = arith.constant 1 : index
    %c0_132 = arith.constant 0 : index
    %240 = vector.load %arg15[%c1_130, %c1_131, %c0_132] : memref<2x6x32xf32, #tpu.memory_space<vmem>>, vector<1x1x32xf32>
    %241 = vector.shape_cast %240 : vector<1x1x32xf32> to vector<1x32xf32>
    %c1_133 = arith.constant 1 : index
    %c2_134 = arith.constant 2 : index
    %c0_135 = arith.constant 0 : index
    %242 = vector.load %arg15[%c1_133, %c2_134, %c0_135] : memref<2x6x32xf32, #tpu.memory_space<vmem>>, vector<1x1x32xf32>
    %243 = vector.shape_cast %242 : vector<1x1x32xf32> to vector<1x32xf32>
    %c1_136 = arith.constant 1 : index
    %c3_137 = arith.constant 3 : index
    %c0_138 = arith.constant 0 : index
    %244 = vector.load %arg15[%c1_136, %c3_137, %c0_138] : memref<2x6x32xf32, #tpu.memory_space<vmem>>, vector<1x1x32xf32>
    %245 = vector.shape_cast %244 : vector<1x1x32xf32> to vector<1x32xf32>
    %c1_139 = arith.constant 1 : index
    %c4_140 = arith.constant 4 : index
    %c0_141 = arith.constant 0 : index
    %246 = vector.load %arg15[%c1_139, %c4_140, %c0_141] : memref<2x6x32xf32, #tpu.memory_space<vmem>>, vector<1x1x32xf32>
    %247 = vector.shape_cast %246 : vector<1x1x32xf32> to vector<1x32xf32>
    %c1_142 = arith.constant 1 : index
    %c5_143 = arith.constant 5 : index
    %c0_144 = arith.constant 0 : index
    %248 = vector.load %arg15[%c1_142, %c5_143, %c0_144] : memref<2x6x32xf32, #tpu.memory_space<vmem>>, vector<1x1x32xf32>
    %249 = vector.shape_cast %248 : vector<1x1x32xf32> to vector<1x32xf32>
    %cst_145 = arith.constant dense<0.000000e+00> : vector<24xf32>
    %250 = vector.multi_reduction <add>, %237, %cst_145 [1] : vector<24x32xf32> to vector<24xf32>
    %251 = vector.shape_cast %250 : vector<24xf32> to vector<24x1xf32>
    %cst_146 = arith.constant 3.200000e+01 : f32
    %252 = vector.broadcast %cst_146 : f32 to vector<24x1xf32>
    %253 = arith.divf %251, %252 : vector<24x1xf32>
    %254 = vector.broadcast %253 : vector<24x1xf32> to vector<24x32xf32>
    %255 = arith.subf %237, %254 : vector<24x32xf32>
    %256 = arith.mulf %255, %255 : vector<24x32xf32>
    %cst_147 = arith.constant dense<0.000000e+00> : vector<24xf32>
    %257 = vector.multi_reduction <add>, %256, %cst_147 [1] : vector<24x32xf32> to vector<24xf32>
    %258 = vector.shape_cast %257 : vector<24xf32> to vector<24x1xf32>
    %cst_148 = arith.constant 3.200000e+01 : f32
    %259 = vector.broadcast %cst_148 : f32 to vector<24x1xf32>
    %260 = arith.divf %258, %259 : vector<24x1xf32>
    %261 = vector.broadcast %253 : vector<24x1xf32> to vector<24x32xf32>
    %262 = arith.subf %237, %261 : vector<24x32xf32>
    %cst_149 = arith.constant 9.99999974E-6 : f32
    %263 = vector.broadcast %cst_149 : f32 to vector<24x1xf32>
    %264 = arith.addf %260, %263 : vector<24x1xf32>
    %265 = math.rsqrt %264 : vector<24x1xf32>
    %266 = vector.broadcast %265 : vector<24x1xf32> to vector<24x32xf32>
    %267 = arith.mulf %262, %266 : vector<24x32xf32>
    %268 = vector.broadcast %239 : vector<1x32xf32> to vector<24x32xf32>
    %269 = arith.mulf %267, %268 : vector<24x32xf32>
    %270 = vector.broadcast %241 : vector<1x32xf32> to vector<24x32xf32>
    %271 = arith.addf %269, %270 : vector<24x32xf32>
    %c1_150 = arith.constant 1 : index
    %c0_151 = arith.constant 0 : index
    %c0_152 = arith.constant 0 : index
    %272 = vector.load %arg12[%c1_150, %c0_151, %c0_152] : memref<2x32x256xf32, #tpu.memory_space<vmem>>, vector<1x32x128xf32>
    %273 = vector.shape_cast %272 : vector<1x32x128xf32> to vector<32x128xf32>
    %cst_153 = arith.constant dense<0.000000e+00> : vector<24x128xf32>
    %274 = tpu.matmul %271, %273, %cst_153 {dimension_numbers = #tpu.dot_dimension_numbers<[1], [0], [0], [1], [0, 0, 1, 1], [], []>} : vector<24x32xf32>, vector<32x128xf32>, vector<24x128xf32> -> vector<24x128xf32>
    %c1_154 = arith.constant 1 : index
    %c0_155 = arith.constant 0 : index
    %c0_156 = arith.constant 0 : index
    %275 = vector.load %arg13[%c1_154, %c0_155, %c0_156] : memref<2x1x256xf32, #tpu.memory_space<vmem>>, vector<1x1x128xf32>
    %276 = vector.shape_cast %275 : vector<1x1x128xf32> to vector<1x128xf32>
    %277 = vector.broadcast %276 : vector<1x128xf32> to vector<24x128xf32>
    %278 = arith.addf %274, %277 : vector<24x128xf32>
    %279 = vector.shape_cast %278 : vector<24x128xf32> to vector<1x24x128xf32>
    %280 = vector.extract_strided_slice %279 {offsets = [0, 0, 0], sizes = [1, 24, 8], strides = [1, 1, 1]} : vector<1x24x128xf32> to vector<1x24x8xf32>
    %281 = vector.extract_strided_slice %279 {offsets = [0, 0, 32], sizes = [1, 24, 8], strides = [1, 1, 1]} : vector<1x24x128xf32> to vector<1x24x8xf32>
    %282 = vector.extract_strided_slice %279 {offsets = [0, 0, 64], sizes = [1, 24, 8], strides = [1, 1, 1]} : vector<1x24x128xf32> to vector<1x24x8xf32>
    "tpu.trace_start"() <{level = 10 : i32, message = "bqd,bkd->bqk"}> : () -> ()
    %cst_157 = arith.constant dense<0.000000e+00> : vector<1x24x24xf32>
    %283 = tpu.matmul %280, %281, %cst_157 {dimension_numbers = #tpu.dot_dimension_numbers<[2], [2], [1], [1], [0, 0, 0, 1, 1, 1], [0], [0]>} : vector<1x24x8xf32>, vector<1x24x8xf32>, vector<1x24x24xf32> -> vector<1x24x24xf32>
    "tpu.trace_stop"() : () -> ()
    %cst_158 = arith.constant 0.353553385 : f32
    %284 = vector.broadcast %cst_158 : f32 to vector<1x24x24xf32>
    %285 = arith.mulf %283, %284 : vector<1x24x24xf32>
    %286 = arith.addf %285, %72 : vector<1x24x24xf32>
    %cst_159 = arith.constant dense<0xFF800000> : vector<1x24xf32>
    %287 = vector.multi_reduction <maximumf>, %286, %cst_159 [2] : vector<1x24x24xf32> to vector<1x24xf32>
    %288 = vector.shape_cast %287 : vector<1x24xf32> to vector<1x24x1xf32>
    %289 = vector.broadcast %288 : vector<1x24x1xf32> to vector<1x24x24xf32>
    %290 = arith.subf %286, %289 : vector<1x24x24xf32>
    %291 = math.exp %290 : vector<1x24x24xf32>
    %cst_160 = arith.constant dense<0.000000e+00> : vector<1x24xf32>
    %292 = vector.multi_reduction <add>, %291, %cst_160 [2] : vector<1x24x24xf32> to vector<1x24xf32>
    %293 = vector.shape_cast %292 : vector<1x24xf32> to vector<1x24x1xf32>
    %294 = tpu.reciprocal %293 {approx = true} : vector<1x24x1xf32> -> vector<1x24x1xf32>
    %295 = vector.broadcast %294 : vector<1x24x1xf32> to vector<1x24x24xf32>
    %296 = arith.mulf %291, %295 : vector<1x24x24xf32>
    "tpu.trace_start"() <{level = 10 : i32, message = "bqk,bkd->bqd"}> : () -> ()
    %cst_161 = arith.constant dense<0.000000e+00> : vector<1x24x8xf32>
    %297 = tpu.matmul %296, %282, %cst_161 {dimension_numbers = #tpu.dot_dimension_numbers<[2], [1], [1], [2], [0, 0, 0, 1, 1, 2], [0], [0]>} : vector<1x24x24xf32>, vector<1x24x8xf32>, vector<1x24x8xf32> -> vector<1x24x8xf32>
    "tpu.trace_stop"() : () -> ()
    %298 = vector.extract_strided_slice %279 {offsets = [0, 0, 8], sizes = [1, 24, 8], strides = [1, 1, 1]} : vector<1x24x128xf32> to vector<1x24x8xf32>
    %299 = vector.extract_strided_slice %279 {offsets = [0, 0, 40], sizes = [1, 24, 8], strides = [1, 1, 1]} : vector<1x24x128xf32> to vector<1x24x8xf32>
    %300 = vector.extract_strided_slice %279 {offsets = [0, 0, 72], sizes = [1, 24, 8], strides = [1, 1, 1]} : vector<1x24x128xf32> to vector<1x24x8xf32>
    "tpu.trace_start"() <{level = 10 : i32, message = "bqd,bkd->bqk"}> : () -> ()
    %cst_162 = arith.constant dense<0.000000e+00> : vector<1x24x24xf32>
    %301 = tpu.matmul %298, %299, %cst_162 {dimension_numbers = #tpu.dot_dimension_numbers<[2], [2], [1], [1], [0, 0, 0, 1, 1, 1], [0], [0]>} : vector<1x24x8xf32>, vector<1x24x8xf32>, vector<1x24x24xf32> -> vector<1x24x24xf32>
    "tpu.trace_stop"() : () -> ()
    %cst_163 = arith.constant 0.353553385 : f32
    %302 = vector.broadcast %cst_163 : f32 to vector<1x24x24xf32>
    %303 = arith.mulf %301, %302 : vector<1x24x24xf32>
    %304 = arith.addf %303, %72 : vector<1x24x24xf32>
    %cst_164 = arith.constant dense<0xFF800000> : vector<1x24xf32>
    %305 = vector.multi_reduction <maximumf>, %304, %cst_164 [2] : vector<1x24x24xf32> to vector<1x24xf32>
    %306 = vector.shape_cast %305 : vector<1x24xf32> to vector<1x24x1xf32>
    %307 = vector.broadcast %306 : vector<1x24x1xf32> to vector<1x24x24xf32>
    %308 = arith.subf %304, %307 : vector<1x24x24xf32>
    %309 = math.exp %308 : vector<1x24x24xf32>
    %cst_165 = arith.constant dense<0.000000e+00> : vector<1x24xf32>
    %310 = vector.multi_reduction <add>, %309, %cst_165 [2] : vector<1x24x24xf32> to vector<1x24xf32>
    %311 = vector.shape_cast %310 : vector<1x24xf32> to vector<1x24x1xf32>
    %312 = tpu.reciprocal %311 {approx = true} : vector<1x24x1xf32> -> vector<1x24x1xf32>
    %313 = vector.broadcast %312 : vector<1x24x1xf32> to vector<1x24x24xf32>
    %314 = arith.mulf %309, %313 : vector<1x24x24xf32>
    "tpu.trace_start"() <{level = 10 : i32, message = "bqk,bkd->bqd"}> : () -> ()
    %cst_166 = arith.constant dense<0.000000e+00> : vector<1x24x8xf32>
    %315 = tpu.matmul %314, %300, %cst_166 {dimension_numbers = #tpu.dot_dimension_numbers<[2], [1], [1], [2], [0, 0, 0, 1, 1, 2], [0], [0]>} : vector<1x24x24xf32>, vector<1x24x8xf32>, vector<1x24x8xf32> -> vector<1x24x8xf32>
    "tpu.trace_stop"() : () -> ()
    %316 = vector.extract_strided_slice %279 {offsets = [0, 0, 16], sizes = [1, 24, 8], strides = [1, 1, 1]} : vector<1x24x128xf32> to vector<1x24x8xf32>
    %317 = vector.extract_strided_slice %279 {offsets = [0, 0, 48], sizes = [1, 24, 8], strides = [1, 1, 1]} : vector<1x24x128xf32> to vector<1x24x8xf32>
    %318 = vector.extract_strided_slice %279 {offsets = [0, 0, 80], sizes = [1, 24, 8], strides = [1, 1, 1]} : vector<1x24x128xf32> to vector<1x24x8xf32>
    "tpu.trace_start"() <{level = 10 : i32, message = "bqd,bkd->bqk"}> : () -> ()
    %cst_167 = arith.constant dense<0.000000e+00> : vector<1x24x24xf32>
    %319 = tpu.matmul %316, %317, %cst_167 {dimension_numbers = #tpu.dot_dimension_numbers<[2], [2], [1], [1], [0, 0, 0, 1, 1, 1], [0], [0]>} : vector<1x24x8xf32>, vector<1x24x8xf32>, vector<1x24x24xf32> -> vector<1x24x24xf32>
    "tpu.trace_stop"() : () -> ()
    %cst_168 = arith.constant 0.353553385 : f32
    %320 = vector.broadcast %cst_168 : f32 to vector<1x24x24xf32>
    %321 = arith.mulf %319, %320 : vector<1x24x24xf32>
    %322 = arith.addf %321, %72 : vector<1x24x24xf32>
    %cst_169 = arith.constant dense<0xFF800000> : vector<1x24xf32>
    %323 = vector.multi_reduction <maximumf>, %322, %cst_169 [2] : vector<1x24x24xf32> to vector<1x24xf32>
    %324 = vector.shape_cast %323 : vector<1x24xf32> to vector<1x24x1xf32>
    %325 = vector.broadcast %324 : vector<1x24x1xf32> to vector<1x24x24xf32>
    %326 = arith.subf %322, %325 : vector<1x24x24xf32>
    %327 = math.exp %326 : vector<1x24x24xf32>
    %cst_170 = arith.constant dense<0.000000e+00> : vector<1x24xf32>
    %328 = vector.multi_reduction <add>, %327, %cst_170 [2] : vector<1x24x24xf32> to vector<1x24xf32>
    %329 = vector.shape_cast %328 : vector<1x24xf32> to vector<1x24x1xf32>
    %330 = tpu.reciprocal %329 {approx = true} : vector<1x24x1xf32> -> vector<1x24x1xf32>
    %331 = vector.broadcast %330 : vector<1x24x1xf32> to vector<1x24x24xf32>
    %332 = arith.mulf %327, %331 : vector<1x24x24xf32>
    "tpu.trace_start"() <{level = 10 : i32, message = "bqk,bkd->bqd"}> : () -> ()
    %cst_171 = arith.constant dense<0.000000e+00> : vector<1x24x8xf32>
    %333 = tpu.matmul %332, %318, %cst_171 {dimension_numbers = #tpu.dot_dimension_numbers<[2], [1], [1], [2], [0, 0, 0, 1, 1, 2], [0], [0]>} : vector<1x24x24xf32>, vector<1x24x8xf32>, vector<1x24x8xf32> -> vector<1x24x8xf32>
    "tpu.trace_stop"() : () -> ()
    %334 = vector.extract_strided_slice %279 {offsets = [0, 0, 24], sizes = [1, 24, 8], strides = [1, 1, 1]} : vector<1x24x128xf32> to vector<1x24x8xf32>
    %335 = vector.extract_strided_slice %279 {offsets = [0, 0, 56], sizes = [1, 24, 8], strides = [1, 1, 1]} : vector<1x24x128xf32> to vector<1x24x8xf32>
    %336 = vector.extract_strided_slice %279 {offsets = [0, 0, 88], sizes = [1, 24, 8], strides = [1, 1, 1]} : vector<1x24x128xf32> to vector<1x24x8xf32>
    "tpu.trace_start"() <{level = 10 : i32, message = "bqd,bkd->bqk"}> : () -> ()
    %cst_172 = arith.constant dense<0.000000e+00> : vector<1x24x24xf32>
    %337 = tpu.matmul %334, %335, %cst_172 {dimension_numbers = #tpu.dot_dimension_numbers<[2], [2], [1], [1], [0, 0, 0, 1, 1, 1], [0], [0]>} : vector<1x24x8xf32>, vector<1x24x8xf32>, vector<1x24x24xf32> -> vector<1x24x24xf32>
    "tpu.trace_stop"() : () -> ()
    %cst_173 = arith.constant 0.353553385 : f32
    %338 = vector.broadcast %cst_173 : f32 to vector<1x24x24xf32>
    %339 = arith.mulf %337, %338 : vector<1x24x24xf32>
    %340 = arith.addf %339, %72 : vector<1x24x24xf32>
    %cst_174 = arith.constant dense<0xFF800000> : vector<1x24xf32>
    %341 = vector.multi_reduction <maximumf>, %340, %cst_174 [2] : vector<1x24x24xf32> to vector<1x24xf32>
    %342 = vector.shape_cast %341 : vector<1x24xf32> to vector<1x24x1xf32>
    %343 = vector.broadcast %342 : vector<1x24x1xf32> to vector<1x24x24xf32>
    %344 = arith.subf %340, %343 : vector<1x24x24xf32>
    %345 = math.exp %344 : vector<1x24x24xf32>
    %cst_175 = arith.constant dense<0.000000e+00> : vector<1x24xf32>
    %346 = vector.multi_reduction <add>, %345, %cst_175 [2] : vector<1x24x24xf32> to vector<1x24xf32>
    %347 = vector.shape_cast %346 : vector<1x24xf32> to vector<1x24x1xf32>
    %348 = tpu.reciprocal %347 {approx = true} : vector<1x24x1xf32> -> vector<1x24x1xf32>
    %349 = vector.broadcast %348 : vector<1x24x1xf32> to vector<1x24x24xf32>
    %350 = arith.mulf %345, %349 : vector<1x24x24xf32>
    "tpu.trace_start"() <{level = 10 : i32, message = "bqk,bkd->bqd"}> : () -> ()
    %cst_176 = arith.constant dense<0.000000e+00> : vector<1x24x8xf32>
    %351 = tpu.matmul %350, %336, %cst_176 {dimension_numbers = #tpu.dot_dimension_numbers<[2], [1], [1], [2], [0, 0, 0, 1, 1, 2], [0], [0]>} : vector<1x24x24xf32>, vector<1x24x8xf32>, vector<1x24x8xf32> -> vector<1x24x8xf32>
    "tpu.trace_stop"() : () -> ()
    %352 = tpu.concatenate %297, %315, %333, %351 in 2 : vector<1x24x8xf32>, vector<1x24x8xf32>, vector<1x24x8xf32>, vector<1x24x8xf32> -> vector<1x24x32xf32>
    %353 = vector.shape_cast %352 : vector<1x24x32xf32> to vector<24x32xf32>
    %c1_177 = arith.constant 1 : index
    %c0_178 = arith.constant 0 : index
    %c0_179 = arith.constant 0 : index
    %354 = vector.load %arg14[%c1_177, %c0_178, %c0_179] : memref<2x160x32xf32, #tpu.memory_space<vmem>>, vector<1x32x32xf32>
    %355 = vector.shape_cast %354 : vector<1x32x32xf32> to vector<32x32xf32>
    %cst_180 = arith.constant dense<0.000000e+00> : vector<24x32xf32>
    %356 = tpu.matmul %353, %355, %cst_180 {dimension_numbers = #tpu.dot_dimension_numbers<[1], [0], [0], [1], [0, 0, 1, 1], [], []>} : vector<24x32xf32>, vector<32x32xf32>, vector<24x32xf32> -> vector<24x32xf32>
    %357 = arith.addf %237, %356 : vector<24x32xf32>
    %358 = vector.broadcast %247 : vector<1x32xf32> to vector<24x32xf32>
    %359 = arith.addf %357, %358 : vector<24x32xf32>
    %cst_181 = arith.constant dense<0.000000e+00> : vector<24xf32>
    %360 = vector.multi_reduction <add>, %359, %cst_181 [1] : vector<24x32xf32> to vector<24xf32>
    %361 = vector.shape_cast %360 : vector<24xf32> to vector<24x1xf32>
    %cst_182 = arith.constant 3.200000e+01 : f32
    %362 = vector.broadcast %cst_182 : f32 to vector<24x1xf32>
    %363 = arith.divf %361, %362 : vector<24x1xf32>
    %364 = vector.broadcast %363 : vector<24x1xf32> to vector<24x32xf32>
    %365 = arith.subf %359, %364 : vector<24x32xf32>
    %366 = arith.mulf %365, %365 : vector<24x32xf32>
    %cst_183 = arith.constant dense<0.000000e+00> : vector<24xf32>
    %367 = vector.multi_reduction <add>, %366, %cst_183 [1] : vector<24x32xf32> to vector<24xf32>
    %368 = vector.shape_cast %367 : vector<24xf32> to vector<24x1xf32>
    %cst_184 = arith.constant 3.200000e+01 : f32
    %369 = vector.broadcast %cst_184 : f32 to vector<24x1xf32>
    %370 = arith.divf %368, %369 : vector<24x1xf32>
    %371 = vector.broadcast %363 : vector<24x1xf32> to vector<24x32xf32>
    %372 = arith.subf %359, %371 : vector<24x32xf32>
    %cst_185 = arith.constant 9.99999974E-6 : f32
    %373 = vector.broadcast %cst_185 : f32 to vector<24x1xf32>
    %374 = arith.addf %370, %373 : vector<24x1xf32>
    %375 = math.rsqrt %374 : vector<24x1xf32>
    %376 = vector.broadcast %375 : vector<24x1xf32> to vector<24x32xf32>
    %377 = arith.mulf %372, %376 : vector<24x32xf32>
    %378 = vector.broadcast %243 : vector<1x32xf32> to vector<24x32xf32>
    %379 = arith.mulf %377, %378 : vector<24x32xf32>
    %380 = vector.broadcast %245 : vector<1x32xf32> to vector<24x32xf32>
    %381 = arith.addf %379, %380 : vector<24x32xf32>
    %c1_186 = arith.constant 1 : index
    %c0_187 = arith.constant 0 : index
    %c128_188 = arith.constant 128 : index
    %382 = vector.load %arg12[%c1_186, %c0_187, %c128_188] : memref<2x32x256xf32, #tpu.memory_space<vmem>>, vector<1x32x128xf32>
    %383 = vector.shape_cast %382 : vector<1x32x128xf32> to vector<32x128xf32>
    %cst_189 = arith.constant dense<0.000000e+00> : vector<24x128xf32>
    %384 = tpu.matmul %381, %383, %cst_189 {dimension_numbers = #tpu.dot_dimension_numbers<[1], [0], [0], [1], [0, 0, 1, 1], [], []>} : vector<24x32xf32>, vector<32x128xf32>, vector<24x128xf32> -> vector<24x128xf32>
    %c1_190 = arith.constant 1 : index
    %c0_191 = arith.constant 0 : index
    %c128_192 = arith.constant 128 : index
    %385 = vector.load %arg13[%c1_190, %c0_191, %c128_192] : memref<2x1x256xf32, #tpu.memory_space<vmem>>, vector<1x1x128xf32>
    %386 = vector.shape_cast %385 : vector<1x1x128xf32> to vector<1x128xf32>
    %387 = vector.broadcast %386 : vector<1x128xf32> to vector<24x128xf32>
    %388 = arith.addf %384, %387 : vector<24x128xf32>
    %cst_193 = arith.constant 5.000000e-01 : f32
    %389 = vector.broadcast %cst_193 : f32 to vector<24x128xf32>
    %390 = arith.mulf %389, %388 : vector<24x128xf32>
    %cst_194 = arith.constant 0.707106769 : f32
    %391 = vector.broadcast %cst_194 : f32 to vector<24x128xf32>
    %392 = arith.mulf %388, %391 : vector<24x128xf32>
    %393 = math.erf %392 : vector<24x128xf32>
    %cst_195 = arith.constant 1.000000e+00 : f32
    %394 = vector.broadcast %cst_195 : f32 to vector<24x128xf32>
    %395 = arith.addf %394, %393 : vector<24x128xf32>
    %396 = arith.mulf %390, %395 : vector<24x128xf32>
    %c1_196 = arith.constant 1 : index
    %c32_197 = arith.constant 32 : index
    %c0_198 = arith.constant 0 : index
    %397 = vector.load %arg14[%c1_196, %c32_197, %c0_198] : memref<2x160x32xf32, #tpu.memory_space<vmem>>, vector<1x128x32xf32>
    %398 = vector.shape_cast %397 : vector<1x128x32xf32> to vector<128x32xf32>
    %cst_199 = arith.constant dense<0.000000e+00> : vector<24x32xf32>
    %399 = tpu.matmul %396, %398, %cst_199 {dimension_numbers = #tpu.dot_dimension_numbers<[1], [0], [0], [1], [0, 0, 1, 1], [], []>} : vector<24x128xf32>, vector<128x32xf32>, vector<24x32xf32> -> vector<24x32xf32>
    %400 = arith.addf %359, %399 : vector<24x32xf32>
    %401 = vector.broadcast %249 : vector<1x32xf32> to vector<24x32xf32>
    %402 = arith.addf %400, %401 : vector<24x32xf32>
    %c0_200 = arith.constant 0 : index
    %c0_201 = arith.constant 0 : index
    %403 = vector.load %arg16[%c0_200, %c0_201] : memref<2x32xf32, #tpu.memory_space<vmem>>, vector<1x32xf32>
    %c1_202 = arith.constant 1 : index
    %c0_203 = arith.constant 0 : index
    %404 = vector.load %arg16[%c1_202, %c0_203] : memref<2x32xf32, #tpu.memory_space<vmem>>, vector<1x32xf32>
    %cst_204 = arith.constant dense<0.000000e+00> : vector<24xf32>
    %405 = vector.multi_reduction <add>, %402, %cst_204 [1] : vector<24x32xf32> to vector<24xf32>
    %406 = vector.shape_cast %405 : vector<24xf32> to vector<24x1xf32>
    %cst_205 = arith.constant 3.200000e+01 : f32
    %407 = vector.broadcast %cst_205 : f32 to vector<24x1xf32>
    %408 = arith.divf %406, %407 : vector<24x1xf32>
    %409 = vector.broadcast %408 : vector<24x1xf32> to vector<24x32xf32>
    %410 = arith.subf %402, %409 : vector<24x32xf32>
    %411 = arith.mulf %410, %410 : vector<24x32xf32>
    %cst_206 = arith.constant dense<0.000000e+00> : vector<24xf32>
    %412 = vector.multi_reduction <add>, %411, %cst_206 [1] : vector<24x32xf32> to vector<24xf32>
    %413 = vector.shape_cast %412 : vector<24xf32> to vector<24x1xf32>
    %cst_207 = arith.constant 3.200000e+01 : f32
    %414 = vector.broadcast %cst_207 : f32 to vector<24x1xf32>
    %415 = arith.divf %413, %414 : vector<24x1xf32>
    %416 = vector.broadcast %408 : vector<24x1xf32> to vector<24x32xf32>
    %417 = arith.subf %402, %416 : vector<24x32xf32>
    %cst_208 = arith.constant 9.99999974E-6 : f32
    %418 = vector.broadcast %cst_208 : f32 to vector<24x1xf32>
    %419 = arith.addf %415, %418 : vector<24x1xf32>
    %420 = math.rsqrt %419 : vector<24x1xf32>
    %421 = vector.broadcast %420 : vector<24x1xf32> to vector<24x32xf32>
    %422 = arith.mulf %417, %421 : vector<24x32xf32>
    %423 = vector.broadcast %403 : vector<1x32xf32> to vector<24x32xf32>
    %424 = arith.mulf %422, %423 : vector<24x32xf32>
    %425 = vector.broadcast %404 : vector<1x32xf32> to vector<24x32xf32>
    %426 = arith.addf %424, %425 : vector<24x32xf32>
    %427 = vector.shape_cast %426 : vector<24x32xf32> to vector<1x24x32xf32>
    %428 = vector.extract_strided_slice %427 {offsets = [0, 8, 0], sizes = [1, 8, 32], strides = [1, 1, 1]} : vector<1x24x32xf32> to vector<1x8x32xf32>
    %429 = vector.shape_cast %428 : vector<1x8x32xf32> to vector<8x32xf32>
    %c0_209 = arith.constant 0 : index
    %c0_210 = arith.constant 0 : index
    %430 = vector.load %arg17[%c0_209, %c0_210] : memref<32x256xf32, #tpu.memory_space<vmem>>, vector<32x256xf32>
    %cst_211 = arith.constant dense<0.000000e+00> : vector<8x256xf32>
    %431 = tpu.matmul %429, %430, %cst_211 {dimension_numbers = #tpu.dot_dimension_numbers<[1], [0], [0], [1], [0, 0, 1, 1], [], []>} : vector<8x32xf32>, vector<32x256xf32>, vector<8x256xf32> -> vector<8x256xf32>
    %c0_212 = arith.constant 0 : index
    %c0_213 = arith.constant 0 : index
    %432 = vector.load %arg20[%c0_212, %c0_213] : memref<2x256xf32, #tpu.memory_space<vmem>>, vector<1x256xf32>
    %433 = vector.broadcast %432 : vector<1x256xf32> to vector<8x256xf32>
    %434 = arith.addf %431, %433 : vector<8x256xf32>
    %cst_214 = arith.constant 0.000000e+00 : f32
    %435 = vector.broadcast %cst_214 : f32 to vector<8x256xf32>
    %436 = arith.maximumf %434, %435 : vector<8x256xf32>
    %c0_215 = arith.constant 0 : index
    %c0_216 = arith.constant 0 : index
    %437 = vector.load %arg18[%c0_215, %c0_216] : memref<256x256xf32, #tpu.memory_space<vmem>>, vector<256x256xf32>
    %cst_217 = arith.constant dense<0.000000e+00> : vector<8x256xf32>
    %438 = tpu.matmul %436, %437, %cst_217 {dimension_numbers = #tpu.dot_dimension_numbers<[1], [0], [0], [1], [0, 0, 1, 1], [], []>} : vector<8x256xf32>, vector<256x256xf32>, vector<8x256xf32> -> vector<8x256xf32>
    %c1_218 = arith.constant 1 : index
    %c0_219 = arith.constant 0 : index
    %439 = vector.load %arg20[%c1_218, %c0_219] : memref<2x256xf32, #tpu.memory_space<vmem>>, vector<1x256xf32>
    %440 = vector.broadcast %439 : vector<1x256xf32> to vector<8x256xf32>
    %441 = arith.addf %438, %440 : vector<8x256xf32>
    %cst_220 = arith.constant 0.000000e+00 : f32
    %442 = vector.broadcast %cst_220 : f32 to vector<8x256xf32>
    %443 = arith.maximumf %441, %442 : vector<8x256xf32>
    %c0_221 = arith.constant 0 : index
    %c0_222 = arith.constant 0 : index
    %444 = vector.load %arg19[%c0_221, %c0_222] : memref<256x128xf32, #tpu.memory_space<vmem>>, vector<256x128xf32>
    %cst_223 = arith.constant dense<0.000000e+00> : vector<8x128xf32>
    %445 = tpu.matmul %443, %444, %cst_223 {dimension_numbers = #tpu.dot_dimension_numbers<[1], [0], [0], [1], [0, 0, 1, 1], [], []>} : vector<8x256xf32>, vector<256x128xf32>, vector<8x128xf32> -> vector<8x128xf32>
    %c0_224 = arith.constant 0 : index
    %c0_225 = arith.constant 0 : index
    %446 = vector.load %arg21[%c0_224, %c0_225] : memref<1x128xf32, #tpu.memory_space<vmem>>, vector<1x128xf32>
    %447 = vector.broadcast %446 : vector<1x128xf32> to vector<8x128xf32>
    %448 = arith.addf %445, %447 : vector<8x128xf32>
    %449 = vector.shape_cast %448 : vector<8x128xf32> to vector<1x8x128xf32>
    %c0_226 = arith.constant 0 : index
    %c0_227 = arith.constant 0 : index
    %c0_228 = arith.constant 0 : index
    %450 = vector.load %arg22[%c0_226, %c0_227, %c0_228] : memref<1x8x128xf32, #tpu.memory_space<vmem>>, vector<1x8x128xf32>
    tpu.vector_store %arg22[%c0_226, %c0_227, %c0_228], %449 {strides = array<i32>} : memref<1x8x128xf32, #tpu.memory_space<vmem>>, vector<1x8x128xf32>,
    return
  }
  func.func @transform_0(%arg0: i32) -> (i32, i32, i32) {
    %c0_i32 = arith.constant 0 : i32
    %c0_i32_0 = arith.constant 0 : i32
    %c0_i32_1 = arith.constant 0 : i32
    return %arg0, %c0_i32, %c0_i32_0 : i32, i32, i32
  }
  func.func @transform_1(%arg0: i32) -> (i32, i32, i32) {
    %c0_i32 = arith.constant 0 : i32
    %c0_i32_0 = arith.constant 0 : i32
    %c0_i32_1 = arith.constant 0 : i32
    return %arg0, %c0_i32, %c0_i32_0 : i32, i32, i32
  }
  func.func @transform_2(%arg0: i32) -> (i32, i32, i32) {
    %c0_i32 = arith.constant 0 : i32
    %c0_i32_0 = arith.constant 0 : i32
    %c0_i32_1 = arith.constant 0 : i32
    return %arg0, %c0_i32, %c0_i32_0 : i32, i32, i32
  }
  func.func @transform_3(%arg0: i32) -> (i32, i32, i32) {
    %c0_i32 = arith.constant 0 : i32
    %c0_i32_0 = arith.constant 0 : i32
    %c0_i32_1 = arith.constant 0 : i32
    return %arg0, %c0_i32, %c0_i32_0 : i32, i32, i32
  }
  func.func @transform_4(%arg0: i32) -> (i32, i32) {
    %c0_i32 = arith.constant 0 : i32
    %c0_i32_0 = arith.constant 0 : i32
    %c0_i32_1 = arith.constant 0 : i32
    return %c0_i32, %c0_i32_0 : i32, i32
  }
  func.func @transform_5(%arg0: i32) -> (i32, i32) {
    %c0_i32 = arith.constant 0 : i32
    %c0_i32_0 = arith.constant 0 : i32
    %c0_i32_1 = arith.constant 0 : i32
    return %c0_i32, %c0_i32_0 : i32, i32
  }
  func.func @transform_6(%arg0: i32) -> (i32, i32) {
    %c0_i32 = arith.constant 0 : i32
    %c0_i32_0 = arith.constant 0 : i32
    %c0_i32_1 = arith.constant 0 : i32
    return %c0_i32, %c0_i32_0 : i32, i32
  }
  func.func @transform_7(%arg0: i32) -> (i32, i32, i32) {
    %c0_i32 = arith.constant 0 : i32
    %c0_i32_0 = arith.constant 0 : i32
    %c0_i32_1 = arith.constant 0 : i32
    %c0_i32_2 = arith.constant 0 : i32
    return %c0_i32, %c0_i32_0, %c0_i32_1 : i32, i32, i32
  }
  func.func @transform_8(%arg0: i32) -> (i32, i32, i32) {
    %c0_i32 = arith.constant 0 : i32
    %c0_i32_0 = arith.constant 0 : i32
    %c0_i32_1 = arith.constant 0 : i32
    %c0_i32_2 = arith.constant 0 : i32
    return %c0_i32, %c0_i32_0, %c0_i32_1 : i32, i32, i32
  }
  func.func @transform_9(%arg0: i32) -> (i32, i32, i32) {
    %c0_i32 = arith.constant 0 : i32
    %c0_i32_0 = arith.constant 0 : i32
    %c0_i32_1 = arith.constant 0 : i32
    %c0_i32_2 = arith.constant 0 : i32
    return %c0_i32, %c0_i32_0, %c0_i32_1 : i32, i32, i32
  }
  func.func @transform_10(%arg0: i32) -> (i32, i32, i32) {
    %c0_i32 = arith.constant 0 : i32
    %c0_i32_0 = arith.constant 0 : i32
    %c0_i32_1 = arith.constant 0 : i32
    %c0_i32_2 = arith.constant 0 : i32
    return %c0_i32, %c0_i32_0, %c0_i32_1 : i32, i32, i32
  }
  func.func @transform_11(%arg0: i32) -> (i32, i32, i32) {
    %c0_i32 = arith.constant 0 : i32
    %c0_i32_0 = arith.constant 0 : i32
    %c0_i32_1 = arith.constant 0 : i32
    %c0_i32_2 = arith.constant 0 : i32
    return %c0_i32, %c0_i32_0, %c0_i32_1 : i32, i32, i32
  }
  func.func @transform_12(%arg0: i32) -> (i32, i32, i32) {
    %c0_i32 = arith.constant 0 : i32
    %c0_i32_0 = arith.constant 0 : i32
    %c0_i32_1 = arith.constant 0 : i32
    %c0_i32_2 = arith.constant 0 : i32
    return %c0_i32, %c0_i32_0, %c0_i32_1 : i32, i32, i32
  }
  func.func @transform_13(%arg0: i32) -> (i32, i32, i32) {
    %c0_i32 = arith.constant 0 : i32
    %c0_i32_0 = arith.constant 0 : i32
    %c0_i32_1 = arith.constant 0 : i32
    %c0_i32_2 = arith.constant 0 : i32
    return %c0_i32, %c0_i32_0, %c0_i32_1 : i32, i32, i32
  }
  func.func @transform_14(%arg0: i32) -> (i32, i32, i32) {
    %c0_i32 = arith.constant 0 : i32
    %c0_i32_0 = arith.constant 0 : i32
    %c0_i32_1 = arith.constant 0 : i32
    %c0_i32_2 = arith.constant 0 : i32
    return %c0_i32, %c0_i32_0, %c0_i32_1 : i32, i32, i32
  }
  func.func @transform_15(%arg0: i32) -> (i32, i32) {
    %c0_i32 = arith.constant 0 : i32
    %c0_i32_0 = arith.constant 0 : i32
    %c0_i32_1 = arith.constant 0 : i32
    return %c0_i32, %c0_i32_0 : i32, i32
  }
  func.func @transform_16(%arg0: i32) -> (i32, i32) {
    %c0_i32 = arith.constant 0 : i32
    %c0_i32_0 = arith.constant 0 : i32
    %c0_i32_1 = arith.constant 0 : i32
    return %c0_i32, %c0_i32_0 : i32, i32
  }
  func.func @transform_17(%arg0: i32) -> (i32, i32) {
    %c0_i32 = arith.constant 0 : i32
    %c0_i32_0 = arith.constant 0 : i32
    %c0_i32_1 = arith.constant 0 : i32
    return %c0_i32, %c0_i32_0 : i32, i32
  }
  func.func @transform_18(%arg0: i32) -> (i32, i32) {
    %c0_i32 = arith.constant 0 : i32
    %c0_i32_0 = arith.constant 0 : i32
    %c0_i32_1 = arith.constant 0 : i32
    return %c0_i32, %c0_i32_0 : i32, i32
  }
  func.func @transform_19(%arg0: i32) -> (i32, i32) {
    %c0_i32 = arith.constant 0 : i32
    %c0_i32_0 = arith.constant 0 : i32
    %c0_i32_1 = arith.constant 0 : i32
    return %c0_i32, %c0_i32_0 : i32, i32
  }
  func.func @transform_20(%arg0: i32) -> (i32, i32) {
    %c0_i32 = arith.constant 0 : i32
    %c0_i32_0 = arith.constant 0 : i32
    %c0_i32_1 = arith.constant 0 : i32
    return %c0_i32, %c0_i32_0 : i32, i32
  }
  func.func @transform_21(%arg0: i32) -> (i32, i32, i32) {
    %c0_i32 = arith.constant 0 : i32
    %c0_i32_0 = arith.constant 0 : i32
    %c0_i32_1 = arith.constant 0 : i32
    return %arg0, %c0_i32, %c0_i32_0 : i32, i32, i32
  }
}

</mosaic_0001>

<llo_original>
// kernel: act_commit_net_forward.1
$region0: #{act_commit_net_forward.1}
  #allocation0 [shape = 'u32[]', space=smem, size = 0x4, offset = 0x4, fixed_abs, tag = 'smem constant byte address 0x4 - core index']
  #allocation1 [shape = 'u32[72,128]{1,0:T(1,128)}', space=vmem, size = 0x9000, scoped, tag = 'internal scratch']
  %s0 = inlined_call_operand.vmem [shape: f32[2,8,8], index: 0, kind: input, shape index: {}]
  %s1 = inlined_call_operand.vmem [shape: f32[2,8,8], index: 1, kind: input, shape index: {}]
  %s2 = inlined_call_operand.vmem [shape: f32[2,8,8], index: 2, kind: input, shape index: {}]
  %s3 = inlined_call_operand.vmem [shape: f32[2,1,32], index: 3, kind: input, shape index: {}]
  %s4 = inlined_call_operand.vmem [shape: f32[8,32], index: 4, kind: input, shape index: {}]
  %s5 = inlined_call_operand.vmem [shape: f32[8,1], index: 5, kind: input, shape index: {}]
  %s6 = inlined_call_operand.vmem [shape: f32[24,24], index: 6, kind: input, shape index: {}]
  %s7 = inlined_call_operand.vmem [shape: f32[3,8,256], index: 7, kind: input, shape index: {}]
  %s8 = inlined_call_operand.vmem [shape: f32[3,1,256], index: 8, kind: input, shape index: {}]
  %s9 = inlined_call_operand.vmem [shape: f32[3,256,32], index: 9, kind: input, shape index: {}]
  %s10 = inlined_call_operand.vmem [shape: f32[3,1,32], index: 10, kind: input, shape index: {}]
  %s11 = inlined_call_operand.vmem [shape: f32[2,32,256], index: 11, kind: input, shape index: {}]
  %s12 = inlined_call_operand.vmem [shape: f32[2,1,256], index: 12, kind: input, shape index: {}]
  %s13 = inlined_call_operand.vmem [shape: f32[2,160,32], index: 13, kind: input, shape index: {}]
  %s14 = inlined_call_operand.vmem [shape: f32[2,6,32], index: 14, kind: input, shape index: {}]
  %s15 = inlined_call_operand.vmem [shape: f32[2,32], index: 15, kind: input, shape index: {}]
  %s16 = inlined_call_operand.vmem [shape: f32[32,256], index: 16, kind: input, shape index: {}]
  %s17 = inlined_call_operand.vmem [shape: f32[256,256], index: 17, kind: input, shape index: {}]
  %s18 = inlined_call_operand.vmem [shape: f32[256,128], index: 18, kind: input, shape index: {}]
  %s19 = inlined_call_operand.vmem [shape: f32[2,256], index: 19, kind: input, shape index: {}]
  %s20 = inlined_call_operand.vmem [shape: f32[1,128], index: 20, kind: input, shape index: {}]
  %s21 = inlined_call_operand.vmem [shape: f32[2,8,128], index: 21, kind: output, shape index: {}]
  %s22 = sld [smem:[#allocation0]]
  $region117: #{act_commit_net_forward.1} parent=0
    _
  %s24 = ssub.s32 1, %s22
  %s25 = scalar_select 0, %s24, %s22
  loop: start=0, step=1, limit=4
  $region2: #{act_commit_net_forward.1} parent=0 // loop_pre_header
    _
  $region3: #{act_commit_net_forward.1} parent=0 // loop_header
    %s27 = sphi 0, %s31
    %p28 = scmp.ge.s32.totalorder %s27, 4
    %s37 = sphi 0, %s39
    %s40 = sphi 0, %s37
    %s41 = sphi 0, %s40
    %s57 = sphi 0, %s41
    %s63 = sphi 0, %s65
    %s66 = sphi 0, %s63
    %s67 = sphi 0, %s66
    %s83 = sphi 0, %s67
    %s89 = sphi 0, %s91
    %s92 = sphi 0, %s89
    %s93 = sphi 0, %s92
    %s109 = sphi 0, %s93
    %s115 = sphi 0, %s117
    %s118 = sphi 0, %s115
    %s119 = sphi 0, %s118
    %s135 = sphi 0, %s119
    %s139 = sphi 0, %s139
    %s141 = sphi 0, %s139
    %s142 = sphi 0, %s141
    %s156 = sphi 0, %s142
    %s160 = sphi 0, %s160
    %s162 = sphi 0, %s160
    %s163 = sphi 0, %s162
    %s177 = sphi 0, %s163
    %s181 = sphi 0, %s181
    %s183 = sphi 0, %s181
    %s184 = sphi 0, %s183
    %s198 = sphi 0, %s184
    %s202 = sphi 0, %s202
    %s204 = sphi 0, %s202
    %s205 = sphi 0, %s204
    %s219 = sphi 0, %s205
    %s223 = sphi 0, %s223
    %s225 = sphi 0, %s223
    %s226 = sphi 0, %s225
    %s240 = sphi 0, %s226
    %s244 = sphi 0, %s244
    %s246 = sphi 0, %s244
    %s247 = sphi 0, %s246
    %s261 = sphi 0, %s247
    %s265 = sphi 0, %s265
    %s267 = sphi 0, %s265
    %s268 = sphi 0, %s267
    %s282 = sphi 0, %s268
    %s286 = sphi 0, %s286
    %s288 = sphi 0, %s286
    %s289 = sphi 0, %s288
    %s303 = sphi 0, %s289
    %s307 = sphi 0, %s307
    %s309 = sphi 0, %s307
    %s310 = sphi 0, %s309
    %s324 = sphi 0, %s310
    %s328 = sphi 0, %s328
    %s330 = sphi 0, %s328
    %s331 = sphi 0, %s330
    %s345 = sphi 0, %s331
    %s349 = sphi 0, %s349
    %s351 = sphi 0, %s349
    %s352 = sphi 0, %s351
    %s366 = sphi 0, %s352
    %s370 = sphi 0, %s370
    %s372 = sphi 0, %s370
    %s373 = sphi 0, %s372
    %s387 = sphi 0, %s373
    %s391 = sphi 0, %s391
    %s393 = sphi 0, %s391
    %s394 = sphi 0, %s393
    %s408 = sphi 0, %s394
    %s412 = sphi 0, %s412
    %s414 = sphi 0, %s412
    %s415 = sphi 0, %s414
    %s429 = sphi 0, %s415
    %s433 = sphi 0, %s433
    %s435 = sphi 0, %s433
    %s436 = sphi 0, %s435
    %s450 = sphi 0, %s436
    %s454 = sphi 0, %s454
    %s456 = sphi 0, %s454
    %s457 = sphi 0, %s456
    %s471 = sphi 0, %s457
    %s475 = sphi 0, %s475
    %s477 = sphi 0, %s475
    %s478 = sphi 0, %s477
    %s492 = sphi 0, %s478
    %s498 = sphi 0, %s500
    %s501 = sphi 0, %s498
    %s502 = sphi 0, %s501
    %s518 = sphi 0, %s502
  $region4: #{act_commit_net_forward.1} parent=0 // loop_header_branch
    %30 = sbr.rel (%p28) target = $region8
  $region5: #{act_commit_net_forward.1} parent=0 // loop_body
    %s32 = ssub.s32 %s27, 1
    %s33 = ssub.s32 %s27, 2
    %s34 = sadd.s32 %s27, 1
    %s35 = ssub.s32 %s27, %s34
    %p36 = scmp.eq.s32.totalorder %s35, 0
    %s38 = sadd.s32 %s37, 1
    %s39 = scalar_select %p36, %s37, %s38
    %p42 = pneg %p36
    %p43 = scmp.eq.s32.totalorder %s27, 1
    %p44 = por %p42, %p43
    %p45 = scmp.ne.s32.totalorder %s37, %s40
    %p46 = scmp.eq.s32.totalorder %s27, 0
    %p47 = por %p45, %p46
    %p48 = scmp.ne.s32.totalorder %s37, %s40
    %p49 = scmp.eq.s32.totalorder %s32, 1
    %p50 = por %p48, %p49
    %p51 = scmp.ne.s32.totalorder %s40, %s41
    %p52 = scmp.eq.s32.totalorder %s32, 0
    %p53 = por %p51, %p52
    %p54 = scmp.ne.s32.totalorder %s40, %s41
    %p55 = scmp.eq.s32.totalorder %s33, 1
    %p56 = por %p54, %p55
    %p58 = scmp.ne.s32.totalorder %s41, %s57
    %p59 = scmp.eq.s32.totalorder %s33, 0
    %p60 = por %p58, %p59
    %s61 = ssub.s32 %s27, %s34
    %p62 = scmp.eq.s32.totalorder %s61, 0
    %s64 = sadd.s32 %s63, 1
    %s65 = scalar_select %p62, %s63, %s64
    %p68 = pneg %p62
    %p69 = scmp.eq.s32.totalorder %s27, 1
    %p70 = por %p68, %p69
    %p71 = scmp.ne.s32.totalorder %s63, %s66
    %p72 = scmp.eq.s32.totalorder %s27, 0
    %p73 = por %p71, %p72
    %p74 = scmp.ne.s32.totalorder %s63, %s66
    %p75 = scmp.eq.s32.totalorder %s32, 1
    %p76 = por %p74, %p75
    %p77 = scmp.ne.s32.totalorder %s66, %s67
    %p78 = scmp.eq.s32.totalorder %s32, 0
    %p79 = por %p77, %p78
    %p80 = scmp.ne.s32.totalorder %s66, %s67
    %p81 = scmp.eq.s32.totalorder %s33, 1
    %p82 = por %p80, %p81
    %p84 = scmp.ne.s32.totalorder %s67, %s83
    %p85 = scmp.eq.s32.totalorder %s33, 0
    %p86 = por %p84, %p85
    %s87 = ssub.s32 %s27, %s34
    %p88 = scmp.eq.s32.totalorder %s87, 0
    %s90 = sadd.s32 %s89, 1
    %s91 = scalar_select %p88, %s89, %s90
    %p94 = pneg %p88
    %p95 = scmp.eq.s32.totalorder %s27, 1
    %p96 = por %p94, %p95
    %p97 = scmp.ne.s32.totalorder %s89, %s92
    %p98 = scmp.eq.s32.totalorder %s27, 0
    %p99 = por %p97, %p98
    %p100 = scmp.ne.s32.totalorder %s89, %s92
    %p101 = scmp.eq.s32.totalorder %s32, 1
    %p102 = por %p100, %p101
    %p103 = scmp.ne.s32.totalorder %s92, %s93
    %p104 = scmp.eq.s32.totalorder %s32, 0
    %p105 = por %p103, %p104
    %p106 = scmp.ne.s32.totalorder %s92, %s93
    %p107 = scmp.eq.s32.totalorder %s33, 1
    %p108 = por %p106, %p107
    %p110 = scmp.ne.s32.totalorder %s93, %s109
    %p111 = scmp.eq.s32.totalorder %s33, 0
    %p112 = por %p110, %p111
    %s113 = ssub.s32 %s27, %s34
    %p114 = scmp.eq.s32.totalorder %s113, 0
    %s116 = sadd.s32 %s115, 1
    %s117 = scalar_select %p114, %s115, %s116
    %p120 = pneg %p114
    %p121 = scmp.eq.s32.totalorder %s27, 1
    %p122 = por %p120, %p121
    %p123 = scmp.ne.s32.totalorder %s115, %s118
    %p124 = scmp.eq.s32.totalorder %s27, 0
    %p125 = por %p123, %p124
    %p126 = scmp.ne.s32.totalorder %s115, %s118
    %p127 = scmp.eq.s32.totalorder %s32, 1
    %p128 = por %p126, %p127
    %p129 = scmp.ne.s32.totalorder %s118, %s119
    %p130 = scmp.eq.s32.totalorder %s32, 0
    %p131 = por %p129, %p130
    %p132 = scmp.ne.s32.totalorder %s118, %s119
    %p133 = scmp.eq.s32.totalorder %s33, 1
    %p134 = por %p132, %p133
    %p136 = scmp.ne.s32.totalorder %s119, %s135
    %p137 = scmp.eq.s32.totalorder %s33, 0
    %p138 = por %p136, %p137
    %s140 = sadd.s32 %s139, 1
    %p143 = scmp.eq.s32.totalorder %s27, 1
    %p144 = scmp.ne.s32.totalorder %s139, %s141
    %p145 = scmp.eq.s32.totalorder %s27, 0
    %p146 = por %p144, %p145
    %p147 = scmp.ne.s32.totalorder %s139, %s141
    %p148 = scmp.eq.s32.totalorder %s32, 1
    %p149 = por %p147, %p148
    %p150 = scmp.ne.s32.totalorder %s141, %s142
    %p151 = scmp.eq.s32.totalorder %s32, 0
    %p152 = por %p150, %p151
    %p153 = scmp.ne.s32.totalorder %s141, %s142
    %p154 = scmp.eq.s32.totalorder %s33, 1
    %p155 = por %p153, %p154
    %p157 = scmp.ne.s32.totalorder %s142, %s156
    %p158 = scmp.eq.s32.totalorder %s33, 0
    %p159 = por %p157, %p158
    %s161 = sadd.s32 %s160, 1
    %p164 = scmp.eq.s32.totalorder %s27, 1
    %p165 = scmp.ne.s32.totalorder %s160, %s162
    %p166 = scmp.eq.s32.totalorder %s27, 0
    %p167 = por %p165, %p166
    %p168 = scmp.ne.s32.totalorder %s160, %s162
    %p169 = scmp.eq.s32.totalorder %s32, 1
    %p170 = por %p168, %p169
    %p171 = scmp.ne.s32.totalorder %s162, %s163
    %p172 = scmp.eq.s32.totalorder %s32, 0
    %p173 = por %p171, %p172
    %p174 = scmp.ne.s32.totalorder %s162, %s163
    %p175 = scmp.eq.s32.totalorder %s33, 1
    %p176 = por %p174, %p175
    %p178 = scmp.ne.s32.totalorder %s163, %s177
    %p179 = scmp.eq.s32.totalorder %s33, 0
    %p180 = por %p178, %p179
    %s182 = sadd.s32 %s181, 1
    %p185 = scmp.eq.s32.totalorder %s27, 1
    %p186 = scmp.ne.s32.totalorder %s181, %s183
    %p187 = scmp.eq.s32.totalorder %s27, 0
    %p188 = por %p186, %p187
    %p189 = scmp.ne.s32.totalorder %s181, %s183
    %p190 = scmp.eq.s32.totalorder %s32, 1
    %p191 = por %p189, %p190
    %p192 = scmp.ne.s32.totalorder %s183, %s184
    %p193 = scmp.eq.s32.totalorder %s32, 0
    %p194 = por %p192, %p193
    %p195 = scmp.ne.s32.totalorder %s183, %s184
    %p196 = scmp.eq.s32.totalorder %s33, 1
    %p197 = por %p195, %p196
    %p199 = scmp.ne.s32.totalorder %s184, %s198
    %p200 = scmp.eq.s32.totalorder %s33, 0
    %p201 = por %p199, %p200
    %s203 = sadd.s32 %s202, 1
    %p206 = scmp.eq.s32.totalorder %s27, 1
    %p207 = scmp.ne.s32.totalorder %s202, %s204
    %p208 = scmp.eq.s32.totalorder %s27, 0
    %p209 = por %p207, %p208
    %p210 = scmp.ne.s32.totalorder %s202, %s204
    %p211 = scmp.eq.s32.totalorder %s32, 1
    %p212 = por %p210, %p211
    %p213 = scmp.ne.s32.totalorder %s204, %s205
    %p214 = scmp.eq.s32.totalorder %s32, 0
    %p215 = por %p213, %p214
    %p216 = scmp.ne.s32.totalorder %s204, %s205
    %p217 = scmp.eq.s32.totalorder %s33, 1
    %p218 = por %p216, %p217
    %p220 = scmp.ne.s32.totalorder %s205, %s219
    %p221 = scmp.eq.s32.totalorder %s33, 0
    %p222 = por %p220, %p221
    %s224 = sadd.s32 %s223, 1
    %p227 = scmp.eq.s32.totalorder %s27, 1
    %p228 = scmp.ne.s32.totalorder %s223, %s225
    %p229 = scmp.eq.s32.totalorder %s27, 0
    %p230 = por %p228, %p229
    %p231 = scmp.ne.s32.totalorder %s223, %s225
    %p232 = scmp.eq.s32.totalorder %s32, 1
    %p233 = por %p231, %p232
    %p234 = scmp.ne.s32.totalorder %s225, %s226
    %p235 = scmp.eq.s32.totalorder %s32, 0
    %p236 = por %p234, %p235
    %p237 = scmp.ne.s32.totalorder %s225, %s226
    %p238 = scmp.eq.s32.totalorder %s33, 1
    %p239 = por %p237, %p238
    %p241 = scmp.ne.s32.totalorder %s226, %s240
    %p242 = scmp.eq.s32.totalorder %s33, 0
    %p243 = por %p241, %p242
    %s245 = sadd.s32 %s244, 1
    %p248 = scmp.eq.s32.totalorder %s27, 1
    %p249 = scmp.ne.s32.totalorder %s244, %s246
    %p250 = scmp.eq.s32.totalorder %s27, 0
    %p251 = por %p249, %p250
    %p252 = scmp.ne.s32.totalorder %s244, %s246
    %p253 = scmp.eq.s32.totalorder %s32, 1
    %p254 = por %p252, %p253
    %p255 = scmp.ne.s32.totalorder %s246, %s247
    %p256 = scmp.eq.s32.totalorder %s32, 0
    %p257 = por %p255, %p256
    %p258 = scmp.ne.s32.totalorder %s246, %s247
    %p259 = scmp.eq.s32.totalorder %s33, 1
    %p260 = por %p258, %p259
    %p262 = scmp.ne.s32.totalorder %s247, %s261
    %p263 = scmp.eq.s32.totalorder %s33, 0
    %p264 = por %p262, %p263
    %s266 = sadd.s32 %s265, 1
    %p269 = scmp.eq.s32.totalorder %s27, 1
    %p270 = scmp.ne.s32.totalorder %s265, %s267
    %p271 = scmp.eq.s32.totalorder %s27, 0
    %p272 = por %p270, %p271
    %p273 = scmp.ne.s32.totalorder %s265, %s267
    %p274 = scmp.eq.s32.totalorder %s32, 1
    %p275 = por %p273, %p274
    %p276 = scmp.ne.s32.totalorder %s267, %s268
    %p277 = scmp.eq.s32.totalorder %s32, 0
    %p278 = por %p276, %p277
    %p279 = scmp.ne.s32.totalorder %s267, %s268
    %p280 = scmp.eq.s32.totalorder %s33, 1
    %p281 = por %p279, %p280
    %p283 = scmp.ne.s32.totalorder %s268, %s282
    %p284 = scmp.eq.s32.totalorder %s33, 0
    %p285 = por %p283, %p284
    %s287 = sadd.s32 %s286, 1
    %p290 = scmp.eq.s32.totalorder %s27, 1
    %p291 = scmp.ne.s32.totalorder %s286, %s288
    %p292 = scmp.eq.s32.totalorder %s27, 0
    %p293 = por %p291, %p292
    %p294 = scmp.ne.s32.totalorder %s286, %s288
    %p295 = scmp.eq.s32.totalorder %s32, 1
    %p296 = por %p294, %p295
    %p297 = scmp.ne.s32.totalorder %s288, %s289
    %p298 = scmp.eq.s32.totalorder %s32, 0
    %p299 = por %p297, %p298
    %p300 = scmp.ne.s32.totalorder %s288, %s289
    %p301 = scmp.eq.s32.totalorder %s33, 1
    %p302 = por %p300, %p301
    %p304 = scmp.ne.s32.totalorder %s289, %s303
    %p305 = scmp.eq.s32.totalorder %s33, 0
    %p306 = por %p304, %p305
    %s308 = sadd.s32 %s307, 1
    %p311 = scmp.eq.s32.totalorder %s27, 1
    %p312 = scmp.ne.s32.totalorder %s307, %s309
    %p313 = scmp.eq.s32.totalorder %s27, 0
    %p314 = por %p312, %p313
    %p315 = scmp.ne.s32.totalorder %s307, %s309
    %p316 = scmp.eq.s32.totalorder %s32, 1
    %p317 = por %p315, %p316
    %p318 = scmp.ne.s32.totalorder %s309, %s310
    %p319 = scmp.eq.s32.totalorder %s32, 0
    %p320 = por %p318, %p319
    %p321 = scmp.ne.s32.totalorder %s309, %s310
    %p322 = scmp.eq.s32.totalorder %s33, 1
    %p323 = por %p321, %p322
    %p325 = scmp.ne.s32.totalorder %s310, %s324
    %p326 = scmp.eq.s32.totalorder %s33, 0
    %p327 = por %p325, %p326
    %s329 = sadd.s32 %s328, 1
    %p332 = scmp.eq.s32.totalorder %s27, 1
    %p333 = scmp.ne.s32.totalorder %s328, %s330
    %p334 = scmp.eq.s32.totalorder %s27, 0
    %p335 = por %p333, %p334
    %p336 = scmp.ne.s32.totalorder %s328, %s330
    %p337 = scmp.eq.s32.totalorder %s32, 1
    %p338 = por %p336, %p337
    %p339 = scmp.ne.s32.totalorder %s330, %s331
    %p340 = scmp.eq.s32.totalorder %s32, 0
    %p341 = por %p339, %p340
    %p342 = scmp.ne.s32.totalorder %s330, %s331
    %p343 = scmp.eq.s32.totalorder %s33, 1
    %p344 = por %p342, %p343
    %p346 = scmp.ne.s32.totalorder %s331, %s345
    %p347 = scmp.eq.s32.totalorder %s33, 0
    %p348 = por %p346, %p347
    %s350 = sadd.s32 %s349, 1
    %p353 = scmp.eq.s32.totalorder %s27, 1
    %p354 = scmp.ne.s32.totalorder %s349, %s351
    %p355 = scmp.eq.s32.totalorder %s27, 0
    %p356 = por %p354, %p355
    %p357 = scmp.ne.s32.totalorder %s349, %s351
    %p358 = scmp.eq.s32.totalorder %s32, 1
    %p359 = por %p357, %p358
    %p360 = scmp.ne.s32.totalorder %s351, %s352
    %p361 = scmp.eq.s32.totalorder %s32, 0
    %p362 = por %p360, %p361
    %p363 = scmp.ne.s32.totalorder %s351, %s352
    %p364 = scmp.eq.s32.totalorder %s33, 1
    %p365 = por %p363, %p364
    %p367 = scmp.ne.s32.totalorder %s352, %s366
    %p368 = scmp.eq.s32.totalorder %s33, 0
    %p369 = por %p367, %p368
    %s371 = sadd.s32 %s370, 1
    %p374 = scmp.eq.s32.totalorder %s27, 1
    %p375 = scmp.ne.s32.totalorder %s370, %s372
    %p376 = scmp.eq.s32.totalorder %s27, 0
    %p377 = por %p375, %p376
    %p378 = scmp.ne.s32.totalorder %s370, %s372
    %p379 = scmp.eq.s32.totalorder %s32, 1
    %p380 = por %p378, %p379
    %p381 = scmp.ne.s32.totalorder %s372, %s373
    %p382 = scmp.eq.s32.totalorder %s32, 0
    %p383 = por %p381, %p382
    %p384 = scmp.ne.s32.totalorder %s372, %s373
    %p385 = scmp.eq.s32.totalorder %s33, 1
    %p386 = por %p384, %p385
    %p388 = scmp.ne.s32.totalorder %s373, %s387
    %p389 = scmp.eq.s32.totalorder %s33, 0
    %p390 = por %p388, %p389
    %s392 = sadd.s32 %s391, 1
    %p395 = scmp.eq.s32.totalorder %s27, 1
    %p396 = scmp.ne.s32.totalorder %s391, %s393
    %p397 = scmp.eq.s32.totalorder %s27, 0
    %p398 = por %p396, %p397
    %p399 = scmp.ne.s32.totalorder %s391, %s393
    %p400 = scmp.eq.s32.totalorder %s32, 1
    %p401 = por %p399, %p400
    %p402 = scmp.ne.s32.totalorder %s393, %s394
    %p403 = scmp.eq.s32.totalorder %s32, 0
    %p404 = por %p402, %p403
    %p405 = scmp.ne.s32.totalorder %s393, %s394
    %p406 = scmp.eq.s32.totalorder %s33, 1
    %p407 = por %p405, %p406
    %p409 = scmp.ne.s32.totalorder %s394, %s408
    %p410 = scmp.eq.s32.totalorder %s33, 0
    %p411 = por %p409, %p410
    %s413 = sadd.s32 %s412, 1
    %p416 = scmp.eq.s32.totalorder %s27, 1
    %p417 = scmp.ne.s32.totalorder %s412, %s414
    %p418 = scmp.eq.s32.totalorder %s27, 0
    %p419 = por %p417, %p418
    %p420 = scmp.ne.s32.totalorder %s412, %s414
    %p421 = scmp.eq.s32.totalorder %s32, 1
    %p422 = por %p420, %p421
    %p423 = scmp.ne.s32.totalorder %s414, %s415
    %p424 = scmp.eq.s32.totalorder %s32, 0
    %p425 = por %p423, %p424
    %p426 = scmp.ne.s32.totalorder %s414, %s415
    %p427 = scmp.eq.s32.totalorder %s33, 1
    %p428 = por %p426, %p427
    %p430 = scmp.ne.s32.totalorder %s415, %s429
    %p431 = scmp.eq.s32.totalorder %s33, 0
    %p432 = por %p430, %p431
    %s434 = sadd.s32 %s433, 1
    %p437 = scmp.eq.s32.totalorder %s27, 1
    %p438 = scmp.ne.s32.totalorder %s433, %s435
    %p439 = scmp.eq.s32.totalorder %s27, 0
    %p440 = por %p438, %p439
    %p441 = scmp.ne.s32.totalorder %s433, %s435
    %p442 = scmp.eq.s32.totalorder %s32, 1
    %p443 = por %p441, %p442
    %p444 = scmp.ne.s32.totalorder %s435, %s436
    %p445 = scmp.eq.s32.totalorder %s32, 0
    %p446 = por %p444, %p445
    %p447 = scmp.ne.s32.totalorder %s435, %s436
    %p448 = scmp.eq.s32.totalorder %s33, 1
    %p449 = por %p447, %p448
    %p451 = scmp.ne.s32.totalorder %s436, %s450
    %p452 = scmp.eq.s32.totalorder %s33, 0
    %p453 = por %p451, %p452
    %s455 = sadd.s32 %s454, 1
    %p458 = scmp.eq.s32.totalorder %s27, 1
    %p459 = scmp.ne.s32.totalorder %s454, %s456
    %p460 = scmp.eq.s32.totalorder %s27, 0
    %p461 = por %p459, %p460
    %p462 = scmp.ne.s32.totalorder %s454, %s456
    %p463 = scmp.eq.s32.totalorder %s32, 1
    %p464 = por %p462, %p463
    %p465 = scmp.ne.s32.totalorder %s456, %s457
    %p466 = scmp.eq.s32.totalorder %s32, 0
    %p467 = por %p465, %p466
    %p468 = scmp.ne.s32.totalorder %s456, %s457
    %p469 = scmp.eq.s32.totalorder %s33, 1
    %p470 = por %p468, %p469
    %p472 = scmp.ne.s32.totalorder %s457, %s471
    %p473 = scmp.eq.s32.totalorder %s33, 0
    %p474 = por %p472, %p473
    %s476 = sadd.s32 %s475, 1
    %p479 = scmp.eq.s32.totalorder %s27, 1
    %p480 = scmp.ne.s32.totalorder %s475, %s477
    %p481 = scmp.eq.s32.totalorder %s27, 0
    %p482 = por %p480, %p481
    %p483 = scmp.ne.s32.totalorder %s475, %s477
    %p484 = scmp.eq.s32.totalorder %s32, 1
    %p485 = por %p483, %p484
    %p486 = scmp.ne.s32.totalorder %s477, %s478
    %p487 = scmp.eq.s32.totalorder %s32, 0
    %p488 = por %p486, %p487
    %p489 = scmp.ne.s32.totalorder %s477, %s478
    %p490 = scmp.eq.s32.totalorder %s33, 1
    %p491 = por %p489, %p490
    %p493 = scmp.ne.s32.totalorder %s478, %s492
    %p494 = scmp.eq.s32.totalorder %s33, 0
    %p495 = por %p493, %p494
    %s496 = ssub.s32 %s27, %s34
    %p497 = scmp.eq.s32.totalorder %s496, 0
    %s499 = sadd.s32 %s498, 1
    %s500 = scalar_select %p497, %s498, %s499
    %p503 = pneg %p497
    %p504 = scmp.eq.s32.totalorder %s27, 1
    %p505 = por %p503, %p504
    %p506 = scmp.ne.s32.totalorder %s498, %s501
    %p507 = scmp.eq.s32.totalorder %s27, 0
    %p508 = por %p506, %p507
    %p509 = scmp.ne.s32.totalorder %s498, %s501
    %p510 = scmp.eq.s32.totalorder %s32, 1
    %p511 = por %p509, %p510
    %p512 = scmp.ne.s32.totalorder %s501, %s502
    %p513 = scmp.eq.s32.totalorder %s32, 0
    %p514 = por %p512, %p513
    %p515 = scmp.ne.s32.totalorder %s501, %s502
    %p516 = scmp.eq.s32.totalorder %s33, 1
    %p517 = por %p515, %p516
    %p519 = scmp.ne.s32.totalorder %s502, %s518
    %p520 = scmp.eq.s32.totalorder %s33, 0
    %p521 = por %p519, %p520
    %p522 = scmp.le.s32.totalorder 1, %s27
    %p523 = scmp.lt.s32.totalorder %s27, 3
    %p524 = pnand %p522, %p523
    %p525 = pneg %p524
    // Predicated region
    $region9: #{act_commit_net_forward.1} parent=5 // pred_check
      _
    $region10: #{act_commit_net_forward.1} parent=5 // pred_check_branch
      %527 = sbr.rel (%p524) target = $region12
    $region11: #{act_commit_net_forward.1} parent=5 // pred_region
      %s528 = ssub.s32 %s27, 1
      // Predicated region
      $region13: #{act_commit_net_forward.1} parent=11 // pred_check
        %p529 = pneg %p152
      $region14: #{act_commit_net_forward.1} parent=11 // pred_check_branch
        %531 = sbr.rel (%p529) target = $region16
      $region15: #{act_commit_net_forward.1} parent=11 // pred_region
        _
      $region16: #{act_commit_net_forward.1} parent=11 // pred_fallthru
        _
      // Predicated region
      $region17: #{act_commit_net_forward.1} parent=11 // pred_check
        %p532 = pneg %p173
      $region18: #{act_commit_net_forward.1} parent=11 // pred_check_branch
        %534 = sbr.rel (%p532) target = $region20
      $region19: #{act_commit_net_forward.1} parent=11 // pred_region
        _
      $region20: #{act_commit_net_forward.1} parent=11 // pred_fallthru
        _
      // Predicated region
      $region21: #{act_commit_net_forward.1} parent=11 // pred_check
        %p535 = pneg %p194
      $region22: #{act_commit_net_forward.1} parent=11 // pred_check_branch
        %537 = sbr.rel (%p535) target = $region24
      $region23: #{act_commit_net_forward.1} parent=11 // pred_region
        _
      $region24: #{act_commit_net_forward.1} parent=11 // pred_fallthru
        _
      // Predicated region
      $region25: #{act_commit_net_forward.1} parent=11 // pred_check
        %p538 = pneg %p215
      $region26: #{act_commit_net_forward.1} parent=11 // pred_check_branch
        %540 = sbr.rel (%p538) target = $region28
      $region27: #{act_commit_net_forward.1} parent=11 // pred_region
        _
      $region28: #{act_commit_net_forward.1} parent=11 // pred_fallthru
        _
      // Predicated region
      $region29: #{act_commit_net_forward.1} parent=11 // pred_check
        %p541 = pneg %p236
      $region30: #{act_commit_net_forward.1} parent=11 // pred_check_branch
        %543 = sbr.rel (%p541) target = $region32
      $region31: #{act_commit_net_forward.1} parent=11 // pred_region
        _
      $region32: #{act_commit_net_forward.1} parent=11 // pred_fallthru
        _
      // Predicated region
      $region33: #{act_commit_net_forward.1} parent=11 // pred_check
        %p544 = pneg %p257
      $region34: #{act_commit_net_forward.1} parent=11 // pred_check_branch
        %546 = sbr.rel (%p544) target = $region36
      $region35: #{act_commit_net_forward.1} parent=11 // pred_region
        _
      $region36: #{act_commit_net_forward.1} parent=11 // pred_fallthru
        _
      // Predicated region
      $region37: #{act_commit_net_forward.1} parent=11 // pred_check
        %p547 = pneg %p278
      $region38: #{act_commit_net_forward.1} parent=11 // pred_check_branch
        %549 = sbr.rel (%p547) target = $region40
      $region39: #{act_commit_net_forward.1} parent=11 // pred_region
        _
      $region40: #{act_commit_net_forward.1} parent=11 // pred_fallthru
        _
      // Predicated region
      $region41: #{act_commit_net_forward.1} parent=11 // pred_check
        %p550 = pneg %p299
      $region42: #{act_commit_net_forward.1} parent=11 // pred_check_branch
        %552 = sbr.rel (%p550) target = $region44
      $region43: #{act_commit_net_forward.1} parent=11 // pred_region
        _
      $region44: #{act_commit_net_forward.1} parent=11 // pred_fallthru
        _
      // Predicated region
      $region45: #{act_commit_net_forward.1} parent=11 // pred_check
        %p553 = pneg %p320
      $region46: #{act_commit_net_forward.1} parent=11 // pred_check_branch
        %555 = sbr.rel (%p553) target = $region48
      $region47: #{act_commit_net_forward.1} parent=11 // pred_region
        _
      $region48: #{act_commit_net_forward.1} parent=11 // pred_fallthru
        _
      // Predicated region
      $region49: #{act_commit_net_forward.1} parent=11 // pred_check
        %p556 = pneg %p341
      $region50: #{act_commit_net_forward.1} parent=11 // pred_check_branch
        %558 = sbr.rel (%p556) target = $region52
      $region51: #{act_commit_net_forward.1} parent=11 // pred_region
        _
      $region52: #{act_commit_net_forward.1} parent=11 // pred_fallthru
        _
      // Predicated region
      $region53: #{act_commit_net_forward.1} parent=11 // pred_check
        %p559 = pneg %p362
      $region54: #{act_commit_net_forward.1} parent=11 // pred_check_branch
        %561 = sbr.rel (%p559) target = $region56
      $region55: #{act_commit_net_forward.1} parent=11 // pred_region
        _
      $region56: #{act_commit_net_forward.1} parent=11 // pred_fallthru
        _
      // Predicated region
      $region57: #{act_commit_net_forward.1} parent=11 // pred_check
        %p562 = pneg %p383
      $region58: #{act_commit_net_forward.1} parent=11 // pred_check_branch
        %564 = sbr.rel (%p562) target = $region60
      $region59: #{act_commit_net_forward.1} parent=11 // pred_region
        _
      $region60: #{act_commit_net_forward.1} parent=11 // pred_fallthru
        _
      // Predicated region
      $region61: #{act_commit_net_forward.1} parent=11 // pred_check
        %p565 = pneg %p404
      $region62: #{act_commit_net_forward.1} parent=11 // pred_check_branch
        %567 = sbr.rel (%p565) target = $region64
      $region63: #{act_commit_net_forward.1} parent=11 // pred_region
        _
      $region64: #{act_commit_net_forward.1} parent=11 // pred_fallthru
        _
      // Predicated region
      $region65: #{act_commit_net_forward.1} parent=11 // pred_check
        %p568 = pneg %p425
      $region66: #{act_commit_net_forward.1} parent=11 // pred_check_branch
        %570 = sbr.rel (%p568) target = $region68
      $region67: #{act_commit_net_forward.1} parent=11 // pred_region
        _
      $region68: #{act_commit_net_forward.1} parent=11 // pred_fallthru
        _
      // Predicated region
      $region69: #{act_commit_net_forward.1} parent=11 // pred_check
        %p571 = pneg %p446
      $region70: #{act_commit_net_forward.1} parent=11 // pred_check_branch
        %573 = sbr.rel (%p571) target = $region72
      $region71: #{act_commit_net_forward.1} parent=11 // pred_region
        _
      $region72: #{act_commit_net_forward.1} parent=11 // pred_fallthru
        _
      // Predicated region
      $region73: #{act_commit_net_forward.1} parent=11 // pred_check
        %p574 = pneg %p467
      $region74: #{act_commit_net_forward.1} parent=11 // pred_check_branch
        %576 = sbr.rel (%p574) target = $region76
      $region75: #{act_commit_net_forward.1} parent=11 // pred_region
        _
      $region76: #{act_commit_net_forward.1} parent=11 // pred_fallthru
        _
      // Predicated region
      $region77: #{act_commit_net_forward.1} parent=11 // pred_check
        %p577 = pneg %p488
      $region78: #{act_commit_net_forward.1} parent=11 // pred_check_branch
        %579 = sbr.rel (%p577) target = $region80
      $region79: #{act_commit_net_forward.1} parent=11 // pred_region
        _
      $region80: #{act_commit_net_forward.1} parent=11 // pred_fallthru
        _
    $region12: #{act_commit_net_forward.1} parent=5 // pred_fallthru
      _
    %p580 = scmp.lt.s32.totalorder %s27, 2
    // Predicated region
    $region81: #{act_commit_net_forward.1} parent=5 // pred_check
      %p581 = pneg %p580
    $region82: #{act_commit_net_forward.1} parent=5 // pred_check_branch
      %583 = sbr.rel (%p581) target = $region84
    $region83: #{act_commit_net_forward.1} parent=5 // pred_region
      // Predicated region
      $region85: #{act_commit_net_forward.1} parent=83 // pred_check
        %p584 = pneg %p47
      $region86: #{act_commit_net_forward.1} parent=83 // pred_check_branch
        %586 = sbr.rel (%p584) target = $region88
      $region87: #{act_commit_net_forward.1} parent=83 // pred_region
        %p587 = scmp.lt.s32.totalorder %s27, 1
        %s588 = scalar_select %p587, %s27, 1
        %s589 = smul.addr %s588, 8
        %s590 = scalar_lea.vmem %s0, %s589
      $region88: #{act_commit_net_forward.1} parent=83 // pred_fallthru
        _
      // Predicated region
      $region89: #{act_commit_net_forward.1} parent=83 // pred_check
        %p591 = pneg %p73
      $region90: #{act_commit_net_forward.1} parent=83 // pred_check_branch
        %593 = sbr.rel (%p591) target = $region92
      $region91: #{act_commit_net_forward.1} parent=83 // pred_region
        %p594 = scmp.lt.s32.totalorder %s27, 1
        %s595 = scalar_select %p594, %s27, 1
        %s596 = smul.addr %s595, 8
        %s597 = scalar_lea.vmem %s1, %s596
      $region92: #{act_commit_net_forward.1} parent=83 // pred_fallthru
        _
      // Predicated region
      $region93: #{act_commit_net_forward.1} parent=83 // pred_check
        %p598 = pneg %p99
      $region94: #{act_commit_net_forward.1} parent=83 // pred_check_branch
        %600 = sbr.rel (%p598) target = $region96
      $region95: #{act_commit_net_forward.1} parent=83 // pred_region
        %p601 = scmp.lt.s32.totalorder %s27, 1
        %s602 = scalar_select %p601, %s27, 1
        %s603 = smul.addr %s602, 8
        %s604 = scalar_lea.vmem %s2, %s603
      $region96: #{act_commit_net_forward.1} parent=83 // pred_fallthru
        _
      // Predicated region
      $region97: #{act_commit_net_forward.1} parent=83 // pred_check
        %p605 = pneg %p125
      $region98: #{act_commit_net_forward.1} parent=83 // pred_check_branch
        %607 = sbr.rel (%p605) target = $region100
      $region99: #{act_commit_net_forward.1} parent=83 // pred_region
        %p608 = scmp.lt.s32.totalorder %s27, 1
        %s609 = scalar_select %p608, %s27, 1
        %s610 = scalar_lea.vmem %s3, %s609
      $region100: #{act_commit_net_forward.1} parent=83 // pred_fallthru
        _
    $region84: #{act_commit_net_forward.1} parent=5 // pred_fallthru
      _
    %p611 = scmp.le.s32.totalorder 1, %s27
    %p612 = scmp.lt.s32.totalorder %s27, 3
    %p613 = pnand %p611, %p612
    %p614 = pneg %p613
    // Predicated region
    $region101: #{act_commit_net_forward.1} parent=5 // pred_check
      _
    $region102: #{act_commit_net_forward.1} parent=5 // pred_check_branch
      %616 = sbr.rel (%p613) target = $region104
    $region103: #{act_commit_net_forward.1} parent=5 // pred_region
      %s617 = ssub.s32 %s27, 1
      %p618 = scmp.lt.s32.totalorder %s32, 1
      %s619 = scalar_select %p618, %s32, 1
      %s620 = smul.addr %s619, 8
      %s621 = scalar_lea.vmem %s0, %s620
      %p622 = pneg %p53
      %p623 = pneg %p50
      %p624 = scmp.lt.s32.totalorder %s32, 1
      %s625 = scalar_select %p624, %s32, 1
      %s626 = smul.addr %s625, 8
      %s627 = scalar_lea.vmem %s1, %s626
      %p628 = pneg %p79
      %p629 = pneg %p76
      %p630 = scmp.lt.s32.totalorder %s32, 1
      %s631 = scalar_select %p630, %s32, 1
      %s632 = smul.addr %s631, 8
      %s633 = scalar_lea.vmem %s2, %s632
      %p634 = pneg %p105
      %p635 = pneg %p102
      %p636 = scmp.lt.s32.totalorder %s32, 1
      %s637 = scalar_select %p636, %s32, 1
      %s638 = scalar_lea.vmem %s3, %s637
      %p639 = pneg %p131
      %p640 = pneg %p128
      %p641 = pneg %p152
      %p642 = pneg %p149
      %p643 = pneg %p173
      %p644 = pneg %p170
      %p645 = pneg %p194
      %p646 = pneg %p191
      %p647 = pneg %p215
      %p648 = pneg %p212
      %p649 = pneg %p236
      %p650 = pneg %p233
      %p651 = pneg %p257
      %p652 = pneg %p254
      %p653 = pneg %p278
      %p654 = pneg %p275
      %p655 = pneg %p299
      %p656 = pneg %p296
      %p657 = pneg %p320
      %p658 = pneg %p317
      %p659 = pneg %p341
      %p660 = pneg %p338
      %p661 = pneg %p362
      %p662 = pneg %p359
      %p663 = pneg %p383
      %p664 = pneg %p380
      %p665 = pneg %p404
      %p666 = pneg %p401
      %p667 = pneg %p425
      %p668 = pneg %p422
      %p669 = pneg %p446
      %p670 = pneg %p443
      %p671 = pneg %p467
      %p672 = pneg %p464
      %p673 = pneg %p488
      %p674 = pneg %p485
      %p675 = pneg %p514
      %p676 = pneg %p511
      %p677 = scmp.lt.s32.totalorder %s32, 1
      %s678 = scalar_select %p677, %s32, 1
      %s679 = smul.addr %s678, 8
      %s680 = scalar_lea.vmem %s21, %s679
      %p681 = scmp.lt.s32.totalorder %s32, 1
      %s682 = scalar_select %p681, %s32, 1
      %s683 = smul.addr %s682, 8
      %s684 = scalar_lea.vmem %s0, %s683
      %p685 = scmp.lt.s32.totalorder %s32, 1
      %s686 = scalar_select %p685, %s32, 1
      %s687 = smul.addr %s686, 8
      %s688 = scalar_lea.vmem %s1, %s687
      %p689 = scmp.lt.s32.totalorder %s32, 1
      %s690 = scalar_select %p689, %s32, 1
      %s691 = smul.addr %s690, 8
      %s692 = scalar_lea.vmem %s2, %s691
      %p693 = scmp.lt.s32.totalorder %s32, 1
      %s694 = scalar_select %p693, %s32, 1
      %s695 = scalar_lea.vmem %s3, %s694
      %p696 = scmp.lt.s32.totalorder %s32, 1
      %s697 = scalar_select %p696, %s32, 1
      %s698 = smul.addr %s697, 8
      %s699 = scalar_lea.vmem %s21, %s698
      %v700 = vld [vmem:[%s684] sm:$0xff]
      %v701 = vld [vmem:[%s7] sm:$0xff]
      %v702 = vld [vmem:[%s7 + $0x8] sm:$0xff]
      %v703 = vld [vmem:[%s8] sm:$0x3]
      %v705 = vperm.slane %v703, 0
      %v706 = vperm.slane %v703, 1
      %vm709 = vcmask 64512
      %v711 = vsel %vm709, %v700, 0
      %713 = vmatpush.msra.mxu0 0.0
      %714 = vmatpush.msra.mxu0 0.0
      %715 = vmatpush.msra.mxu0 0.0
      %716 = vmatpush.msra.mxu0 0.0
      %717 = vmatpush.msra.mxu0 0.0
      %718 = vmatpush.msra.mxu0 0.0
      %719 = vmatpush.msra.mxu0 0.0
      %720 = vmatpush.msra.mxu0 0.0
      %721 = vmatpush.msra.mxu0 0.0
      %722 = vmatpush.msra.mxu0 0.0
      %723 = vmatpush.msra.mxu0 0.0
      %724 = vmatpush.msra.mxu0 0.0
      %725 = vmatpush.msra.mxu0 0.0
      %726 = vmatpush.msra.mxu0 0.0
      %727 = vmatpush.msra.mxu0 0.0
      %728 = vmatpush.msra.mxu0 %v701
      %729 = vmatmul.f32.gmra.mxu0 %v711
      %v730 = vpop.f32.mrf.mxu0
      %v731 = vadd.f32 %v705, %v730
      %732 = vdwg.mxu0
      %733 = vmatpush.msra.mxu0 0.0
      %734 = vmatpush.msra.mxu0 0.0
      %735 = vmatpush.msra.mxu0 0.0
      %736 = vmatpush.msra.mxu0 0.0
      %737 = vmatpush.msra.mxu0 0.0
      %738 = vmatpush.msra.mxu0 0.0
      %739 = vmatpush.msra.mxu0 0.0
      %740 = vmatpush.msra.mxu0 0.0
      %741 = vmatpush.msra.mxu0 0.0
      %742 = vmatpush.msra.mxu0 0.0
      %743 = vmatpush.msra.mxu0 0.0
      %744 = vmatpush.msra.mxu0 0.0
      %745 = vmatpush.msra.mxu0 0.0
      %746 = vmatpush.msra.mxu0 0.0
      %747 = vmatpush.msra.mxu0 0.0
      %748 = vmatpush.msra.mxu0 %v702
      %749 = vmatmul.f32.gmra.mxu0 %v711
      %v750 = vpop.f32.mrf.mxu0
      %v751 = vadd.f32 %v706, %v750
      %752 = vdwg.mxu0
      %v753 = vmax.f32 %v731, 0.0
      %v754 = vmax.f32 %v751, 0.0
      %v755 = vld [vmem:[%s9] sm:$0xff]
      %v756 = vld [vmem:[%s9 + $0x8] sm:$0xff]
      %v757 = vld [vmem:[%s9 + $0x10] sm:$0xff]
      %v758 = vld [vmem:[%s9 + $0x18] sm:$0xff]
      %v759 = vld [vmem:[%s9 + $0x20] sm:$0xff]
      %v760 = vld [vmem:[%s9 + $0x28] sm:$0xff]
      %v761 = vld [vmem:[%s9 + $0x30] sm:$0xff]
      %v762 = vld [vmem:[%s9 + $0x38] sm:$0xff]
      %v763 = vld [vmem:[%s9 + $0x40] sm:$0xff]
      %v764 = vld [vmem:[%s9 + $0x48] sm:$0xff]
      %v765 = vld [vmem:[%s9 + $0x50] sm:$0xff]
      %v766 = vld [vmem:[%s9 + $0x58] sm:$0xff]
      %v767 = vld [vmem:[%s9 + $0x60] sm:$0xff]
      %v768 = vld [vmem:[%s9 + $0x68] sm:$0xff]
      %v769 = vld [vmem:[%s9 + $0x70] sm:$0xff]
      %v770 = vld [vmem:[%s9 + $0x78] sm:$0xff]
      %v771 = vld [vmem:[%s9 + $0x80] sm:$0xff]
      %v772 = vld [vmem:[%s9 + $0x88] sm:$0xff]
      %v773 = vld [vmem:[%s9 + $0x90] sm:$0xff]
      %v774 = vld [vmem:[%s9 + $0x98] sm:$0xff]
      %v775 = vld [vmem:[%s9 + $0xa0] sm:$0xff]
      %v776 = vld [vmem:[%s9 + $0xa8] sm:$0xff]
      %v777 = vld [vmem:[%s9 + $0xb0] sm:$0xff]
      %v778 = vld [vmem:[%s9 + $0xb8] sm:$0xff]
      %v779 = vld [vmem:[%s9 + $0xc0] sm:$0xff]
      %v780 = vld [vmem:[%s9 + $0xc8] sm:$0xff]
      %v781 = vld [vmem:[%s9 + $0xd0] sm:$0xff]
      %v782 = vld [vmem:[%s9 + $0xd8] sm:$0xff]
      %v783 = vld [vmem:[%s9 + $0xe0] sm:$0xff]
      %v784 = vld [vmem:[%s9 + $0xe8] sm:$0xff]
      %v785 = vld [vmem:[%s9 + $0xf0] sm:$0xff]
      %v786 = vld [vmem:[%s9 + $0xf8] sm:$0xff]
      %v787 = vld [vmem:[%s10] sm:$0x1]
      %v789 = vperm.slane %v787, 0
      %791 = vmatpush.msra.mxu0 %v770
      %792 = vmatpush.msra.mxu0 %v769
      %793 = vmatpush.msra.mxu0 %v768
      %794 = vmatpush.msra.mxu0 %v767
      %795 = vmatpush.msra.mxu0 %v766
      %796 = vmatpush.msra.mxu0 %v765
      %797 = vmatpush.msra.mxu0 %v764
      %798 = vmatpush.msra.mxu0 %v763
      %799 = vmatpush.msra.mxu0 %v762
      %800 = vmatpush.msra.mxu0 %v761
      %801 = vmatpush.msra.mxu0 %v760
      %802 = vmatpush.msra.mxu0 %v759
      %803 = vmatpush.msra.mxu0 %v758
      %804 = vmatpush.msra.mxu0 %v757
      %805 = vmatpush.msra.mxu0 %v756
      %806 = vmatpush.msra.mxu0 %v755
      %807 = vmatmul.f32.gmra.mxu0 %v753
      %v808 = vpop.f32.mrf.mxu0
      %v809 = vadd.f32 %v789, %v808
      %810 = vdwg.mxu0
      %811 = vmatpush.msra.mxu0 %v786
      %812 = vmatpush.msra.mxu0 %v785
      %813 = vmatpush.msra.mxu0 %v784
      %814 = vmatpush.msra.mxu0 %v783
      %815 = vmatpush.msra.mxu0 %v782
      %816 = vmatpush.msra.mxu0 %v781
      %817 = vmatpush.msra.mxu0 %v780
      %818 = vmatpush.msra.mxu0 %v779
      %819 = vmatpush.msra.mxu0 %v778
      %820 = vmatpush.msra.mxu0 %v777
      %821 = vmatpush.msra.mxu0 %v776
      %822 = vmatpush.msra.mxu0 %v775
      %823 = vmatpush.msra.mxu0 %v774
      %824 = vmatpush.msra.mxu0 %v773
      %825 = vmatpush.msra.mxu0 %v772
      %826 = vmatpush.msra.mxu0 %v771
      %827 = vmatmul.f32.gmra.mxu0 %v754
      %v828 = vpop.f32.mrf.mxu0
      %v829 = vadd.f32 %v809, %v828
      %830 = vdwg.mxu0
      %v831 = vld [vmem:[%s688] sm:$0xff]
      %s832 = scalar_lea.vmem %s7, 16
      %v833 = vld [vmem:[%s832] sm:$0xff]
      %v834 = vld [vmem:[%s832 + $0x8] sm:$0xff]
      %s835 = scalar_lea.vmem %s8, 2
      %v836 = vld [vmem:[%s835] sm:$0x3]
      %v838 = vperm.slane %v836, 0
      %v839 = vperm.slane %v836, 1
      %v843 = vsel %vm709, %v831, 0
      %845 = vmatpush.msra.mxu0 0.0
      %846 = vmatpush.msra.mxu0 0.0
      %847 = vmatpush.msra.mxu0 0.0
      %848 = vmatpush.msra.mxu0 0.0
      %849 = vmatpush.msra.mxu0 0.0
      %850 = vmatpush.msra.mxu0 0.0
      %851 = vmatpush.msra.mxu0 0.0
      %852 = vmatpush.msra.mxu0 0.0
      %853 = vmatpush.msra.mxu0 0.0
      %854 = vmatpush.msra.mxu0 0.0
      %855 = vmatpush.msra.mxu0 0.0
      %856 = vmatpush.msra.mxu0 0.0
      %857 = vmatpush.msra.mxu0 0.0
      %858 = vmatpush.msra.mxu0 0.0
      %859 = vmatpush.msra.mxu0 0.0
      %860 = vmatpush.msra.mxu0 %v833
      %861 = vmatmul.f32.gmra.mxu0 %v843
      %v862 = vpop.f32.mrf.mxu0
      %v863 = vadd.f32 %v838, %v862
      %864 = vdwg.mxu0
      %865 = vmatpush.msra.mxu0 0.0
      %866 = vmatpush.msra.mxu0 0.0
      %867 = vmatpush.msra.mxu0 0.0
      %868 = vmatpush.msra.mxu0 0.0
      %869 = vmatpush.msra.mxu0 0.0
      %870 = vmatpush.msra.mxu0 0.0
      %871 = vmatpush.msra.mxu0 0.0
      %872 = vmatpush.msra.mxu0 0.0
      %873 = vmatpush.msra.mxu0 0.0
      %874 = vmatpush.msra.mxu0 0.0
      %875 = vmatpush.msra.mxu0 0.0
      %876 = vmatpush.msra.mxu0 0.0
      %877 = vmatpush.msra.mxu0 0.0
      %878 = vmatpush.msra.mxu0 0.0
      %879 = vmatpush.msra.mxu0 0.0
      %880 = vmatpush.msra.mxu0 %v834
      %881 = vmatmul.f32.gmra.mxu0 %v843
      %v882 = vpop.f32.mrf.mxu0
      %v883 = vadd.f32 %v839, %v882
      %884 = vdwg.mxu0
      %v885 = vmax.f32 %v863, 0.0
      %v886 = vmax.f32 %v883, 0.0
      %s887 = scalar_lea.vmem %s9, 256
      %v888 = vld [vmem:[%s887] sm:$0xff]
      %v889 = vld [vmem:[%s887 + $0x8] sm:$0xff]
      %v890 = vld [vmem:[%s887 + $0x10] sm:$0xff]
      %v891 = vld [vmem:[%s887 + $0x18] sm:$0xff]
      %v892 = vld [vmem:[%s887 + $0x20] sm:$0xff]
      %v893 = vld [vmem:[%s887 + $0x28] sm:$0xff]
      %v894 = vld [vmem:[%s887 + $0x30] sm:$0xff]
      %v895 = vld [vmem:[%s887 + $0x38] sm:$0xff]
      %v896 = vld [vmem:[%s887 + $0x40] sm:$0xff]
      %v897 = vld [vmem:[%s887 + $0x48] sm:$0xff]
      %v898 = vld [vmem:[%s887 + $0x50] sm:$0xff]
      %v899 = vld [vmem:[%s887 + $0x58] sm:$0xff]
      %v900 = vld [vmem:[%s887 + $0x60] sm:$0xff]
      %v901 = vld [vmem:[%s887 + $0x68] sm:$0xff]
      %v902 = vld [vmem:[%s887 + $0x70] sm:$0xff]
      %v903 = vld [vmem:[%s887 + $0x78] sm:$0xff]
      %v904 = vld [vmem:[%s887 + $0x80] sm:$0xff]
      %v905 = vld [vmem:[%s887 + $0x88] sm:$0xff]
      %v906 = vld [vmem:[%s887 + $0x90] sm:$0xff]
      %v907 = vld [vmem:[%s887 + $0x98] sm:$0xff]
      %v908 = vld [vmem:[%s887 + $0xa0] sm:$0xff]
      %v909 = vld [vmem:[%s887 + $0xa8] sm:$0xff]
      %v910 = vld [vmem:[%s887 + $0xb0] sm:$0xff]
      %v911 = vld [vmem:[%s887 + $0xb8] sm:$0xff]
      %v912 = vld [vmem:[%s887 + $0xc0] sm:$0xff]
      %v913 = vld [vmem:[%s887 + $0xc8] sm:$0xff]
      %v914 = vld [vmem:[%s887 + $0xd0] sm:$0xff]
      %v915 = vld [vmem:[%s887 + $0xd8] sm:$0xff]
      %v916 = vld [vmem:[%s887 + $0xe0] sm:$0xff]
      %v917 = vld [vmem:[%s887 + $0xe8] sm:$0xff]
      %v918 = vld [vmem:[%s887 + $0xf0] sm:$0xff]
      %v919 = vld [vmem:[%s887 + $0xf8] sm:$0xff]
      %s920 = scalar_lea.vmem %s10, 1
      %v921 = vld [vmem:[%s920] sm:$0x1]
      %v923 = vperm.slane %v921, 0
      %925 = vmatpush.msra.mxu0 %v903
      %926 = vmatpush.msra.mxu0 %v902
      %927 = vmatpush.msra.mxu0 %v901
      %928 = vmatpush.msra.mxu0 %v900
      %929 = vmatpush.msra.mxu0 %v899
      %930 = vmatpush.msra.mxu0 %v898
      %931 = vmatpush.msra.mxu0 %v897
      %932 = vmatpush.msra.mxu0 %v896
      %933 = vmatpush.msra.mxu0 %v895
      %934 = vmatpush.msra.mxu0 %v894
      %935 = vmatpush.msra.mxu0 %v893
      %936 = vmatpush.msra.mxu0 %v892
      %937 = vmatpush.msra.mxu0 %v891
      %938 = vmatpush.msra.mxu0 %v890
      %939 = vmatpush.msra.mxu0 %v889
      %940 = vmatpush.msra.mxu0 %v888
      %941 = vmatmul.f32.gmra.mxu0 %v885
      %v942 = vpop.f32.mrf.mxu0
      %v943 = vadd.f32 %v923, %v942
      %944 = vdwg.mxu0
      %945 = vmatpush.msra.mxu0 %v919
      %946 = vmatpush.msra.mxu0 %v918
      %947 = vmatpush.msra.mxu0 %v917
      %948 = vmatpush.msra.mxu0 %v916
      %949 = vmatpush.msra.mxu0 %v915
      %950 = vmatpush.msra.mxu0 %v914
      %951 = vmatpush.msra.mxu0 %v913
      %952 = vmatpush.msra.mxu0 %v912
      %953 = vmatpush.msra.mxu0 %v911
      %954 = vmatpush.msra.mxu0 %v910
      %955 = vmatpush.msra.mxu0 %v909
      %956 = vmatpush.msra.mxu0 %v908
      %957 = vmatpush.msra.mxu0 %v907
      %958 = vmatpush.msra.mxu0 %v906
      %959 = vmatpush.msra.mxu0 %v905
      %960 = vmatpush.msra.mxu0 %v904
      %961 = vmatmul.f32.gmra.mxu0 %v886
      %v962 = vpop.f32.mrf.mxu0
      %v963 = vadd.f32 %v943, %v962
      %964 = vdwg.mxu0
      %v965 = vld [vmem:[%s692] sm:$0xff]
      %s966 = scalar_lea.vmem %s7, 32
      %v967 = vld [vmem:[%s966] sm:$0xff]
      %v968 = vld [vmem:[%s966 + $0x8] sm:$0xff]
      %s969 = scalar_lea.vmem %s8, 4
      %v970 = vld [vmem:[%s969] sm:$0x3]
      %v972 = vperm.slane %v970, 0
      %v973 = vperm.slane %v970, 1
      %v977 = vsel %vm709, %v965, 0
      %979 = vmatpush.msra.mxu0 0.0
      %980 = vmatpush.msra.mxu0 0.0
      %981 = vmatpush.msra.mxu0 0.0
      %982 = vmatpush.msra.mxu0 0.0
      %983 = vmatpush.msra.mxu0 0.0
      %984 = vmatpush.msra.mxu0 0.0
      %985 = vmatpush.msra.mxu0 0.0
      %986 = vmatpush.msra.mxu0 0.0
      %987 = vmatpush.msra.mxu0 0.0
      %988 = vmatpush.msra.mxu0 0.0
      %989 = vmatpush.msra.mxu0 0.0
      %990 = vmatpush.msra.mxu0 0.0
      %991 = vmatpush.msra.mxu0 0.0
      %992 = vmatpush.msra.mxu0 0.0
      %993 = vmatpush.msra.mxu0 0.0
      %994 = vmatpush.msra.mxu0 %v967
      %995 = vmatmul.f32.gmra.mxu0 %v977
      %v996 = vpop.f32.mrf.mxu0
      %v997 = vadd.f32 %v972, %v996
      %998 = vdwg.mxu0
      %999 = vmatpush.msra.mxu0 0.0
      %1000 = vmatpush.msra.mxu0 0.0
      %1001 = vmatpush.msra.mxu0 0.0
      %1002 = vmatpush.msra.mxu0 0.0
      %1003 = vmatpush.msra.mxu0 0.0
      %1004 = vmatpush.msra.mxu0 0.0
      %1005 = vmatpush.msra.mxu0 0.0
      %1006 = vmatpush.msra.mxu0 0.0
      %1007 = vmatpush.msra.mxu0 0.0
      %1008 = vmatpush.msra.mxu0 0.0
      %1009 = vmatpush.msra.mxu0 0.0
      %1010 = vmatpush.msra.mxu0 0.0
      %1011 = vmatpush.msra.mxu0 0.0
      %1012 = vmatpush.msra.mxu0 0.0
      %1013 = vmatpush.msra.mxu0 0.0
      %1014 = vmatpush.msra.mxu0 %v968
      %1015 = vmatmul.f32.gmra.mxu0 %v977
      %v1016 = vpop.f32.mrf.mxu0
      %v1017 = vadd.f32 %v973, %v1016
      %1018 = vdwg.mxu0
      %v1019 = vmax.f32 %v997, 0.0
      %v1020 = vmax.f32 %v1017, 0.0
      %s1021 = scalar_lea.vmem %s9, 512
      %v1022 = vld [vmem:[%s1021] sm:$0xff]
      %v1023 = vld [vmem:[%s1021 + $0x8] sm:$0xff]
      %v1024 = vld [vmem:[%s1021 + $0x10] sm:$0xff]
      %v1025 = vld [vmem:[%s1021 + $0x18] sm:$0xff]
      %v1026 = vld [vmem:[%s1021 + $0x20] sm:$0xff]
      %v1027 = vld [vmem:[%s1021 + $0x28] sm:$0xff]
      %v1028 = vld [vmem:[%s1021 + $0x30] sm:$0xff]
      %v1029 = vld [vmem:[%s1021 + $0x38] sm:$0xff]
      %v1030 = vld [vmem:[%s1021 + $0x40] sm:$0xff]
      %v1031 = vld [vmem:[%s1021 + $0x48] sm:$0xff]
      %v1032 = vld [vmem:[%s1021 + $0x50] sm:$0xff]
      %v1033 = vld [vmem:[%s1021 + $0x58] sm:$0xff]
      %v1034 = vld [vmem:[%s1021 + $0x60] sm:$0xff]
      %v1035 = vld [vmem:[%s1021 + $0x68] sm:$0xff]
      %v1036 = vld [vmem:[%s1021 + $0x70] sm:$0xff]
      %v1037 = vld [vmem:[%s1021 + $0x78] sm:$0xff]
      %v1038 = vld [vmem:[%s1021 + $0x80] sm:$0xff]
      %v1039 = vld [vmem:[%s1021 + $0x88] sm:$0xff]
      %v1040 = vld [vmem:[%s1021 + $0x90] sm:$0xff]
      %v1041 = vld [vmem:[%s1021 + $0x98] sm:$0xff]
      %v1042 = vld [vmem:[%s1021 + $0xa0] sm:$0xff]
      %v1043 = vld [vmem:[%s1021 + $0xa8] sm:$0xff]
      %v1044 = vld [vmem:[%s1021 + $0xb0] sm:$0xff]
      %v1045 = vld [vmem:[%s1021 + $0xb8] sm:$0xff]
      %v1046 = vld [vmem:[%s1021 + $0xc0] sm:$0xff]
      %v1047 = vld [vmem:[%s1021 + $0xc8] sm:$0xff]
      %v1048 = vld [vmem:[%s1021 + $0xd0] sm:$0xff]
      %v1049 = vld [vmem:[%s1021 + $0xd8] sm:$0xff]
      %v1050 = vld [vmem:[%s1021 + $0xe0] sm:$0xff]
      %v1051 = vld [vmem:[%s1021 + $0xe8] sm:$0xff]
      %v1052 = vld [vmem:[%s1021 + $0xf0] sm:$0xff]
      %v1053 = vld [vmem:[%s1021 + $0xf8] sm:$0xff]
      %s1054 = scalar_lea.vmem %s10, 2
      %v1055 = vld [vmem:[%s1054] sm:$0x1]
      %v1057 = vperm.slane %v1055, 0
      %1059 = vmatpush.msra.mxu0 %v1037
      %1060 = vmatpush.msra.mxu0 %v1036
      %1061 = vmatpush.msra.mxu0 %v1035
      %1062 = vmatpush.msra.mxu0 %v1034
      %1063 = vmatpush.msra.mxu0 %v1033
      %1064 = vmatpush.msra.mxu0 %v1032
      %1065 = vmatpush.msra.mxu0 %v1031
      %1066 = vmatpush.msra.mxu0 %v1030
      %1067 = vmatpush.msra.mxu0 %v1029
      %1068 = vmatpush.msra.mxu0 %v1028
      %1069 = vmatpush.msra.mxu0 %v1027
      %1070 = vmatpush.msra.mxu0 %v1026
      %1071 = vmatpush.msra.mxu0 %v1025
      %1072 = vmatpush.msra.mxu0 %v1024
      %1073 = vmatpush.msra.mxu0 %v1023
      %1074 = vmatpush.msra.mxu0 %v1022
      %1075 = vmatmul.f32.gmra.mxu0 %v1019
      %v1076 = vpop.f32.mrf.mxu0
      %v1077 = vadd.f32 %v1057, %v1076
      %1078 = vdwg.mxu0
      %1079 = vmatpush.msra.mxu0 %v1053
      %1080 = vmatpush.msra.mxu0 %v1052
      %1081 = vmatpush.msra.mxu0 %v1051
      %1082 = vmatpush.msra.mxu0 %v1050
      %1083 = vmatpush.msra.mxu0 %v1049
      %1084 = vmatpush.msra.mxu0 %v1048
      %1085 = vmatpush.msra.mxu0 %v1047
      %1086 = vmatpush.msra.mxu0 %v1046
      %1087 = vmatpush.msra.mxu0 %v1045
      %1088 = vmatpush.msra.mxu0 %v1044
      %1089 = vmatpush.msra.mxu0 %v1043
      %1090 = vmatpush.msra.mxu0 %v1042
      %1091 = vmatpush.msra.mxu0 %v1041
      %1092 = vmatpush.msra.mxu0 %v1040
      %1093 = vmatpush.msra.mxu0 %v1039
      %1094 = vmatpush.msra.mxu0 %v1038
      %1095 = vmatmul.f32.gmra.mxu0 %v1020
      %v1096 = vpop.f32.mrf.mxu0
      %v1097 = vadd.f32 %v1077, %v1096
      %1098 = vdwg.mxu0
      %v1099 = vld [vmem:[%s5] sm:$0xff]
      %1101 = vset.pattern.permute.xlu0 0
      %1102 = vperm.xlu0 %1101, %v1099
      %v1103 = vpop.permute.xlu0 %1102
      %v1105 = vmul.f32 %v1097, %v1103
      %v1106 = vld [vmem:[%s4] sm:$0xff]
      %v1107 = vld [vmem:[%s695] sm:$0x1]
      %v1109 = vperm.slane %v1107, 0
      %v1111 = vadd.f32 %v1106, %v1109
      %v1112 = vadd.f32 %v829, %v1111
      %v1113 = vadd.f32 %v963, %v1111
      %v1114 = vadd.f32 %v1105, %v1111
      %v1115 = vld [vmem:[%s6] sm:$0xff]
      %v1116 = vld [vmem:[%s6 + $0x8] sm:$0xff]
      %v1117 = vld [vmem:[%s6 + $0x10] sm:$0xff]
      %v1118 = vld [vmem:[%s14] sm:$0x1]
      %v1119 = vld [vmem:[%s14 + $0x1] sm:$0x1]
      %v1120 = vld [vmem:[%s14 + $0x2] sm:$0x1]
      %v1121 = vld [vmem:[%s14 + $0x3] sm:$0x1]
      %v1122 = vld [vmem:[%s14 + $0x4] sm:$0x1]
      %v1123 = vld [vmem:[%s14 + $0x5] sm:$0x1]
      %vm1124 = vcmask 261120
      %v1125 = vsel %vm1124, %v1112, 0.0
      %1126 = vadd.xlane.f32.xlu0 %v1125
      %v1127 = vpop.xlane.xlu0 %1126
      %v1128 = vsel %vm1124, %v1113, 0.0
      %1129 = vadd.xlane.f32.xlu0 %v1128
      %v1130 = vpop.xlane.xlu0 %1129
      %v1131 = vsel %vm1124, %v1114, 0.0
      %1132 = vadd.xlane.f32.xlu0 %v1131
      %v1133 = vpop.xlane.xlu0 %1132
      %v1134 = vrcp.pop 32.0
      %v1135 = vmul.f32 32.0, %v1134
      %v1136 = vsub.f32 1.0, %v1135
      %v1137 = vmul.f32 %v1134, %v1136
      %v1138 = vadd.f32 %v1134, %v1137
      %vm1139 = vweird.f32 %v1134
      %v1140 = vsel %vm1139, %v1134, %v1138
      %v1141 = vmul.f32 %v1127, %v1140
      %v1142 = vmul.f32 %v1130, %v1140
      %v1143 = vmul.f32 %v1133, %v1140
      %v1144 = vsub.f32 %v1112, %v1141
      %v1145 = vsub.f32 %v1113, %v1142
      %v1146 = vsub.f32 %v1114, %v1143
      %v1147 = vmul.f32 %v1144, %v1144
      %v1148 = vmul.f32 %v1145, %v1145
      %v1149 = vmul.f32 %v1146, %v1146
      %v1150 = vsel %vm1124, %v1147, 0.0
      %1151 = vadd.xlane.f32.xlu0 %v1150
      %v1152 = vpop.xlane.xlu0 %1151
      %v1153 = vsel %vm1124, %v1148, 0.0
      %1154 = vadd.xlane.f32.xlu0 %v1153
      %v1155 = vpop.xlane.xlu0 %1154
      %v1156 = vsel %vm1124, %v1149, 0.0
      %1157 = vadd.xlane.f32.xlu0 %v1156
      %v1158 = vpop.xlane.xlu0 %1157
      %v1159 = vmul.f32 %v1152, %v1140
      %v1160 = vmul.f32 %v1155, %v1140
      %v1161 = vmul.f32 %v1158, %v1140
      %v1162 = vadd.f32 %v1159, 1e-05
      %v1163 = vadd.f32 %v1160, 1e-05
      %v1164 = vadd.f32 %v1161, 1e-05
      %v1165 = vrsqrt.pop %v1162
      %v1166 = vmul.f32 %v1165, %v1162
      %v1167 = vmul.f32 %v1166, %v1165
      %v1168 = vmul.f32 0.5, %v1167
      %v1169 = vsub.f32 1.5, %v1168
      %v1170 = vmul.f32 %v1165, %v1169
      %vm1171 = vweird.f32 %v1162
      %vm1172 = vweird.f32 %v1165
      %vm1173 = vmor %vm1171, %vm1172
      %v1174 = vsel %vm1173, %v1165, %v1170
      %v1175 = vrsqrt.pop %v1163
      %v1176 = vmul.f32 %v1175, %v1163
      %v1177 = vmul.f32 %v1176, %v1175
      %v1178 = vmul.f32 0.5, %v1177
      %v1179 = vsub.f32 1.5, %v1178
      %v1180 = vmul.f32 %v1175, %v1179
      %vm1181 = vweird.f32 %v1163
      %vm1182 = vweird.f32 %v1175
      %vm1183 = vmor %vm1181, %vm1182
      %v1184 = vsel %vm1183, %v1175, %v1180
      %v1185 = vrsqrt.pop %v1164
      %v1186 = vmul.f32 %v1185, %v1164
      %v1187 = vmul.f32 %v1186, %v1185
      %v1188 = vmul.f32 0.5, %v1187
      %v1189 = vsub.f32 1.5, %v1188
      %v1190 = vmul.f32 %v1185, %v1189
      %vm1191 = vweird.f32 %v1164
      %vm1192 = vweird.f32 %v1185
      %vm1193 = vmor %vm1191, %vm1192
      %v1194 = vsel %vm1193, %v1185, %v1190
      %v1195 = vmul.f32 %v1144, %v1174
      %v1196 = vmul.f32 %v1145, %v1184
      %v1197 = vmul.f32 %v1146, %v1194
      %v1198 = vperm.slane %v1118, 0
      %v1199 = vmul.f32 %v1195, %v1198
      %v1200 = vmul.f32 %v1196, %v1198
      %v1201 = vmul.f32 %v1197, %v1198
      %v1202 = vperm.slane %v1119, 0
      %v1203 = vadd.f32 %v1199, %v1202
      %v1204 = vadd.f32 %v1200, %v1202
      %v1205 = vadd.f32 %v1201, %v1202
      %v1206 = vld [vmem:[%s11] sm:$0xff]
      %v1207 = vld [vmem:[%s11 + $0x10] sm:$0xff]
      %v1208 = vld [vmem:[%s11 + $0x20] sm:$0xff]
      %v1209 = vld [vmem:[%s11 + $0x30] sm:$0xff]
      %v1210 = vld [vmem:[%s12] sm:$0x1]
      %v1212 = vperm.slane %v1210, 0
      %v1215 = vsel %vm1124, %v1203, 0
      %v1218 = vsel %vm1124, %v1204, 0
      %v1221 = vsel %vm1124, %v1205, 0
      %1223 = vmatpush.msra.mxu0 0.0
      %1224 = vmatpush.msra.mxu0 0.0
      %1225 = vmatpush.msra.mxu0 0.0
      %1226 = vmatpush.msra.mxu0 0.0
      %1227 = vmatpush.msra.mxu0 0.0
      %1228 = vmatpush.msra.mxu0 0.0
      %1229 = vmatpush.msra.mxu0 0.0
      %1230 = vmatpush.msra.mxu0 0.0
      %1231 = vmatpush.msra.mxu0 0.0
      %1232 = vmatpush.msra.mxu0 0.0
      %1233 = vmatpush.msra.mxu0 0.0
      %1234 = vmatpush.msra.mxu0 0.0
      %1235 = vmatpush.msra.mxu0 %v1209
      %1236 = vmatpush.msra.mxu0 %v1208
      %1237 = vmatpush.msra.mxu0 %v1207
      %1238 = vmatpush.msra.mxu0 %v1206
      %1239 = vmatmul.f32.gmra.mxu0 %v1215
      %v1240 = vpop.f32.mrf.mxu0
      %v1241 = vadd.f32 %v1212, %v1240
      %1242 = vmatmul.f32.gmra.mxu0 %v1218
      %v1243 = vpop.f32.mrf.mxu0
      %v1244 = vadd.f32 %v1212, %v1243
      %1245 = vmatmul.f32.gmra.mxu0 %v1221
      %v1246 = vpop.f32.mrf.mxu0
      %v1247 = vadd.f32 %v1212, %v1246
      %1248 = vdwg.mxu0
      %1252 = vrot.lane.b32.xlu0 %v1241, 96
      %v1253 = vpop.permute.xlu0 %1252
      %1254 = vrot.lane.b32.xlu0 %v1244, 96
      %v1255 = vpop.permute.xlu0 %1254
      %1256 = vrot.lane.b32.xlu0 %v1247, 96
      %v1257 = vpop.permute.xlu0 %1256
      %v1258 = vsel %vm709, %v1241, 0
      %v1260 = vsel %vm709, %v1244, 0
      %v1262 = vsel %vm709, %v1247, 0
      %v1264 = vsel %vm709, %v1253, 0
      %v1266 = vsel %vm709, %v1255, 0
      %v1268 = vsel %vm709, %v1257, 0
      %1270 = vmatpush.xpose.msra.mxu0 0.0
      %1271 = vmatpush.xpose.msra.mxu0 0.0
      %1272 = vmatpush.xpose.msra.mxu0 0.0
      %1273 = vmatpush.xpose.msra.mxu0 0.0
      %1274 = vmatpush.xpose.msra.mxu0 0.0
      %1275 = vmatpush.xpose.msra.mxu0 0.0
      %1276 = vmatpush.xpose.msra.mxu0 0.0
      %1277 = vmatpush.xpose.msra.mxu0 0.0
      %1278 = vmatpush.xpose.msra.mxu0 0.0
      %1279 = vmatpush.xpose.msra.mxu0 0.0
      %1280 = vmatpush.xpose.msra.mxu0 0.0
      %1281 = vmatpush.xpose.msra.mxu0 0.0
      %1282 = vmatpush.xpose.msra.mxu0 0.0
      %1283 = vmatpush.xpose.msra.mxu0 %v1268
      %1284 = vmatpush.xpose.msra.mxu0 %v1266
      %1285 = vmatpush.xpose.msra.mxu0 %v1264
      %1286 = vmatmul.f32.gmra.mxu0 %v1258
      %v1287 = vpop.f32.mrf.mxu0
      %v1288 = vadd.f32 0.0, %v1287
      %1289 = vmatmul.f32.gmra.mxu0 %v1260
      %v1290 = vpop.f32.mrf.mxu0
      %v1291 = vadd.f32 0.0, %v1290
      %1292 = vmatmul.f32.gmra.mxu0 %v1262
      %v1293 = vpop.f32.mrf.mxu0
      %v1294 = vadd.f32 0.0, %v1293
      %1295 = vdwg.mxu0
      %v1296 = vmul.f32 %v1288, 0.35355338
      %v1297 = vmul.f32 %v1291, 0.35355338
      %v1298 = vmul.f32 %v1294, 0.35355338
      %v1299 = vadd.f32 %v1296, %v1115
      %v1300 = vadd.f32 %v1297, %v1116
      %v1301 = vadd.f32 %v1298, %v1117
      %vm1302 = vcmask 195584
      %v1303 = vsel %vm1302, %v1299, -inf
      %1304 = vmax.xlane.f32.xlu0 %v1303
      %v1305 = vpop.xlane.xlu0 %1304
      %v1306 = vsel %vm1302, %v1300, -inf
      %1307 = vmax.xlane.f32.xlu0 %v1306
      %v1308 = vpop.xlane.xlu0 %1307
      %v1309 = vsel %vm1302, %v1301, -inf
      %1310 = vmax.xlane.f32.xlu0 %v1309
      %v1311 = vpop.xlane.xlu0 %1310
      %v1312 = vsub.f32 %v1299, %v1305
      %v1313 = vsub.f32 %v1300, %v1308
      %v1314 = vsub.f32 %v1301, %v1311
      %v1315 = vmul.f32 %v1312, 1.442695
      %v1316 = vpow.pop %v1315
      %v1317 = vmul.f32 %v1313, 1.442695
      %v1318 = vpow.pop %v1317
      %v1319 = vmul.f32 %v1314, 1.442695
      %v1320 = vpow.pop %v1319
      %v1321 = vsel %vm1302, %v1316, 0.0
      %1322 = vadd.xlane.f32.xlu0 %v1321
      %v1323 = vpop.xlane.xlu0 %1322
      %v1324 = vsel %vm1302, %v1318, 0.0
      %1325 = vadd.xlane.f32.xlu0 %v1324
      %v1326 = vpop.xlane.xlu0 %1325
      %v1327 = vsel %vm1302, %v1320, 0.0
      %1328 = vadd.xlane.f32.xlu0 %v1327
      %v1329 = vpop.xlane.xlu0 %1328
      %v1330 = vrcp.pop %v1323
      %v1331 = vrcp.pop %v1326
      %v1332 = vrcp.pop %v1329
      %v1333 = vmul.f32 %v1316, %v1330
      %v1334 = vmul.f32 %v1318, %v1331
      %v1335 = vmul.f32 %v1320, %v1332
      %1336 = vrot.lane.b32.xlu0 %v1241, 64
      %v1337 = vpop.permute.xlu0 %1336
      %1338 = vrot.lane.b32.xlu0 %v1244, 64
      %v1339 = vpop.permute.xlu0 %1338
      %1340 = vrot.lane.b32.xlu0 %v1247, 64
      %v1341 = vpop.permute.xlu0 %1340
      %v1346 = vsel %vm1302, %v1333, 0
      %v1349 = vsel %vm1302, %v1334, 0
      %v1352 = vsel %vm1302, %v1335, 0
      %1354 = vmatpush.msra.mxu0 0.0
      %1355 = vmatpush.msra.mxu0 0.0
      %1356 = vmatpush.msra.mxu0 0.0
      %1357 = vmatpush.msra.mxu0 0.0
      %1358 = vmatpush.msra.mxu0 0.0
      %1359 = vmatpush.msra.mxu0 0.0
      %1360 = vmatpush.msra.mxu0 0.0
      %1361 = vmatpush.msra.mxu0 0.0
      %1362 = vmatpush.msra.mxu0 0.0
      %1363 = vmatpush.msra.mxu0 0.0
      %1364 = vmatpush.msra.mxu0 0.0
      %1365 = vmatpush.msra.mxu0 0.0
      %1366 = vmatpush.msra.mxu0 0.0
      %1367 = vmatpush.msra.mxu0 %v1341
      %1368 = vmatpush.msra.mxu0 %v1339
      %1369 = vmatpush.msra.mxu0 %v1337
      %1370 = vmatmul.f32.gmra.mxu0 %v1346
      %v1371 = vpop.f32.mrf.mxu0
      %v1372 = vadd.f32 0.0, %v1371
      %1373 = vmatmul.f32.gmra.mxu0 %v1349
      %v1374 = vpop.f32.mrf.mxu0
      %v1375 = vadd.f32 0.0, %v1374
      %1376 = vmatmul.f32.gmra.mxu0 %v1352
      %v1377 = vpop.f32.mrf.mxu0
      %v1378 = vadd.f32 0.0, %v1377
      %1379 = vdwg.mxu0
      %1380 = vrot.lane.b32.xlu0 %v1241, 120
      %v1381 = vpop.permute.xlu0 %1380
      %1382 = vrot.lane.b32.xlu0 %v1244, 120
      %v1383 = vpop.permute.xlu0 %1382
      %1384 = vrot.lane.b32.xlu0 %v1247, 120
      %v1385 = vpop.permute.xlu0 %1384
      %1386 = vrot.lane.b32.xlu0 %v1241, 88
      %v1387 = vpop.permute.xlu0 %1386
      %1388 = vrot.lane.b32.xlu0 %v1244, 88
      %v1389 = vpop.permute.xlu0 %1388
      %1390 = vrot.lane.b32.xlu0 %v1247, 88
      %v1391 = vpop.permute.xlu0 %1390
      %v1392 = vsel %vm709, %v1381, 0
      %v1394 = vsel %vm709, %v1383, 0
      %v1396 = vsel %vm709, %v1385, 0
      %v1398 = vsel %vm709, %v1387, 0
      %v1400 = vsel %vm709, %v1389, 0
      %v1402 = vsel %vm709, %v1391, 0
      %1404 = vmatpush.xpose.msra.mxu0 0.0
      %1405 = vmatpush.xpose.msra.mxu0 0.0
      %1406 = vmatpush.xpose.msra.mxu0 0.0
      %1407 = vmatpush.xpose.msra.mxu0 0.0
      %1408 = vmatpush.xpose.msra.mxu0 0.0
      %1409 = vmatpush.xpose.msra.mxu0 0.0
      %1410 = vmatpush.xpose.msra.mxu0 0.0
      %1411 = vmatpush.xpose.msra.mxu0 0.0
      %1412 = vmatpush.xpose.msra.mxu0 0.0
      %1413 = vmatpush.xpose.msra.mxu0 0.0
      %1414 = vmatpush.xpose.msra.mxu0 0.0
      %1415 = vmatpush.xpose.msra.mxu0 0.0
      %1416 = vmatpush.xpose.msra.mxu0 0.0
      %1417 = vmatpush.xpose.msra.mxu0 %v1402
      %1418 = vmatpush.xpose.msra.mxu0 %v1400
      %1419 = vmatpush.xpose.msra.mxu0 %v1398
      %1420 = vmatmul.f32.gmra.mxu0 %v1392
      %v1421 = vpop.f32.mrf.mxu0
      %v1422 = vadd.f32 0.0, %v1421
      %1423 = vmatmul.f32.gmra.mxu0 %v1394
      %v1424 = vpop.f32.mrf.mxu0
      %v1425 = vadd.f32 0.0, %v1424
      %1426 = vmatmul.f32.gmra.mxu0 %v1396
      %v1427 = vpop.f32.mrf.mxu0
      %v1428 = vadd.f32 0.0, %v1427
      %1429 = vdwg.mxu0
      %v1430 = vmul.f32 %v1422, 0.35355338
      %v1431 = vmul.f32 %v1425, 0.35355338
      %v1432 = vmul.f32 %v1428, 0.35355338
      %v1433 = vadd.f32 %v1430, %v1115
      %v1434 = vadd.f32 %v1431, %v1116
      %v1435 = vadd.f32 %v1432, %v1117
      %v1436 = vsel %vm1302, %v1433, -inf
      %1437 = vmax.xlane.f32.xlu0 %v1436
      %v1438 = vpop.xlane.xlu0 %1437
      %v1439 = vsel %vm1302, %v1434, -inf
      %1440 = vmax.xlane.f32.xlu0 %v1439
      %v1441 = vpop.xlane.xlu0 %1440
      %v1442 = vsel %vm1302, %v1435, -inf
      %1443 = vmax.xlane.f32.xlu0 %v1442
      %v1444 = vpop.xlane.xlu0 %1443
      %v1445 = vsub.f32 %v1433, %v1438
      %v1446 = vsub.f32 %v1434, %v1441
      %v1447 = vsub.f32 %v1435, %v1444
      %v1448 = vmul.f32 %v1445, 1.442695
      %v1449 = vpow.pop %v1448
      %v1450 = vmul.f32 %v1446, 1.442695
      %v1451 = vpow.pop %v1450
      %v1452 = vmul.f32 %v1447, 1.442695
      %v1453 = vpow.pop %v1452
      %v1454 = vsel %vm1302, %v1449, 0.0
      %1455 = vadd.xlane.f32.xlu0 %v1454
      %v1456 = vpop.xlane.xlu0 %1455
      %v1457 = vsel %vm1302, %v1451, 0.0
      %1458 = vadd.xlane.f32.xlu0 %v1457
      %v1459 = vpop.xlane.xlu0 %1458
      %v1460 = vsel %vm1302, %v1453, 0.0
      %1461 = vadd.xlane.f32.xlu0 %v1460
      %v1462 = vpop.xlane.xlu0 %1461
      %v1463 = vrcp.pop %v1456
      %v1464 = vrcp.pop %v1459
      %v1465 = vrcp.pop %v1462
      %v1466 = vmul.f32 %v1449, %v1463
      %v1467 = vmul.f32 %v1451, %v1464
      %v1468 = vmul.f32 %v1453, %v1465
      %1469 = vrot.lane.b32.xlu0 %v1241, 56
      %v1470 = vpop.permute.xlu0 %1469
      %1471 = vrot.lane.b32.xlu0 %v1244, 56
      %v1472 = vpop.permute.xlu0 %1471
      %1473 = vrot.lane.b32.xlu0 %v1247, 56
      %v1474 = vpop.permute.xlu0 %1473
      %v1479 = vsel %vm1302, %v1466, 0
      %v1482 = vsel %vm1302, %v1467, 0
      %v1485 = vsel %vm1302, %v1468, 0
      %1487 = vmatpush.msra.mxu0 0.0
      %1488 = vmatpush.msra.mxu0 0.0
      %1489 = vmatpush.msra.mxu0 0.0
      %1490 = vmatpush.msra.mxu0 0.0
      %1491 = vmatpush.msra.mxu0 0.0
      %1492 = vmatpush.msra.mxu0 0.0
      %1493 = vmatpush.msra.mxu0 0.0
      %1494 = vmatpush.msra.mxu0 0.0
      %1495 = vmatpush.msra.mxu0 0.0
      %1496 = vmatpush.msra.mxu0 0.0
      %1497 = vmatpush.msra.mxu0 0.0
      %1498 = vmatpush.msra.mxu0 0.0
      %1499 = vmatpush.msra.mxu0 0.0
      %1500 = vmatpush.msra.mxu0 %v1474
      %1501 = vmatpush.msra.mxu0 %v1472
      %1502 = vmatpush.msra.mxu0 %v1470
      %1503 = vmatmul.f32.gmra.mxu0 %v1479
      %v1504 = vpop.f32.mrf.mxu0
      %v1505 = vadd.f32 0.0, %v1504
      %1506 = vmatmul.f32.gmra.mxu0 %v1482
      %v1507 = vpop.f32.mrf.mxu0
      %v1508 = vadd.f32 0.0, %v1507
      %1509 = vmatmul.f32.gmra.mxu0 %v1485
      %v1510 = vpop.f32.mrf.mxu0
      %v1511 = vadd.f32 0.0, %v1510
      %1512 = vdwg.mxu0
      %1513 = vrot.lane.b32.xlu0 %v1241, 112
      %v1514 = vpop.permute.xlu0 %1513
      %1515 = vrot.lane.b32.xlu0 %v1244, 112
      %v1516 = vpop.permute.xlu0 %1515
      %1517 = vrot.lane.b32.xlu0 %v1247, 112
      %v1518 = vpop.permute.xlu0 %1517
      %1519 = vrot.lane.b32.xlu0 %v1241, 80
      %v1520 = vpop.permute.xlu0 %1519
      %1521 = vrot.lane.b32.xlu0 %v1244, 80
      %v1522 = vpop.permute.xlu0 %1521
      %1523 = vrot.lane.b32.xlu0 %v1247, 80
      %v1524 = vpop.permute.xlu0 %1523
      %v1525 = vsel %vm709, %v1514, 0
      %v1527 = vsel %vm709, %v1516, 0
      %v1529 = vsel %vm709, %v1518, 0
      %v1531 = vsel %vm709, %v1520, 0
      %v1533 = vsel %vm709, %v1522, 0
      %v1535 = vsel %vm709, %v1524, 0
      %1537 = vmatpush.xpose.msra.mxu0 0.0
      %1538 = vmatpush.xpose.msra.mxu0 0.0
      %1539 = vmatpush.xpose.msra.mxu0 0.0
      %1540 = vmatpush.xpose.msra.mxu0 0.0
      %1541 = vmatpush.xpose.msra.mxu0 0.0
      %1542 = vmatpush.xpose.msra.mxu0 0.0
      %1543 = vmatpush.xpose.msra.mxu0 0.0
      %1544 = vmatpush.xpose.msra.mxu0 0.0
      %1545 = vmatpush.xpose.msra.mxu0 0.0
      %1546 = vmatpush.xpose.msra.mxu0 0.0
      %1547 = vmatpush.xpose.msra.mxu0 0.0
      %1548 = vmatpush.xpose.msra.mxu0 0.0
      %1549 = vmatpush.xpose.msra.mxu0 0.0
      %1550 = vmatpush.xpose.msra.mxu0 %v1535
      %1551 = vmatpush.xpose.msra.mxu0 %v1533
      %1552 = vmatpush.xpose.msra.mxu0 %v1531
      %1553 = vmatmul.f32.gmra.mxu0 %v1525
      %v1554 = vpop.f32.mrf.mxu0
      %v1555 = vadd.f32 0.0, %v1554
      %1556 = vmatmul.f32.gmra.mxu0 %v1527
      %v1557 = vpop.f32.mrf.mxu0
      %v1558 = vadd.f32 0.0, %v1557
      %1559 = vmatmul.f32.gmra.mxu0 %v1529
      %v1560 = vpop.f32.mrf.mxu0
      %v1561 = vadd.f32 0.0, %v1560
      %1562 = vdwg.mxu0
      %v1563 = vmul.f32 %v1555, 0.35355338
      %v1564 = vmul.f32 %v1558, 0.35355338
      %v1565 = vmul.f32 %v1561, 0.35355338
      %v1566 = vadd.f32 %v1563, %v1115
      %v1567 = vadd.f32 %v1564, %v1116
      %v1568 = vadd.f32 %v1565, %v1117
      %v1569 = vsel %vm1302, %v1566, -inf
      %1570 = vmax.xlane.f32.xlu0 %v1569
      %v1571 = vpop.xlane.xlu0 %1570
      %v1572 = vsel %vm1302, %v1567, -inf
      %1573 = vmax.xlane.f32.xlu0 %v1572
      %v1574 = vpop.xlane.xlu0 %1573
      %v1575 = vsel %vm1302, %v1568, -inf
      %1576 = vmax.xlane.f32.xlu0 %v1575
      %v1577 = vpop.xlane.xlu0 %1576
      %v1578 = vsub.f32 %v1566, %v1571
      %v1579 = vsub.f32 %v1567, %v1574
      %v1580 = vsub.f32 %v1568, %v1577
      %v1581 = vmul.f32 %v1578, 1.442695
      %v1582 = vpow.pop %v1581
      %v1583 = vmul.f32 %v1579, 1.442695
      %v1584 = vpow.pop %v1583
      %v1585 = vmul.f32 %v1580, 1.442695
      %v1586 = vpow.pop %v1585
      %v1587 = vsel %vm1302, %v1582, 0.0
      %1588 = vadd.xlane.f32.xlu0 %v1587
      %v1589 = vpop.xlane.xlu0 %1588
      %v1590 = vsel %vm1302, %v1584, 0.0
      %1591 = vadd.xlane.f32.xlu0 %v1590
      %v1592 = vpop.xlane.xlu0 %1591
      %v1593 = vsel %vm1302, %v1586, 0.0
      %1594 = vadd.xlane.f32.xlu0 %v1593
      %v1595 = vpop.xlane.xlu0 %1594
      %v1596 = vrcp.pop %v1589
      %v1597 = vrcp.pop %v1592
      %v1598 = vrcp.pop %v1595
      %v1599 = vmul.f32 %v1582, %v1596
      %v1600 = vmul.f32 %v1584, %v1597
      %v1601 = vmul.f32 %v1586, %v1598
      %1602 = vrot.lane.b32.xlu0 %v1241, 48
      %v1603 = vpop.permute.xlu0 %1602
      %1604 = vrot.lane.b32.xlu0 %v1244, 48
      %v1605 = vpop.permute.xlu0 %1604
      %1606 = vrot.lane.b32.xlu0 %v1247, 48
      %v1607 = vpop.permute.xlu0 %1606
      %v1612 = vsel %vm1302, %v1599, 0
      %v1615 = vsel %vm1302, %v1600, 0
      %v1618 = vsel %vm1302, %v1601, 0
      %1620 = vmatpush.msra.mxu0 0.0
      %1621 = vmatpush.msra.mxu0 0.0
      %1622 = vmatpush.msra.mxu0 0.0
      %1623 = vmatpush.msra.mxu0 0.0
      %1624 = vmatpush.msra.mxu0 0.0
      %1625 = vmatpush.msra.mxu0 0.0
      %1626 = vmatpush.msra.mxu0 0.0
      %1627 = vmatpush.msra.mxu0 0.0
      %1628 = vmatpush.msra.mxu0 0.0
      %1629 = vmatpush.msra.mxu0 0.0
      %1630 = vmatpush.msra.mxu0 0.0
      %1631 = vmatpush.msra.mxu0 0.0
      %1632 = vmatpush.msra.mxu0 0.0
      %1633 = vmatpush.msra.mxu0 %v1607
      %1634 = vmatpush.msra.mxu0 %v1605
      %1635 = vmatpush.msra.mxu0 %v1603
      %1636 = vmatmul.f32.gmra.mxu0 %v1612
      %v1637 = vpop.f32.mrf.mxu0
      %v1638 = vadd.f32 0.0, %v1637
      %1639 = vmatmul.f32.gmra.mxu0 %v1615
      %v1640 = vpop.f32.mrf.mxu0
      %v1641 = vadd.f32 0.0, %v1640
      %1642 = vmatmul.f32.gmra.mxu0 %v1618
      %v1643 = vpop.f32.mrf.mxu0
      %v1644 = vadd.f32 0.0, %v1643
      %1645 = vdwg.mxu0
      %1646 = vrot.lane.b32.xlu0 %v1241, 104
      %v1647 = vpop.permute.xlu0 %1646
      %1648 = vrot.lane.b32.xlu0 %v1244, 104
      %v1649 = vpop.permute.xlu0 %1648
      %1650 = vrot.lane.b32.xlu0 %v1247, 104
      %v1651 = vpop.permute.xlu0 %1650
      %1652 = vrot.lane.b32.xlu0 %v1241, 72
      %v1653 = vpop.permute.xlu0 %1652
      %1654 = vrot.lane.b32.xlu0 %v1244, 72
      %v1655 = vpop.permute.xlu0 %1654
      %1656 = vrot.lane.b32.xlu0 %v1247, 72
      %v1657 = vpop.permute.xlu0 %1656
      %v1658 = vsel %vm709, %v1647, 0
      %v1660 = vsel %vm709, %v1649, 0
      %v1662 = vsel %vm709, %v1651, 0
      %v1664 = vsel %vm709, %v1653, 0
      %v1666 = vsel %vm709, %v1655, 0
      %v1668 = vsel %vm709, %v1657, 0
      %1670 = vmatpush.xpose.msra.mxu0 0.0
      %1671 = vmatpush.xpose.msra.mxu0 0.0
      %1672 = vmatpush.xpose.msra.mxu0 0.0
      %1673 = vmatpush.xpose.msra.mxu0 0.0
      %1674 = vmatpush.xpose.msra.mxu0 0.0
      %1675 = vmatpush.xpose.msra.mxu0 0.0
      %1676 = vmatpush.xpose.msra.mxu0 0.0
      %1677 = vmatpush.xpose.msra.mxu0 0.0
      %1678 = vmatpush.xpose.msra.mxu0 0.0
      %1679 = vmatpush.xpose.msra.mxu0 0.0
      %1680 = vmatpush.xpose.msra.mxu0 0.0
      %1681 = vmatpush.xpose.msra.mxu0 0.0
      %1682 = vmatpush.xpose.msra.mxu0 0.0
      %1683 = vmatpush.xpose.msra.mxu0 %v1668
      %1684 = vmatpush.xpose.msra.mxu0 %v1666
      %1685 = vmatpush.xpose.msra.mxu0 %v1664
      %1686 = vmatmul.f32.gmra.mxu0 %v1658
      %v1687 = vpop.f32.mrf.mxu0
      %v1688 = vadd.f32 0.0, %v1687
      %1689 = vmatmul.f32.gmra.mxu0 %v1660
      %v1690 = vpop.f32.mrf.mxu0
      %v1691 = vadd.f32 0.0, %v1690
      %1692 = vmatmul.f32.gmra.mxu0 %v1662
      %v1693 = vpop.f32.mrf.mxu0
      %v1694 = vadd.f32 0.0, %v1693
      %1695 = vdwg.mxu0
      %v1696 = vmul.f32 %v1688, 0.35355338
      %v1697 = vmul.f32 %v1691, 0.35355338
      %v1698 = vmul.f32 %v1694, 0.35355338
      %v1699 = vadd.f32 %v1696, %v1115
      %v1700 = vadd.f32 %v1697, %v1116
      %v1701 = vadd.f32 %v1698, %v1117
      %v1702 = vsel %vm1302, %v1699, -inf
      %1703 = vmax.xlane.f32.xlu0 %v1702
      %v1704 = vpop.xlane.xlu0 %1703
      %v1705 = vsel %vm1302, %v1700, -inf
      %1706 = vmax.xlane.f32.xlu0 %v1705
      %v1707 = vpop.xlane.xlu0 %1706
      %v1708 = vsel %vm1302, %v1701, -inf
      %1709 = vmax.xlane.f32.xlu0 %v1708
      %v1710 = vpop.xlane.xlu0 %1709
      %v1711 = vsub.f32 %v1699, %v1704
      %v1712 = vsub.f32 %v1700, %v1707
      %v1713 = vsub.f32 %v1701, %v1710
      %v1714 = vmul.f32 %v1711, 1.442695
      %v1715 = vpow.pop %v1714
      %v1716 = vmul.f32 %v1712, 1.442695
      %v1717 = vpow.pop %v1716
      %v1718 = vmul.f32 %v1713, 1.442695
      %v1719 = vpow.pop %v1718
      %v1720 = vsel %vm1302, %v1715, 0.0
      %1721 = vadd.xlane.f32.xlu0 %v1720
      %v1722 = vpop.xlane.xlu0 %1721
      %v1723 = vsel %vm1302, %v1717, 0.0
      %1724 = vadd.xlane.f32.xlu0 %v1723
      %v1725 = vpop.xlane.xlu0 %1724
      %v1726 = vsel %vm1302, %v1719, 0.0
      %1727 = vadd.xlane.f32.xlu0 %v1726
      %v1728 = vpop.xlane.xlu0 %1727
      %v1729 = vrcp.pop %v1722
      %v1730 = vrcp.pop %v1725
      %v1731 = vrcp.pop %v1728
      %v1732 = vmul.f32 %v1715, %v1729
      %v1733 = vmul.f32 %v1717, %v1730
      %v1734 = vmul.f32 %v1719, %v1731
      %1735 = vrot.lane.b32.xlu0 %v1241, 40
      %v1736 = vpop.permute.xlu0 %1735
      %1737 = vrot.lane.b32.xlu0 %v1244, 40
      %v1738 = vpop.permute.xlu0 %1737
      %1739 = vrot.lane.b32.xlu0 %v1247, 40
      %v1740 = vpop.permute.xlu0 %1739
      %v1745 = vsel %vm1302, %v1732, 0
      %v1748 = vsel %vm1302, %v1733, 0
      %v1751 = vsel %vm1302, %v1734, 0
      %1753 = vmatpush.msra.mxu0 0.0
      %1754 = vmatpush.msra.mxu0 0.0
      %1755 = vmatpush.msra.mxu0 0.0
      %1756 = vmatpush.msra.mxu0 0.0
      %1757 = vmatpush.msra.mxu0 0.0
      %1758 = vmatpush.msra.mxu0 0.0
      %1759 = vmatpush.msra.mxu0 0.0
      %1760 = vmatpush.msra.mxu0 0.0
      %1761 = vmatpush.msra.mxu0 0.0
      %1762 = vmatpush.msra.mxu0 0.0
      %1763 = vmatpush.msra.mxu0 0.0
      %1764 = vmatpush.msra.mxu0 0.0
      %1765 = vmatpush.msra.mxu0 0.0
      %1766 = vmatpush.msra.mxu0 %v1740
      %1767 = vmatpush.msra.mxu0 %v1738
      %1768 = vmatpush.msra.mxu0 %v1736
      %1769 = vmatmul.f32.gmra.mxu0 %v1745
      %v1770 = vpop.f32.mrf.mxu0
      %v1771 = vadd.f32 0.0, %v1770
      %1772 = vmatmul.f32.gmra.mxu0 %v1748
      %v1773 = vpop.f32.mrf.mxu0
      %v1774 = vadd.f32 0.0, %v1773
      %1775 = vmatmul.f32.gmra.mxu0 %v1751
      %v1776 = vpop.f32.mrf.mxu0
      %v1777 = vadd.f32 0.0, %v1776
      %1778 = vdwg.mxu0
      %1782 = vrot.lane.b32.xlu0 %v1505, 8
      %v1783 = vpop.permute.xlu0 %1782
      %1784 = vrot.lane.b32.xlu0 %v1508, 8
      %v1785 = vpop.permute.xlu0 %1784
      %1786 = vrot.lane.b32.xlu0 %v1511, 8
      %v1787 = vpop.permute.xlu0 %1786
      %1794 = vrot.lane.b32.xlu0 %v1638, 16
      %v1795 = vpop.permute.xlu0 %1794
      %1796 = vrot.lane.b32.xlu0 %v1641, 16
      %v1797 = vpop.permute.xlu0 %1796
      %1798 = vrot.lane.b32.xlu0 %v1644, 16
      %v1799 = vpop.permute.xlu0 %1798
      %1806 = vrot.lane.b32.xlu0 %v1771, 24
      %v1807 = vpop.permute.xlu0 %1806
      %1808 = vrot.lane.b32.xlu0 %v1774, 24
      %v1809 = vpop.permute.xlu0 %1808
      %1810 = vrot.lane.b32.xlu0 %v1777, 24
      %v1811 = vpop.permute.xlu0 %1810
      %v1815 = vsel %vm709, %v1372, %v1783
      %v1816 = vsel %vm709, %v1375, %v1785
      %v1817 = vsel %vm709, %v1378, %v1787
      %vm1818 = vcmask 130048
      %v1819 = vsel %vm1818, %v1815, %v1795
      %v1820 = vsel %vm1818, %v1816, %v1797
      %v1821 = vsel %vm1818, %v1817, %v1799
      %v1822 = vsel %vm1302, %v1819, %v1807
      %v1823 = vsel %vm1302, %v1820, %v1809
      %v1824 = vsel %vm1302, %v1821, %v1811
      %v1825 = vld [vmem:[%s13] sm:$0xff]
      %v1826 = vld [vmem:[%s13 + $0x8] sm:$0xff]
      %v1827 = vld [vmem:[%s13 + $0x10] sm:$0xff]
      %v1828 = vld [vmem:[%s13 + $0x18] sm:$0xff]
      %v1830 = vsel %vm1124, %v1822, 0
      %v1833 = vsel %vm1124, %v1823, 0
      %v1836 = vsel %vm1124, %v1824, 0
      %1838 = vmatpush.msra.mxu0 0.0
      %1839 = vmatpush.msra.mxu0 0.0
      %1840 = vmatpush.msra.mxu0 0.0
      %1841 = vmatpush.msra.mxu0 0.0
      %1842 = vmatpush.msra.mxu0 0.0
      %1843 = vmatpush.msra.mxu0 0.0
      %1844 = vmatpush.msra.mxu0 0.0
      %1845 = vmatpush.msra.mxu0 0.0
      %1846 = vmatpush.msra.mxu0 0.0
      %1847 = vmatpush.msra.mxu0 0.0
      %1848 = vmatpush.msra.mxu0 0.0
      %1849 = vmatpush.msra.mxu0 0.0
      %1850 = vmatpush.msra.mxu0 %v1828
      %1851 = vmatpush.msra.mxu0 %v1827
      %1852 = vmatpush.msra.mxu0 %v1826
      %1853 = vmatpush.msra.mxu0 %v1825
      %1854 = vmatmul.f32.gmra.mxu0 %v1830
      %v1855 = vpop.f32.mrf.mxu0
      %v1856 = vadd.f32 0.0, %v1855
      %1857 = vmatmul.f32.gmra.mxu0 %v1833
      %v1858 = vpop.f32.mrf.mxu0
      %v1859 = vadd.f32 0.0, %v1858
      %1860 = vmatmul.f32.gmra.mxu0 %v1836
      %v1861 = vpop.f32.mrf.mxu0
      %v1862 = vadd.f32 0.0, %v1861
      %1863 = vdwg.mxu0
      %v1864 = vadd.f32 %v1112, %v1856
      %v1865 = vadd.f32 %v1113, %v1859
      %v1866 = vadd.f32 %v1114, %v1862
      %v1867 = vperm.slane %v1122, 0
      %v1868 = vadd.f32 %v1864, %v1867
      %v1869 = vadd.f32 %v1865, %v1867
      %v1870 = vadd.f32 %v1866, %v1867
      %v1871 = vsel %vm1124, %v1868, 0.0
      %1872 = vadd.xlane.f32.xlu0 %v1871
      %v1873 = vpop.xlane.xlu0 %1872
      %v1874 = vsel %vm1124, %v1869, 0.0
      %1875 = vadd.xlane.f32.xlu0 %v1874
      %v1876 = vpop.xlane.xlu0 %1875
      %v1877 = vsel %vm1124, %v1870, 0.0
      %1878 = vadd.xlane.f32.xlu0 %v1877
      %v1879 = vpop.xlane.xlu0 %1878
      %v1880 = vmul.f32 %v1873, %v1140
      %v1881 = vmul.f32 %v1876, %v1140
      %v1882 = vmul.f32 %v1879, %v1140
      %v1883 = vsub.f32 %v1868, %v1880
      %v1884 = vsub.f32 %v1869, %v1881
      %v1885 = vsub.f32 %v1870, %v1882
      %v1886 = vmul.f32 %v1883, %v1883
      %v1887 = vmul.f32 %v1884, %v1884
      %v1888 = vmul.f32 %v1885, %v1885
      %v1889 = vsel %vm1124, %v1886, 0.0
      %1890 = vadd.xlane.f32.xlu0 %v1889
      %v1891 = vpop.xlane.xlu0 %1890
      %v1892 = vsel %vm1124, %v1887, 0.0
      %1893 = vadd.xlane.f32.xlu0 %v1892
      %v1894 = vpop.xlane.xlu0 %1893
      %v1895 = vsel %vm1124, %v1888, 0.0
      %1896 = vadd.xlane.f32.xlu0 %v1895
      %v1897 = vpop.xlane.xlu0 %1896
      %v1898 = vmul.f32 %v1891, %v1140
      %v1899 = vmul.f32 %v1894, %v1140
      %v1900 = vmul.f32 %v1897, %v1140
      %v1901 = vadd.f32 %v1898, 1e-05
      %v1902 = vadd.f32 %v1899, 1e-05
      %v1903 = vadd.f32 %v1900, 1e-05
      %v1904 = vrsqrt.pop %v1901
      %v1905 = vmul.f32 %v1904, %v1901
      %v1906 = vmul.f32 %v1905, %v1904
      %v1907 = vmul.f32 0.5, %v1906
      %v1908 = vsub.f32 1.5, %v1907
      %v1909 = vmul.f32 %v1904, %v1908
      %vm1910 = vweird.f32 %v1901
      %vm1911 = vweird.f32 %v1904
      %vm1912 = vmor %vm1910, %vm1911
      %v1913 = vsel %vm1912, %v1904, %v1909
      %v1914 = vrsqrt.pop %v1902
      %v1915 = vmul.f32 %v1914, %v1902
      %v1916 = vmul.f32 %v1915, %v1914
      %v1917 = vmul.f32 0.5, %v1916
      %v1918 = vsub.f32 1.5, %v1917
      %v1919 = vmul.f32 %v1914, %v1918
      %vm1920 = vweird.f32 %v1902
      %vm1921 = vweird.f32 %v1914
      %vm1922 = vmor %vm1920, %vm1921
      %v1923 = vsel %vm1922, %v1914, %v1919
      %v1924 = vrsqrt.pop %v1903
      %v1925 = vmul.f32 %v1924, %v1903
      %v1926 = vmul.f32 %v1925, %v1924
      %v1927 = vmul.f32 0.5, %v1926
      %v1928 = vsub.f32 1.5, %v1927
      %v1929 = vmul.f32 %v1924, %v1928
      %vm1930 = vweird.f32 %v1903
      %vm1931 = vweird.f32 %v1924
      %vm1932 = vmor %vm1930, %vm1931
      %v1933 = vsel %vm1932, %v1924, %v1929
      %v1934 = vmul.f32 %v1883, %v1913
      %v1935 = vmul.f32 %v1884, %v1923
      %v1936 = vmul.f32 %v1885, %v1933
      %v1937 = vperm.slane %v1120, 0
      %v1938 = vmul.f32 %v1934, %v1937
      %v1939 = vmul.f32 %v1935, %v1937
      %v1940 = vmul.f32 %v1936, %v1937
      %v1941 = vperm.slane %v1121, 0
      %v1942 = vadd.f32 %v1938, %v1941
      %v1943 = vadd.f32 %v1939, %v1941
      %v1944 = vadd.f32 %v1940, %v1941
      %v1945 = vld [vmem:[%s11 + $0x8] sm:$0xff]
      %v1946 = vld [vmem:[%s11 + $0x18] sm:$0xff]
      %v1947 = vld [vmem:[%s11 + $0x28] sm:$0xff]
      %v1948 = vld [vmem:[%s11 + $0x38] sm:$0xff]
      %v1949 = vld [vmem:[%s12 + $0x1] sm:$0x1]
      %v1951 = vperm.slane %v1949, 0
      %v1954 = vsel %vm1124, %v1942, 0
      %v1957 = vsel %vm1124, %v1943, 0
      %v1960 = vsel %vm1124, %v1944, 0
      %1962 = vmatpush.msra.mxu0 0.0
      %1963 = vmatpush.msra.mxu0 0.0
      %1964 = vmatpush.msra.mxu0 0.0
      %1965 = vmatpush.msra.mxu0 0.0
      %1966 = vmatpush.msra.mxu0 0.0
      %1967 = vmatpush.msra.mxu0 0.0
      %1968 = vmatpush.msra.mxu0 0.0
      %1969 = vmatpush.msra.mxu0 0.0
      %1970 = vmatpush.msra.mxu0 0.0
      %1971 = vmatpush.msra.mxu0 0.0
      %1972 = vmatpush.msra.mxu0 0.0
      %1973 = vmatpush.msra.mxu0 0.0
      %1974 = vmatpush.msra.mxu0 %v1948
      %1975 = vmatpush.msra.mxu0 %v1947
      %1976 = vmatpush.msra.mxu0 %v1946
      %1977 = vmatpush.msra.mxu0 %v1945
      %1978 = vmatmul.f32.gmra.mxu0 %v1954
      %v1979 = vpop.f32.mrf.mxu0
      %v1980 = vadd.f32 %v1951, %v1979
      %1981 = vmatmul.f32.gmra.mxu0 %v1957
      %v1982 = vpop.f32.mrf.mxu0
      %v1983 = vadd.f32 %v1951, %v1982
      %1984 = vmatmul.f32.gmra.mxu0 %v1960
      %v1985 = vpop.f32.mrf.mxu0
      %v1986 = vadd.f32 %v1951, %v1985
      %1987 = vdwg.mxu0
      %v1988 = vmul.f32 %v1980, 0.5
      %v1989 = vmul.f32 %v1983, 0.5
      %v1990 = vmul.f32 %v1986, 0.5
      %v1991 = vmul.f32 %v1980, 0.70710677
      %v1992 = vmul.f32 %v1983, 0.70710677
      %v1993 = vmul.f32 %v1986, 0.70710677
      %v1994 = vmul.f32 %v1991, %v1991
      %v1995 = vmin.f32 16.0, %v1994
      %v1996 = vmul.f32 %v1995, 2.1237322e-06
      %v1997 = vadd.f32 %v1996, 0.00028619796
      %v1998 = vmul.f32 %v1995, %v1997
      %v1999 = vadd.f32 %v1998, 0.0036580483
      %v2000 = vmul.f32 %v1995, %v1999
      %v2001 = vadd.f32 %v2000, 0.05243302
      %v2002 = vmul.f32 %v1995, %v2001
      %v2003 = vadd.f32 %v2002, 0.18741608
      %v2004 = vmul.f32 %v1995, %v2003
      %v2005 = vadd.f32 %v2004, 1.1283791
      %v2006 = vmul.f32 %v1991, %v2005
      %v2007 = vmul.f32 %v1995, 3.8918573e-05
      %v2008 = vadd.f32 %v2007, 0.001143296
      %v2009 = vmul.f32 %v1995, %v2008
      %v2010 = vadd.f32 %v2009, 0.014752088
      %v2011 = vmul.f32 %v1995, %v2010
      %v2012 = vadd.f32 %v2011, 0.112945676
      %v2013 = vmul.f32 %v1995, %v2012
      %v2014 = vadd.f32 %v2013, 0.4994258
      %v2015 = vmul.f32 %v1995, %v2014
      %v2016 = vadd.f32 %v2015, 1.0
      %v2017 = vrcp.pop %v2016
      %v2018 = vmul.f32 %v2016, %v2017
      %v2019 = vsub.f32 1.0, %v2018
      %v2020 = vmul.f32 %v2017, %v2019
      %v2021 = vadd.f32 %v2017, %v2020
      %vm2022 = vweird.f32 %v2016
      %vm2023 = vweird.f32 %v2017
      %vm2024 = vmor %vm2022, %vm2023
      %v2025 = vsel %vm2024, %v2017, %v2021
      %v2026 = vand.u32 2147483647, %v2016
      %vm2027 = vcmp.eq.f32.partialorder %v2026, 8.507059e+37
      %v2028 = vand.u32 %v2016, 2147483648
      %v2029 = vor.u32 1.1754944e-38, %v2028
      %v2030 = vsel %vm2027, %v2029, %v2025
      %v2031 = vmul.f32 %v2006, %v2030
      %v2032 = vmin.f32 %v2031, 1.0
      %v2033 = vmax.f32 %v2032, -1.0
      %v2034 = vmul.f32 %v1992, %v1992
      %v2035 = vmin.f32 16.0, %v2034
      %v2036 = vmul.f32 %v2035, 2.1237322e-06
      %v2037 = vadd.f32 %v2036, 0.00028619796
      %v2038 = vmul.f32 %v2035, %v2037
      %v2039 = vadd.f32 %v2038, 0.0036580483
      %v2040 = vmul.f32 %v2035, %v2039
      %v2041 = vadd.f32 %v2040, 0.05243302
      %v2042 = vmul.f32 %v2035, %v2041
      %v2043 = vadd.f32 %v2042, 0.18741608
      %v2044 = vmul.f32 %v2035, %v2043
      %v2045 = vadd.f32 %v2044, 1.1283791
      %v2046 = vmul.f32 %v1992, %v2045
      %v2047 = vmul.f32 %v2035, 3.8918573e-05
      %v2048 = vadd.f32 %v2047, 0.001143296
      %v2049 = vmul.f32 %v2035, %v2048
      %v2050 = vadd.f32 %v2049, 0.014752088
      %v2051 = vmul.f32 %v2035, %v2050
      %v2052 = vadd.f32 %v2051, 0.112945676
      %v2053 = vmul.f32 %v2035, %v2052
      %v2054 = vadd.f32 %v2053, 0.4994258
      %v2055 = vmul.f32 %v2035, %v2054
      %v2056 = vadd.f32 %v2055, 1.0
      %v2057 = vrcp.pop %v2056
      %v2058 = vmul.f32 %v2056, %v2057
      %v2059 = vsub.f32 1.0, %v2058
      %v2060 = vmul.f32 %v2057, %v2059
      %v2061 = vadd.f32 %v2057, %v2060
      %vm2062 = vweird.f32 %v2056
      %vm2063 = vweird.f32 %v2057
      %vm2064 = vmor %vm2062, %vm2063
      %v2065 = vsel %vm2064, %v2057, %v2061
      %v2066 = vand.u32 2147483647, %v2056
      %vm2067 = vcmp.eq.f32.partialorder %v2066, 8.507059e+37
      %v2068 = vand.u32 %v2056, 2147483648
      %v2069 = vor.u32 1.1754944e-38, %v2068
      %v2070 = vsel %vm2067, %v2069, %v2065
      %v2071 = vmul.f32 %v2046, %v2070
      %v2072 = vmin.f32 %v2071, 1.0
      %v2073 = vmax.f32 %v2072, -1.0
      %v2074 = vmul.f32 %v1993, %v1993
      %v2075 = vmin.f32 16.0, %v2074
      %v2076 = vmul.f32 %v2075, 2.1237322e-06
      %v2077 = vadd.f32 %v2076, 0.00028619796
      %v2078 = vmul.f32 %v2075, %v2077
      %v2079 = vadd.f32 %v2078, 0.0036580483
      %v2080 = vmul.f32 %v2075, %v2079
      %v2081 = vadd.f32 %v2080, 0.05243302
      %v2082 = vmul.f32 %v2075, %v2081
      %v2083 = vadd.f32 %v2082, 0.18741608
      %v2084 = vmul.f32 %v2075, %v2083
      %v2085 = vadd.f32 %v2084, 1.1283791
      %v2086 = vmul.f32 %v1993, %v2085
      %v2087 = vmul.f32 %v2075, 3.8918573e-05
      %v2088 = vadd.f32 %v2087, 0.001143296
      %v2089 = vmul.f32 %v2075, %v2088
      %v2090 = vadd.f32 %v2089, 0.014752088
      %v2091 = vmul.f32 %v2075, %v2090
      %v2092 = vadd.f32 %v2091, 0.112945676
      %v2093 = vmul.f32 %v2075, %v2092
      %v2094 = vadd.f32 %v2093, 0.4994258
      %v2095 = vmul.f32 %v2075, %v2094
      %v2096 = vadd.f32 %v2095, 1.0
      %v2097 = vrcp.pop %v2096
      %v2098 = vmul.f32 %v2096, %v2097
      %v2099 = vsub.f32 1.0, %v2098
      %v2100 = vmul.f32 %v2097, %v2099
      %v2101 = vadd.f32 %v2097, %v2100
      %vm2102 = vweird.f32 %v2096
      %vm2103 = vweird.f32 %v2097
      %vm2104 = vmor %vm2102, %vm2103
      %v2105 = vsel %vm2104, %v2097, %v2101
      %v2106 = vand.u32 2147483647, %v2096
      %vm2107 = vcmp.eq.f32.partialorder %v2106, 8.507059e+37
      %v2108 = vand.u32 %v2096, 2147483648
      %v2109 = vor.u32 1.1754944e-38, %v2108
      %v2110 = vsel %vm2107, %v2109, %v2105
      %v2111 = vmul.f32 %v2086, %v2110
      %v2112 = vmin.f32 %v2111, 1.0
      %v2113 = vmax.f32 %v2112, -1.0
      %v2114 = vadd.f32 %v2033, 1.0
      %v2115 = vadd.f32 %v2073, 1.0
      %v2116 = vadd.f32 %v2113, 1.0
      %v2117 = vmul.f32 %v1988, %v2114
      %v2118 = vmul.f32 %v1989, %v2115
      %v2119 = vmul.f32 %v1990, %v2116
      %v2120 = vld [vmem:[%s13 + $0x20] sm:$0xff]
      %v2121 = vld [vmem:[%s13 + $0x28] sm:$0xff]
      %v2122 = vld [vmem:[%s13 + $0x30] sm:$0xff]
      %v2123 = vld [vmem:[%s13 + $0x38] sm:$0xff]
      %v2124 = vld [vmem:[%s13 + $0x40] sm:$0xff]
      %v2125 = vld [vmem:[%s13 + $0x48] sm:$0xff]
      %v2126 = vld [vmem:[%s13 + $0x50] sm:$0xff]
      %v2127 = vld [vmem:[%s13 + $0x58] sm:$0xff]
      %v2128 = vld [vmem:[%s13 + $0x60] sm:$0xff]
      %v2129 = vld [vmem:[%s13 + $0x68] sm:$0xff]
      %v2130 = vld [vmem:[%s13 + $0x70] sm:$0xff]
      %v2131 = vld [vmem:[%s13 + $0x78] sm:$0xff]
      %v2132 = vld [vmem:[%s13 + $0x80] sm:$0xff]
      %v2133 = vld [vmem:[%s13 + $0x88] sm:$0xff]
      %v2134 = vld [vmem:[%s13 + $0x90] sm:$0xff]
      %v2135 = vld [vmem:[%s13 + $0x98] sm:$0xff]
      %2136 = vmatpush.msra.mxu0 %v2135
      %2137 = vmatpush.msra.mxu0 %v2134
      %2138 = vmatpush.msra.mxu0 %v2133
      %2139 = vmatpush.msra.mxu0 %v2132
      %2140 = vmatpush.msra.mxu0 %v2131
      %2141 = vmatpush.msra.mxu0 %v2130
      %2142 = vmatpush.msra.mxu0 %v2129
      %2143 = vmatpush.msra.mxu0 %v2128
      %2144 = vmatpush.msra.mxu0 %v2127
      %2145 = vmatpush.msra.mxu0 %v2126
      %2146 = vmatpush.msra.mxu0 %v2125
      %2147 = vmatpush.msra.mxu0 %v2124
      %2148 = vmatpush.msra.mxu0 %v2123
      %2149 = vmatpush.msra.mxu0 %v2122
      %2150 = vmatpush.msra.mxu0 %v2121
      %2151 = vmatpush.msra.mxu0 %v2120
      %2152 = vmatmul.f32.gmra.mxu0 %v2117
      %v2153 = vpop.f32.mrf.mxu0
      %v2154 = vadd.f32 0.0, %v2153
      %2155 = vmatmul.f32.gmra.mxu0 %v2118
      %v2156 = vpop.f32.mrf.mxu0
      %v2157 = vadd.f32 0.0, %v2156
      %2158 = vmatmul.f32.gmra.mxu0 %v2119
      %v2159 = vpop.f32.mrf.mxu0
      %v2160 = vadd.f32 0.0, %v2159
      %2161 = vdwg.mxu0
      %v2162 = vadd.f32 %v1868, %v2154
      %v2163 = vadd.f32 %v1869, %v2157
      %v2164 = vadd.f32 %v1870, %v2160
      %v2165 = vperm.slane %v1123, 0
      %v2166 = vadd.f32 %v2162, %v2165
      %v2167 = vadd.f32 %v2163, %v2165
      %v2168 = vadd.f32 %v2164, %v2165
      %s2169 = scalar_lea.vmem %s14, 8
      %v2170 = vld [vmem:[%s2169] sm:$0x1]
      %v2171 = vld [vmem:[%s2169 + $0x1] sm:$0x1]
      %v2172 = vld [vmem:[%s2169 + $0x2] sm:$0x1]
      %v2173 = vld [vmem:[%s2169 + $0x3] sm:$0x1]
      %v2174 = vld [vmem:[%s2169 + $0x4] sm:$0x1]
      %v2175 = vld [vmem:[%s2169 + $0x5] sm:$0x1]
      %v2176 = vsel %vm1124, %v2166, 0.0
      %2177 = vadd.xlane.f32.xlu0 %v2176
      %v2178 = vpop.xlane.xlu0 %2177
      %v2179 = vsel %vm1124, %v2167, 0.0
      %2180 = vadd.xlane.f32.xlu0 %v2179
      %v2181 = vpop.xlane.xlu0 %2180
      %v2182 = vsel %vm1124, %v2168, 0.0
      %2183 = vadd.xlane.f32.xlu0 %v2182
      %v2184 = vpop.xlane.xlu0 %2183
      %v2185 = vmul.f32 %v2178, %v1140
      %v2186 = vmul.f32 %v2181, %v1140
      %v2187 = vmul.f32 %v2184, %v1140
      %v2188 = vsub.f32 %v2166, %v2185
      %v2189 = vsub.f32 %v2167, %v2186
      %v2190 = vsub.f32 %v2168, %v2187
      %v2191 = vmul.f32 %v2188, %v2188
      %v2192 = vmul.f32 %v2189, %v2189
      %v2193 = vmul.f32 %v2190, %v2190
      %v2194 = vsel %vm1124, %v2191, 0.0
      %2195 = vadd.xlane.f32.xlu0 %v2194
      %v2196 = vpop.xlane.xlu0 %2195
      %v2197 = vsel %vm1124, %v2192, 0.0
      %2198 = vadd.xlane.f32.xlu0 %v2197
      %v2199 = vpop.xlane.xlu0 %2198
      %v2200 = vsel %vm1124, %v2193, 0.0
      %2201 = vadd.xlane.f32.xlu0 %v2200
      %v2202 = vpop.xlane.xlu0 %2201
      %v2203 = vmul.f32 %v2196, %v1140
      %v2204 = vmul.f32 %v2199, %v1140
      %v2205 = vmul.f32 %v2202, %v1140
      %v2206 = vadd.f32 %v2203, 1e-05
      %v2207 = vadd.f32 %v2204, 1e-05
      %v2208 = vadd.f32 %v2205, 1e-05
      %v2209 = vrsqrt.pop %v2206
      %v2210 = vmul.f32 %v2209, %v2206
      %v2211 = vmul.f32 %v2210, %v2209
      %v2212 = vmul.f32 0.5, %v2211
      %v2213 = vsub.f32 1.5, %v2212
      %v2214 = vmul.f32 %v2209, %v2213
      %vm2215 = vweird.f32 %v2206
      %vm2216 = vweird.f32 %v2209
      %vm2217 = vmor %vm2215, %vm2216
      %v2218 = vsel %vm2217, %v2209, %v2214
      %v2219 = vrsqrt.pop %v2207
      %v2220 = vmul.f32 %v2219, %v2207
      %v2221 = vmul.f32 %v2220, %v2219
      %v2222 = vmul.f32 0.5, %v2221
      %v2223 = vsub.f32 1.5, %v2222
      %v2224 = vmul.f32 %v2219, %v2223
      %vm2225 = vweird.f32 %v2207
      %vm2226 = vweird.f32 %v2219
      %vm2227 = vmor %vm2225, %vm2226
      %v2228 = vsel %vm2227, %v2219, %v2224
      %v2229 = vrsqrt.pop %v2208
      %v2230 = vmul.f32 %v2229, %v2208
      %v2231 = vmul.f32 %v2230, %v2229
      %v2232 = vmul.f32 0.5, %v2231
      %v2233 = vsub.f32 1.5, %v2232
      %v2234 = vmul.f32 %v2229, %v2233
      %vm2235 = vweird.f32 %v2208
      %vm2236 = vweird.f32 %v2229
      %vm2237 = vmor %vm2235, %vm2236
      %v2238 = vsel %vm2237, %v2229, %v2234
      %v2239 = vmul.f32 %v2188, %v2218
      %v2240 = vmul.f32 %v2189, %v2228
      %v2241 = vmul.f32 %v2190, %v2238
      %v2242 = vperm.slane %v2170, 0
      %v2243 = vmul.f32 %v2239, %v2242
      %v2244 = vmul.f32 %v2240, %v2242
      %v2245 = vmul.f32 %v2241, %v2242
      %v2246 = vperm.slane %v2171, 0
      %v2247 = vadd.f32 %v2243, %v2246
      %v2248 = vadd.f32 %v2244, %v2246
      %v2249 = vadd.f32 %v2245, %v2246
      %s2250 = scalar_lea.vmem %s11, 64
      %v2251 = vld [vmem:[%s2250] sm:$0xff]
      %v2252 = vld [vmem:[%s2250 + $0x10] sm:$0xff]
      %v2253 = vld [vmem:[%s2250 + $0x20] sm:$0xff]
      %v2254 = vld [vmem:[%s2250 + $0x30] sm:$0xff]
      %s2255 = scalar_lea.vmem %s12, 2
      %v2256 = vld [vmem:[%s2255] sm:$0x1]
      %v2258 = vperm.slane %v2256, 0
      %v2261 = vsel %vm1124, %v2247, 0
      %v2264 = vsel %vm1124, %v2248, 0
      %v2267 = vsel %vm1124, %v2249, 0
      %2269 = vmatpush.msra.mxu0 0.0
      %2270 = vmatpush.msra.mxu0 0.0
      %2271 = vmatpush.msra.mxu0 0.0
      %2272 = vmatpush.msra.mxu0 0.0
      %2273 = vmatpush.msra.mxu0 0.0
      %2274 = vmatpush.msra.mxu0 0.0
      %2275 = vmatpush.msra.mxu0 0.0
      %2276 = vmatpush.msra.mxu0 0.0
      %2277 = vmatpush.msra.mxu0 0.0
      %2278 = vmatpush.msra.mxu0 0.0
      %2279 = vmatpush.msra.mxu0 0.0
      %2280 = vmatpush.msra.mxu0 0.0
      %2281 = vmatpush.msra.mxu0 %v2254
      %2282 = vmatpush.msra.mxu0 %v2253
      %2283 = vmatpush.msra.mxu0 %v2252
      %2284 = vmatpush.msra.mxu0 %v2251
      %2285 = vmatmul.f32.gmra.mxu0 %v2261
      %v2286 = vpop.f32.mrf.mxu0
      %v2287 = vadd.f32 %v2258, %v2286
      %2288 = vmatmul.f32.gmra.mxu0 %v2264
      %v2289 = vpop.f32.mrf.mxu0
      %v2290 = vadd.f32 %v2258, %v2289
      %2291 = vmatmul.f32.gmra.mxu0 %v2267
      %v2292 = vpop.f32.mrf.mxu0
      %v2293 = vadd.f32 %v2258, %v2292
      %2294 = vdwg.mxu0
      %2298 = vrot.lane.b32.xlu0 %v2287, 96
      %v2299 = vpop.permute.xlu0 %2298
      %2300 = vrot.lane.b32.xlu0 %v2290, 96
      %v2301 = vpop.permute.xlu0 %2300
      %2302 = vrot.lane.b32.xlu0 %v2293, 96
      %v2303 = vpop.permute.xlu0 %2302
      %v2304 = vsel %vm709, %v2287, 0
      %v2306 = vsel %vm709, %v2290, 0
      %v2308 = vsel %vm709, %v2293, 0
      %v2310 = vsel %vm709, %v2299, 0
      %v2312 = vsel %vm709, %v2301, 0
      %v2314 = vsel %vm709, %v2303, 0
      %2316 = vmatpush.xpose.msra.mxu0 0.0
      %2317 = vmatpush.xpose.msra.mxu0 0.0
      %2318 = vmatpush.xpose.msra.mxu0 0.0
      %2319 = vmatpush.xpose.msra.mxu0 0.0
      %2320 = vmatpush.xpose.msra.mxu0 0.0
      %2321 = vmatpush.xpose.msra.mxu0 0.0
      %2322 = vmatpush.xpose.msra.mxu0 0.0
      %2323 = vmatpush.xpose.msra.mxu0 0.0
      %2324 = vmatpush.xpose.msra.mxu0 0.0
      %2325 = vmatpush.xpose.msra.mxu0 0.0
      %2326 = vmatpush.xpose.msra.mxu0 0.0
      %2327 = vmatpush.xpose.msra.mxu0 0.0
      %2328 = vmatpush.xpose.msra.mxu0 0.0
      %2329 = vmatpush.xpose.msra.mxu0 %v2314
      %2330 = vmatpush.xpose.msra.mxu0 %v2312
      %2331 = vmatpush.xpose.msra.mxu0 %v2310
      %2332 = vmatmul.f32.gmra.mxu0 %v2304
      %v2333 = vpop.f32.mrf.mxu0
      %v2334 = vadd.f32 0.0, %v2333
      %2335 = vmatmul.f32.gmra.mxu0 %v2306
      %v2336 = vpop.f32.mrf.mxu0
      %v2337 = vadd.f32 0.0, %v2336
      %2338 = vmatmul.f32.gmra.mxu0 %v2308
      %v2339 = vpop.f32.mrf.mxu0
      %v2340 = vadd.f32 0.0, %v2339
      %2341 = vdwg.mxu0
      %v2342 = vmul.f32 %v2334, 0.35355338
      %v2343 = vmul.f32 %v2337, 0.35355338
      %v2344 = vmul.f32 %v2340, 0.35355338
      %v2345 = vadd.f32 %v2342, %v1115
      %v2346 = vadd.f32 %v2343, %v1116
      %v2347 = vadd.f32 %v2344, %v1117
      %v2348 = vsel %vm1302, %v2345, -inf
      %2349 = vmax.xlane.f32.xlu0 %v2348
      %v2350 = vpop.xlane.xlu0 %2349
      %v2351 = vsel %vm1302, %v2346, -inf
      %2352 = vmax.xlane.f32.xlu0 %v2351
      %v2353 = vpop.xlane.xlu0 %2352
      %v2354 = vsel %vm1302, %v2347, -inf
      %2355 = vmax.xlane.f32.xlu0 %v2354
      %v2356 = vpop.xlane.xlu0 %2355
      %v2357 = vsub.f32 %v2345, %v2350
      %v2358 = vsub.f32 %v2346, %v2353
      %v2359 = vsub.f32 %v2347, %v2356
      %v2360 = vmul.f32 %v2357, 1.442695
      %v2361 = vpow.pop %v2360
      %v2362 = vmul.f32 %v2358, 1.442695
      %v2363 = vpow.pop %v2362
      %v2364 = vmul.f32 %v2359, 1.442695
      %v2365 = vpow.pop %v2364
      %v2366 = vsel %vm1302, %v2361, 0.0
      %2367 = vadd.xlane.f32.xlu0 %v2366
      %v2368 = vpop.xlane.xlu0 %2367
      %v2369 = vsel %vm1302, %v2363, 0.0
      %2370 = vadd.xlane.f32.xlu0 %v2369
      %v2371 = vpop.xlane.xlu0 %2370
      %v2372 = vsel %vm1302, %v2365, 0.0
      %2373 = vadd.xlane.f32.xlu0 %v2372
      %v2374 = vpop.xlane.xlu0 %2373
      %v2375 = vrcp.pop %v2368
      %v2376 = vrcp.pop %v2371
      %v2377 = vrcp.pop %v2374
      %v2378 = vmul.f32 %v2361, %v2375
      %v2379 = vmul.f32 %v2363, %v2376
      %v2380 = vmul.f32 %v2365, %v2377
      %2381 = vrot.lane.b32.xlu0 %v2287, 64
      %v2382 = vpop.permute.xlu0 %2381
      %2383 = vrot.lane.b32.xlu0 %v2290, 64
      %v2384 = vpop.permute.xlu0 %2383
      %2385 = vrot.lane.b32.xlu0 %v2293, 64
      %v2386 = vpop.permute.xlu0 %2385
      %v2391 = vsel %vm1302, %v2378, 0
      %v2394 = vsel %vm1302, %v2379, 0
      %v2397 = vsel %vm1302, %v2380, 0
      %2399 = vmatpush.msra.mxu0 0.0
      %2400 = vmatpush.msra.mxu0 0.0
      %2401 = vmatpush.msra.mxu0 0.0
      %2402 = vmatpush.msra.mxu0 0.0
      %2403 = vmatpush.msra.mxu0 0.0
      %2404 = vmatpush.msra.mxu0 0.0
      %2405 = vmatpush.msra.mxu0 0.0
      %2406 = vmatpush.msra.mxu0 0.0
      %2407 = vmatpush.msra.mxu0 0.0
      %2408 = vmatpush.msra.mxu0 0.0
      %2409 = vmatpush.msra.mxu0 0.0
      %2410 = vmatpush.msra.mxu0 0.0
      %2411 = vmatpush.msra.mxu0 0.0
      %2412 = vmatpush.msra.mxu0 %v2386
      %2413 = vmatpush.msra.mxu0 %v2384
      %2414 = vmatpush.msra.mxu0 %v2382
      %2415 = vmatmul.f32.gmra.mxu0 %v2391
      %v2416 = vpop.f32.mrf.mxu0
      %v2417 = vadd.f32 0.0, %v2416
      %2418 = vmatmul.f32.gmra.mxu0 %v2394
      %v2419 = vpop.f32.mrf.mxu0
      %v2420 = vadd.f32 0.0, %v2419
      %2421 = vmatmul.f32.gmra.mxu0 %v2397
      %v2422 = vpop.f32.mrf.mxu0
      %v2423 = vadd.f32 0.0, %v2422
      %2424 = vdwg.mxu0
      %2425 = vrot.lane.b32.xlu0 %v2287, 120
      %v2426 = vpop.permute.xlu0 %2425
      %2427 = vrot.lane.b32.xlu0 %v2290, 120
      %v2428 = vpop.permute.xlu0 %2427
      %2429 = vrot.lane.b32.xlu0 %v2293, 120
      %v2430 = vpop.permute.xlu0 %2429
      %2431 = vrot.lane.b32.xlu0 %v2287, 88
      %v2432 = vpop.permute.xlu0 %2431
      %2433 = vrot.lane.b32.xlu0 %v2290, 88
      %v2434 = vpop.permute.xlu0 %2433
      %2435 = vrot.lane.b32.xlu0 %v2293, 88
      %v2436 = vpop.permute.xlu0 %2435
      %v2437 = vsel %vm709, %v2426, 0
      %v2439 = vsel %vm709, %v2428, 0
      %v2441 = vsel %vm709, %v2430, 0
      %v2443 = vsel %vm709, %v2432, 0
      %v2445 = vsel %vm709, %v2434, 0
      %v2447 = vsel %vm709, %v2436, 0
      %2449 = vmatpush.xpose.msra.mxu0 0.0
      %2450 = vmatpush.xpose.msra.mxu0 0.0
      %2451 = vmatpush.xpose.msra.mxu0 0.0
      %2452 = vmatpush.xpose.msra.mxu0 0.0
      %2453 = vmatpush.xpose.msra.mxu0 0.0
      %2454 = vmatpush.xpose.msra.mxu0 0.0
      %2455 = vmatpush.xpose.msra.mxu0 0.0
      %2456 = vmatpush.xpose.msra.mxu0 0.0
      %2457 = vmatpush.xpose.msra.mxu0 0.0
      %2458 = vmatpush.xpose.msra.mxu0 0.0
      %2459 = vmatpush.xpose.msra.mxu0 0.0
      %2460 = vmatpush.xpose.msra.mxu0 0.0
      %2461 = vmatpush.xpose.msra.mxu0 0.0
      %2462 = vmatpush.xpose.msra.mxu0 %v2447
      %2463 = vmatpush.xpose.msra.mxu0 %v2445
      %2464 = vmatpush.xpose.msra.mxu0 %v2443
      %2465 = vmatmul.f32.gmra.mxu0 %v2437
      %v2466 = vpop.f32.mrf.mxu0
      %v2467 = vadd.f32 0.0, %v2466
      %2468 = vmatmul.f32.gmra.mxu0 %v2439
      %v2469 = vpop.f32.mrf.mxu0
      %v2470 = vadd.f32 0.0, %v2469
      %2471 = vmatmul.f32.gmra.mxu0 %v2441
      %v2472 = vpop.f32.mrf.mxu0
      %v2473 = vadd.f32 0.0, %v2472
      %2474 = vdwg.mxu0
      %v2475 = vmul.f32 %v2467, 0.35355338
      %v2476 = vmul.f32 %v2470, 0.35355338
      %v2477 = vmul.f32 %v2473, 0.35355338
      %v2478 = vadd.f32 %v2475, %v1115
      %v2479 = vadd.f32 %v2476, %v1116
      %v2480 = vadd.f32 %v2477, %v1117
      %v2481 = vsel %vm1302, %v2478, -inf
      %2482 = vmax.xlane.f32.xlu0 %v2481
      %v2483 = vpop.xlane.xlu0 %2482
      %v2484 = vsel %vm1302, %v2479, -inf
      %2485 = vmax.xlane.f32.xlu0 %v2484
      %v2486 = vpop.xlane.xlu0 %2485
      %v2487 = vsel %vm1302, %v2480, -inf
      %2488 = vmax.xlane.f32.xlu0 %v2487
      %v2489 = vpop.xlane.xlu0 %2488
      %v2490 = vsub.f32 %v2478, %v2483
      %v2491 = vsub.f32 %v2479, %v2486
      %v2492 = vsub.f32 %v2480, %v2489
      %v2493 = vmul.f32 %v2490, 1.442695
      %v2494 = vpow.pop %v2493
      %v2495 = vmul.f32 %v2491, 1.442695
      %v2496 = vpow.pop %v2495
      %v2497 = vmul.f32 %v2492, 1.442695
      %v2498 = vpow.pop %v2497
      %v2499 = vsel %vm1302, %v2494, 0.0
      %2500 = vadd.xlane.f32.xlu0 %v2499
      %v2501 = vpop.xlane.xlu0 %2500
      %v2502 = vsel %vm1302, %v2496, 0.0
      %2503 = vadd.xlane.f32.xlu0 %v2502
      %v2504 = vpop.xlane.xlu0 %2503
      %v2505 = vsel %vm1302, %v2498, 0.0
      %2506 = vadd.xlane.f32.xlu0 %v2505
      %v2507 = vpop.xlane.xlu0 %2506
      %v2508 = vrcp.pop %v2501
      %v2509 = vrcp.pop %v2504
      %v2510 = vrcp.pop %v2507
      %v2511 = vmul.f32 %v2494, %v2508
      %v2512 = vmul.f32 %v2496, %v2509
      %v2513 = vmul.f32 %v2498, %v2510
      %2514 = vrot.lane.b32.xlu0 %v2287, 56
      %v2515 = vpop.permute.xlu0 %2514
      %2516 = vrot.lane.b32.xlu0 %v2290, 56
      %v2517 = vpop.permute.xlu0 %2516
      %2518 = vrot.lane.b32.xlu0 %v2293, 56
      %v2519 = vpop.permute.xlu0 %2518
      %v2524 = vsel %vm1302, %v2511, 0
      %v2527 = vsel %vm1302, %v2512, 0
      %v2530 = vsel %vm1302, %v2513, 0
      %2532 = vmatpush.msra.mxu0 0.0
      %2533 = vmatpush.msra.mxu0 0.0
      %2534 = vmatpush.msra.mxu0 0.0
      %2535 = vmatpush.msra.mxu0 0.0
      %2536 = vmatpush.msra.mxu0 0.0
      %2537 = vmatpush.msra.mxu0 0.0
      %2538 = vmatpush.msra.mxu0 0.0
      %2539 = vmatpush.msra.mxu0 0.0
      %2540 = vmatpush.msra.mxu0 0.0
      %2541 = vmatpush.msra.mxu0 0.0
      %2542 = vmatpush.msra.mxu0 0.0
      %2543 = vmatpush.msra.mxu0 0.0
      %2544 = vmatpush.msra.mxu0 0.0
      %2545 = vmatpush.msra.mxu0 %v2519
      %2546 = vmatpush.msra.mxu0 %v2517
      %2547 = vmatpush.msra.mxu0 %v2515
      %2548 = vmatmul.f32.gmra.mxu0 %v2524
      %v2549 = vpop.f32.mrf.mxu0
      %v2550 = vadd.f32 0.0, %v2549
      %2551 = vmatmul.f32.gmra.mxu0 %v2527
      %v2552 = vpop.f32.mrf.mxu0
      %v2553 = vadd.f32 0.0, %v2552
      %2554 = vmatmul.f32.gmra.mxu0 %v2530
      %v2555 = vpop.f32.mrf.mxu0
      %v2556 = vadd.f32 0.0, %v2555
      %2557 = vdwg.mxu0
      %2558 = vrot.lane.b32.xlu0 %v2287, 112
      %v2559 = vpop.permute.xlu0 %2558
      %2560 = vrot.lane.b32.xlu0 %v2290, 112
      %v2561 = vpop.permute.xlu0 %2560
      %2562 = vrot.lane.b32.xlu0 %v2293, 112
      %v2563 = vpop.permute.xlu0 %2562
      %2564 = vrot.lane.b32.xlu0 %v2287, 80
      %v2565 = vpop.permute.xlu0 %2564
      %2566 = vrot.lane.b32.xlu0 %v2290, 80
      %v2567 = vpop.permute.xlu0 %2566
      %2568 = vrot.lane.b32.xlu0 %v2293, 80
      %v2569 = vpop.permute.xlu0 %2568
      %v2570 = vsel %vm709, %v2559, 0
      %v2572 = vsel %vm709, %v2561, 0
      %v2574 = vsel %vm709, %v2563, 0
      %v2576 = vsel %vm709, %v2565, 0
      %v2578 = vsel %vm709, %v2567, 0
      %v2580 = vsel %vm709, %v2569, 0
      %2582 = vmatpush.xpose.msra.mxu0 0.0
      %2583 = vmatpush.xpose.msra.mxu0 0.0
      %2584 = vmatpush.xpose.msra.mxu0 0.0
      %2585 = vmatpush.xpose.msra.mxu0 0.0
      %2586 = vmatpush.xpose.msra.mxu0 0.0
      %2587 = vmatpush.xpose.msra.mxu0 0.0
      %2588 = vmatpush.xpose.msra.mxu0 0.0
      %2589 = vmatpush.xpose.msra.mxu0 0.0
      %2590 = vmatpush.xpose.msra.mxu0 0.0
      %2591 = vmatpush.xpose.msra.mxu0 0.0
      %2592 = vmatpush.xpose.msra.mxu0 0.0
      %2593 = vmatpush.xpose.msra.mxu0 0.0
      %2594 = vmatpush.xpose.msra.mxu0 0.0
      %2595 = vmatpush.xpose.msra.mxu0 %v2580
      %2596 = vmatpush.xpose.msra.mxu0 %v2578
      %2597 = vmatpush.xpose.msra.mxu0 %v2576
      %2598 = vmatmul.f32.gmra.mxu0 %v2570
      %v2599 = vpop.f32.mrf.mxu0
      %v2600 = vadd.f32 0.0, %v2599
      %2601 = vmatmul.f32.gmra.mxu0 %v2572
      %v2602 = vpop.f32.mrf.mxu0
      %v2603 = vadd.f32 0.0, %v2602
      %2604 = vmatmul.f32.gmra.mxu0 %v2574
      %v2605 = vpop.f32.mrf.mxu0
      %v2606 = vadd.f32 0.0, %v2605
      %2607 = vdwg.mxu0
      %v2608 = vmul.f32 %v2600, 0.35355338
      %v2609 = vmul.f32 %v2603, 0.35355338
      %v2610 = vmul.f32 %v2606, 0.35355338
      %v2611 = vadd.f32 %v2608, %v1115
      %v2612 = vadd.f32 %v2609, %v1116
      %v2613 = vadd.f32 %v2610, %v1117
      %v2614 = vsel %vm1302, %v2611, -inf
      %2615 = vmax.xlane.f32.xlu0 %v2614
      %v2616 = vpop.xlane.xlu0 %2615
      %v2617 = vsel %vm1302, %v2612, -inf
      %2618 = vmax.xlane.f32.xlu0 %v2617
      %v2619 = vpop.xlane.xlu0 %2618
      %v2620 = vsel %vm1302, %v2613, -inf
      %2621 = vmax.xlane.f32.xlu0 %v2620
      %v2622 = vpop.xlane.xlu0 %2621
      %v2623 = vsub.f32 %v2611, %v2616
      %v2624 = vsub.f32 %v2612, %v2619
      %v2625 = vsub.f32 %v2613, %v2622
      %v2626 = vmul.f32 %v2623, 1.442695
      %v2627 = vpow.pop %v2626
      %v2628 = vmul.f32 %v2624, 1.442695
      %v2629 = vpow.pop %v2628
      %v2630 = vmul.f32 %v2625, 1.442695
      %v2631 = vpow.pop %v2630
      %v2632 = vsel %vm1302, %v2627, 0.0
      %2633 = vadd.xlane.f32.xlu0 %v2632
      %v2634 = vpop.xlane.xlu0 %2633
      %v2635 = vsel %vm1302, %v2629, 0.0
      %2636 = vadd.xlane.f32.xlu0 %v2635
      %v2637 = vpop.xlane.xlu0 %2636
      %v2638 = vsel %vm1302, %v2631, 0.0
      %2639 = vadd.xlane.f32.xlu0 %v2638
      %v2640 = vpop.xlane.xlu0 %2639
      %v2641 = vrcp.pop %v2634
      %v2642 = vrcp.pop %v2637
      %v2643 = vrcp.pop %v2640
      %v2644 = vmul.f32 %v2627, %v2641
      %v2645 = vmul.f32 %v2629, %v2642
      %v2646 = vmul.f32 %v2631, %v2643
      %2647 = vrot.lane.b32.xlu0 %v2287, 48
      %v2648 = vpop.permute.xlu0 %2647
      %2649 = vrot.lane.b32.xlu0 %v2290, 48
      %v2650 = vpop.permute.xlu0 %2649
      %2651 = vrot.lane.b32.xlu0 %v2293, 48
      %v2652 = vpop.permute.xlu0 %2651
      %v2657 = vsel %vm1302, %v2644, 0
      %v2660 = vsel %vm1302, %v2645, 0
      %v2663 = vsel %vm1302, %v2646, 0
      %2665 = vmatpush.msra.mxu0 0.0
      %2666 = vmatpush.msra.mxu0 0.0
      %2667 = vmatpush.msra.mxu0 0.0
      %2668 = vmatpush.msra.mxu0 0.0
      %2669 = vmatpush.msra.mxu0 0.0
      %2670 = vmatpush.msra.mxu0 0.0
      %2671 = vmatpush.msra.mxu0 0.0
      %2672 = vmatpush.msra.mxu0 0.0
      %2673 = vmatpush.msra.mxu0 0.0
      %2674 = vmatpush.msra.mxu0 0.0
      %2675 = vmatpush.msra.mxu0 0.0
      %2676 = vmatpush.msra.mxu0 0.0
      %2677 = vmatpush.msra.mxu0 0.0
      %2678 = vmatpush.msra.mxu0 %v2652
      %2679 = vmatpush.msra.mxu0 %v2650
      %2680 = vmatpush.msra.mxu0 %v2648
      %2681 = vmatmul.f32.gmra.mxu0 %v2657
      %v2682 = vpop.f32.mrf.mxu0
      %v2683 = vadd.f32 0.0, %v2682
      %2684 = vmatmul.f32.gmra.mxu0 %v2660
      %v2685 = vpop.f32.mrf.mxu0
      %v2686 = vadd.f32 0.0, %v2685
      %2687 = vmatmul.f32.gmra.mxu0 %v2663
      %v2688 = vpop.f32.mrf.mxu0
      %v2689 = vadd.f32 0.0, %v2688
      %2690 = vdwg.mxu0
      %2691 = vrot.lane.b32.xlu0 %v2287, 104
      %v2692 = vpop.permute.xlu0 %2691
      %2693 = vrot.lane.b32.xlu0 %v2290, 104
      %v2694 = vpop.permute.xlu0 %2693
      %2695 = vrot.lane.b32.xlu0 %v2293, 104
      %v2696 = vpop.permute.xlu0 %2695
      %2697 = vrot.lane.b32.xlu0 %v2287, 72
      %v2698 = vpop.permute.xlu0 %2697
      %2699 = vrot.lane.b32.xlu0 %v2290, 72
      %v2700 = vpop.permute.xlu0 %2699
      %2701 = vrot.lane.b32.xlu0 %v2293, 72
      %v2702 = vpop.permute.xlu0 %2701
      %v2703 = vsel %vm709, %v2692, 0
      %v2705 = vsel %vm709, %v2694, 0
      %v2707 = vsel %vm709, %v2696, 0
      %v2709 = vsel %vm709, %v2698, 0
      %v2711 = vsel %vm709, %v2700, 0
      %v2713 = vsel %vm709, %v2702, 0
      %2715 = vmatpush.xpose.msra.mxu0 0.0
      %2716 = vmatpush.xpose.msra.mxu0 0.0
      %2717 = vmatpush.xpose.msra.mxu0 0.0
      %2718 = vmatpush.xpose.msra.mxu0 0.0
      %2719 = vmatpush.xpose.msra.mxu0 0.0
      %2720 = vmatpush.xpose.msra.mxu0 0.0
      %2721 = vmatpush.xpose.msra.mxu0 0.0
      %2722 = vmatpush.xpose.msra.mxu0 0.0
      %2723 = vmatpush.xpose.msra.mxu0 0.0
      %2724 = vmatpush.xpose.msra.mxu0 0.0
      %2725 = vmatpush.xpose.msra.mxu0 0.0
      %2726 = vmatpush.xpose.msra.mxu0 0.0
      %2727 = vmatpush.xpose.msra.mxu0 0.0
      %2728 = vmatpush.xpose.msra.mxu0 %v2713
      %2729 = vmatpush.xpose.msra.mxu0 %v2711
      %2730 = vmatpush.xpose.msra.mxu0 %v2709
      %2731 = vmatmul.f32.gmra.mxu0 %v2703
      %v2732 = vpop.f32.mrf.mxu0
      %v2733 = vadd.f32 0.0, %v2732
      %2734 = vmatmul.f32.gmra.mxu0 %v2705
      %v2735 = vpop.f32.mrf.mxu0
      %v2736 = vadd.f32 0.0, %v2735
      %2737 = vmatmul.f32.gmra.mxu0 %v2707
      %v2738 = vpop.f32.mrf.mxu0
      %v2739 = vadd.f32 0.0, %v2738
      %2740 = vdwg.mxu0
      %v2741 = vmul.f32 %v2733, 0.35355338
      %v2742 = vmul.f32 %v2736, 0.35355338
      %v2743 = vmul.f32 %v2739, 0.35355338
      %v2744 = vadd.f32 %v2741, %v1115
      %v2745 = vadd.f32 %v2742, %v1116
      %v2746 = vadd.f32 %v2743, %v1117
      %v2747 = vsel %vm1302, %v2744, -inf
      %2748 = vmax.xlane.f32.xlu0 %v2747
      %v2749 = vpop.xlane.xlu0 %2748
      %v2750 = vsel %vm1302, %v2745, -inf
      %2751 = vmax.xlane.f32.xlu0 %v2750
      %v2752 = vpop.xlane.xlu0 %2751
      %v2753 = vsel %vm1302, %v2746, -inf
      %2754 = vmax.xlane.f32.xlu0 %v2753
      %v2755 = vpop.xlane.xlu0 %2754
      %v2756 = vsub.f32 %v2744, %v2749
      %v2757 = vsub.f32 %v2745, %v2752
      %v2758 = vsub.f32 %v2746, %v2755
      %v2759 = vmul.f32 %v2756, 1.442695
      %v2760 = vpow.pop %v2759
      %v2761 = vmul.f32 %v2757, 1.442695
      %v2762 = vpow.pop %v2761
      %v2763 = vmul.f32 %v2758, 1.442695
      %v2764 = vpow.pop %v2763
      %v2765 = vsel %vm1302, %v2760, 0.0
      %2766 = vadd.xlane.f32.xlu0 %v2765
      %v2767 = vpop.xlane.xlu0 %2766
      %v2768 = vsel %vm1302, %v2762, 0.0
      %2769 = vadd.xlane.f32.xlu0 %v2768
      %v2770 = vpop.xlane.xlu0 %2769
      %v2771 = vsel %vm1302, %v2764, 0.0
      %2772 = vadd.xlane.f32.xlu0 %v2771
      %v2773 = vpop.xlane.xlu0 %2772
      %v2774 = vrcp.pop %v2767
      %v2775 = vrcp.pop %v2770
      %v2776 = vrcp.pop %v2773
      %v2777 = vmul.f32 %v2760, %v2774
      %v2778 = vmul.f32 %v2762, %v2775
      %v2779 = vmul.f32 %v2764, %v2776
      %2780 = vrot.lane.b32.xlu0 %v2287, 40
      %v2781 = vpop.permute.xlu0 %2780
      %2782 = vrot.lane.b32.xlu0 %v2290, 40
      %v2783 = vpop.permute.xlu0 %2782
      %2784 = vrot.lane.b32.xlu0 %v2293, 40
      %v2785 = vpop.permute.xlu0 %2784
      %v2790 = vsel %vm1302, %v2777, 0
      %v2793 = vsel %vm1302, %v2778, 0
      %v2796 = vsel %vm1302, %v2779, 0
      %2798 = vmatpush.msra.mxu0 0.0
      %2799 = vmatpush.msra.mxu0 0.0
      %2800 = vmatpush.msra.mxu0 0.0
      %2801 = vmatpush.msra.mxu0 0.0
      %2802 = vmatpush.msra.mxu0 0.0
      %2803 = vmatpush.msra.mxu0 0.0
      %2804 = vmatpush.msra.mxu0 0.0
      %2805 = vmatpush.msra.mxu0 0.0
      %2806 = vmatpush.msra.mxu0 0.0
      %2807 = vmatpush.msra.mxu0 0.0
      %2808 = vmatpush.msra.mxu0 0.0
      %2809 = vmatpush.msra.mxu0 0.0
      %2810 = vmatpush.msra.mxu0 0.0
      %2811 = vmatpush.msra.mxu0 %v2785
      %2812 = vmatpush.msra.mxu0 %v2783
      %2813 = vmatpush.msra.mxu0 %v2781
      %2814 = vmatmul.f32.gmra.mxu0 %v2790
      %v2815 = vpop.f32.mrf.mxu0
      %v2816 = vadd.f32 0.0, %v2815
      %2817 = vmatmul.f32.gmra.mxu0 %v2793
      %v2818 = vpop.f32.mrf.mxu0
      %v2819 = vadd.f32 0.0, %v2818
      %2820 = vmatmul.f32.gmra.mxu0 %v2796
      %v2821 = vpop.f32.mrf.mxu0
      %v2822 = vadd.f32 0.0, %v2821
      %2823 = vdwg.mxu0
      %2827 = vrot.lane.b32.xlu0 %v2550, 8
      %v2828 = vpop.permute.xlu0 %2827
      %2829 = vrot.lane.b32.xlu0 %v2553, 8
      %v2830 = vpop.permute.xlu0 %2829
      %2831 = vrot.lane.b32.xlu0 %v2556, 8
      %v2832 = vpop.permute.xlu0 %2831
      %2839 = vrot.lane.b32.xlu0 %v2683, 16
      %v2840 = vpop.permute.xlu0 %2839
      %2841 = vrot.lane.b32.xlu0 %v2686, 16
      %v2842 = vpop.permute.xlu0 %2841
      %2843 = vrot.lane.b32.xlu0 %v2689, 16
      %v2844 = vpop.permute.xlu0 %2843
      %2851 = vrot.lane.b32.xlu0 %v2816, 24
      %v2852 = vpop.permute.xlu0 %2851
      %2853 = vrot.lane.b32.xlu0 %v2819, 24
      %v2854 = vpop.permute.xlu0 %2853
      %2855 = vrot.lane.b32.xlu0 %v2822, 24
      %v2856 = vpop.permute.xlu0 %2855
      %v2860 = vsel %vm709, %v2417, %v2828
      %v2861 = vsel %vm709, %v2420, %v2830
      %v2862 = vsel %vm709, %v2423, %v2832
      %v2863 = vsel %vm1818, %v2860, %v2840
      %v2864 = vsel %vm1818, %v2861, %v2842
      %v2865 = vsel %vm1818, %v2862, %v2844
      %v2866 = vsel %vm1302, %v2863, %v2852
      %v2867 = vsel %vm1302, %v2864, %v2854
      %v2868 = vsel %vm1302, %v2865, %v2856
      %s2869 = scalar_lea.vmem %s13, 160
      %v2870 = vld [vmem:[%s2869] sm:$0xff]
      %v2871 = vld [vmem:[%s2869 + $0x8] sm:$0xff]
      %v2872 = vld [vmem:[%s2869 + $0x10] sm:$0xff]
      %v2873 = vld [vmem:[%s2869 + $0x18] sm:$0xff]
      %v2875 = vsel %vm1124, %v2866, 0
      %v2878 = vsel %vm1124, %v2867, 0
      %v2881 = vsel %vm1124, %v2868, 0
      %2883 = vmatpush.msra.mxu0 0.0
      %2884 = vmatpush.msra.mxu0 0.0
      %2885 = vmatpush.msra.mxu0 0.0
      %2886 = vmatpush.msra.mxu0 0.0
      %2887 = vmatpush.msra.mxu0 0.0
      %2888 = vmatpush.msra.mxu0 0.0
      %2889 = vmatpush.msra.mxu0 0.0
      %2890 = vmatpush.msra.mxu0 0.0
      %2891 = vmatpush.msra.mxu0 0.0
      %2892 = vmatpush.msra.mxu0 0.0
      %2893 = vmatpush.msra.mxu0 0.0
      %2894 = vmatpush.msra.mxu0 0.0
      %2895 = vmatpush.msra.mxu0 %v2873
      %2896 = vmatpush.msra.mxu0 %v2872
      %2897 = vmatpush.msra.mxu0 %v2871
      %2898 = vmatpush.msra.mxu0 %v2870
      %2899 = vmatmul.f32.gmra.mxu0 %v2875
      %v2900 = vpop.f32.mrf.mxu0
      %v2901 = vadd.f32 0.0, %v2900
      %2902 = vmatmul.f32.gmra.mxu0 %v2878
      %v2903 = vpop.f32.mrf.mxu0
      %v2904 = vadd.f32 0.0, %v2903
      %2905 = vmatmul.f32.gmra.mxu0 %v2881
      %v2906 = vpop.f32.mrf.mxu0
      %v2907 = vadd.f32 0.0, %v2906
      %2908 = vdwg.mxu0
      %v2909 = vadd.f32 %v2166, %v2901
      %v2910 = vadd.f32 %v2167, %v2904
      %v2911 = vadd.f32 %v2168, %v2907
      %v2912 = vperm.slane %v2174, 0
      %v2913 = vadd.f32 %v2909, %v2912
      %v2914 = vadd.f32 %v2910, %v2912
      %v2915 = vadd.f32 %v2911, %v2912
      %v2916 = vsel %vm1124, %v2913, 0.0
      %2917 = vadd.xlane.f32.xlu0 %v2916
      %v2918 = vpop.xlane.xlu0 %2917
      %v2919 = vsel %vm1124, %v2914, 0.0
      %2920 = vadd.xlane.f32.xlu0 %v2919
      %v2921 = vpop.xlane.xlu0 %2920
      %v2922 = vsel %vm1124, %v2915, 0.0
      %2923 = vadd.xlane.f32.xlu0 %v2922
      %v2924 = vpop.xlane.xlu0 %2923
      %v2925 = vmul.f32 %v2918, %v1140
      %v2926 = vmul.f32 %v2921, %v1140
      %v2927 = vmul.f32 %v2924, %v1140
      %v2928 = vsub.f32 %v2913, %v2925
      %v2929 = vsub.f32 %v2914, %v2926
      %v2930 = vsub.f32 %v2915, %v2927
      %v2931 = vmul.f32 %v2928, %v2928
      %v2932 = vmul.f32 %v2929, %v2929
      %v2933 = vmul.f32 %v2930, %v2930
      %v2934 = vsel %vm1124, %v2931, 0.0
      %2935 = vadd.xlane.f32.xlu0 %v2934
      %v2936 = vpop.xlane.xlu0 %2935
      %v2937 = vsel %vm1124, %v2932, 0.0
      %2938 = vadd.xlane.f32.xlu0 %v2937
      %v2939 = vpop.xlane.xlu0 %2938
      %v2940 = vsel %vm1124, %v2933, 0.0
      %2941 = vadd.xlane.f32.xlu0 %v2940
      %v2942 = vpop.xlane.xlu0 %2941
      %v2943 = vmul.f32 %v2936, %v1140
      %v2944 = vmul.f32 %v2939, %v1140
      %v2945 = vmul.f32 %v2942, %v1140
      %v2946 = vadd.f32 %v2943, 1e-05
      %v2947 = vadd.f32 %v2944, 1e-05
      %v2948 = vadd.f32 %v2945, 1e-05
      %v2949 = vrsqrt.pop %v2946
      %v2950 = vmul.f32 %v2949, %v2946
      %v2951 = vmul.f32 %v2950, %v2949
      %v2952 = vmul.f32 0.5, %v2951
      %v2953 = vsub.f32 1.5, %v2952
      %v2954 = vmul.f32 %v2949, %v2953
      %vm2955 = vweird.f32 %v2946
      %vm2956 = vweird.f32 %v2949
      %vm2957 = vmor %vm2955, %vm2956
      %v2958 = vsel %vm2957, %v2949, %v2954
      %v2959 = vrsqrt.pop %v2947
      %v2960 = vmul.f32 %v2959, %v2947
      %v2961 = vmul.f32 %v2960, %v2959
      %v2962 = vmul.f32 0.5, %v2961
      %v2963 = vsub.f32 1.5, %v2962
      %v2964 = vmul.f32 %v2959, %v2963
      %vm2965 = vweird.f32 %v2947
      %vm2966 = vweird.f32 %v2959
      %vm2967 = vmor %vm2965, %vm2966
      %v2968 = vsel %vm2967, %v2959, %v2964
      %v2969 = vrsqrt.pop %v2948
      %v2970 = vmul.f32 %v2969, %v2948
      %v2971 = vmul.f32 %v2970, %v2969
      %v2972 = vmul.f32 0.5, %v2971
      %v2973 = vsub.f32 1.5, %v2972
      %v2974 = vmul.f32 %v2969, %v2973
      %vm2975 = vweird.f32 %v2948
      %vm2976 = vweird.f32 %v2969
      %vm2977 = vmor %vm2975, %vm2976
      %v2978 = vsel %vm2977, %v2969, %v2974
      %v2979 = vmul.f32 %v2928, %v2958
      %v2980 = vmul.f32 %v2929, %v2968
      %v2981 = vmul.f32 %v2930, %v2978
      %v2982 = vperm.slane %v2172, 0
      %v2983 = vmul.f32 %v2979, %v2982
      %v2984 = vmul.f32 %v2980, %v2982
      %v2985 = vmul.f32 %v2981, %v2982
      %v2986 = vperm.slane %v2173, 0
      %v2987 = vadd.f32 %v2983, %v2986
      %v2988 = vadd.f32 %v2984, %v2986
      %v2989 = vadd.f32 %v2985, %v2986
      %v2990 = vld [vmem:[%s2250 + $0x8] sm:$0xff]
      %v2991 = vld [vmem:[%s2250 + $0x18] sm:$0xff]
      %v2992 = vld [vmem:[%s2250 + $0x28] sm:$0xff]
      %v2993 = vld [vmem:[%s2250 + $0x38] sm:$0xff]
      %v2994 = vld [vmem:[%s2255 + $0x1] sm:$0x1]
      %v2996 = vperm.slane %v2994, 0
      %v2999 = vsel %vm1124, %v2987, 0
      %v3002 = vsel %vm1124, %v2988, 0
      %v3005 = vsel %vm1124, %v2989, 0
      %3007 = vmatpush.msra.mxu0 0.0
      %3008 = vmatpush.msra.mxu0 0.0
      %3009 = vmatpush.msra.mxu0 0.0
      %3010 = vmatpush.msra.mxu0 0.0
      %3011 = vmatpush.msra.mxu0 0.0
      %3012 = vmatpush.msra.mxu0 0.0
      %3013 = vmatpush.msra.mxu0 0.0
      %3014 = vmatpush.msra.mxu0 0.0
      %3015 = vmatpush.msra.mxu0 0.0
      %3016 = vmatpush.msra.mxu0 0.0
      %3017 = vmatpush.msra.mxu0 0.0
      %3018 = vmatpush.msra.mxu0 0.0
      %3019 = vmatpush.msra.mxu0 %v2993
      %3020 = vmatpush.msra.mxu0 %v2992
      %3021 = vmatpush.msra.mxu0 %v2991
      %3022 = vmatpush.msra.mxu0 %v2990
      %3023 = vmatmul.f32.gmra.mxu0 %v2999
      %v3024 = vpop.f32.mrf.mxu0
      %v3025 = vadd.f32 %v2996, %v3024
      %3026 = vmatmul.f32.gmra.mxu0 %v3002
      %v3027 = vpop.f32.mrf.mxu0
      %v3028 = vadd.f32 %v2996, %v3027
      %3029 = vmatmul.f32.gmra.mxu0 %v3005
      %v3030 = vpop.f32.mrf.mxu0
      %v3031 = vadd.f32 %v2996, %v3030
      %3032 = vdwg.mxu0
      %v3033 = vmul.f32 %v3025, 0.5
      %v3034 = vmul.f32 %v3028, 0.5
      %v3035 = vmul.f32 %v3031, 0.5
      %v3036 = vmul.f32 %v3025, 0.70710677
      %v3037 = vmul.f32 %v3028, 0.70710677
      %v3038 = vmul.f32 %v3031, 0.70710677
      %v3039 = vmul.f32 %v3036, %v3036
      %v3040 = vmin.f32 16.0, %v3039
      %v3041 = vmul.f32 %v3040, 2.1237322e-06
      %v3042 = vadd.f32 %v3041, 0.00028619796
      %v3043 = vmul.f32 %v3040, %v3042
      %v3044 = vadd.f32 %v3043, 0.0036580483
      %v3045 = vmul.f32 %v3040, %v3044
      %v3046 = vadd.f32 %v3045, 0.05243302
      %v3047 = vmul.f32 %v3040, %v3046
      %v3048 = vadd.f32 %v3047, 0.18741608
      %v3049 = vmul.f32 %v3040, %v3048
      %v3050 = vadd.f32 %v3049, 1.1283791
      %v3051 = vmul.f32 %v3036, %v3050
      %v3052 = vmul.f32 %v3040, 3.8918573e-05
      %v3053 = vadd.f32 %v3052, 0.001143296
      %v3054 = vmul.f32 %v3040, %v3053
      %v3055 = vadd.f32 %v3054, 0.014752088
      %v3056 = vmul.f32 %v3040, %v3055
      %v3057 = vadd.f32 %v3056, 0.112945676
      %v3058 = vmul.f32 %v3040, %v3057
      %v3059 = vadd.f32 %v3058, 0.4994258
      %v3060 = vmul.f32 %v3040, %v3059
      %v3061 = vadd.f32 %v3060, 1.0
      %v3062 = vrcp.pop %v3061
      %v3063 = vmul.f32 %v3061, %v3062
      %v3064 = vsub.f32 1.0, %v3063
      %v3065 = vmul.f32 %v3062, %v3064
      %v3066 = vadd.f32 %v3062, %v3065
      %vm3067 = vweird.f32 %v3061
      %vm3068 = vweird.f32 %v3062
      %vm3069 = vmor %vm3067, %vm3068
      %v3070 = vsel %vm3069, %v3062, %v3066
      %v3071 = vand.u32 2147483647, %v3061
      %vm3072 = vcmp.eq.f32.partialorder %v3071, 8.507059e+37
      %v3073 = vand.u32 %v3061, 2147483648
      %v3074 = vor.u32 1.1754944e-38, %v3073
      %v3075 = vsel %vm3072, %v3074, %v3070
      %v3076 = vmul.f32 %v3051, %v3075
      %v3077 = vmin.f32 %v3076, 1.0
      %v3078 = vmax.f32 %v3077, -1.0
      %v3079 = vmul.f32 %v3037, %v3037
      %v3080 = vmin.f32 16.0, %v3079
      %v3081 = vmul.f32 %v3080, 2.1237322e-06
      %v3082 = vadd.f32 %v3081, 0.00028619796
      %v3083 = vmul.f32 %v3080, %v3082
      %v3084 = vadd.f32 %v3083, 0.0036580483
      %v3085 = vmul.f32 %v3080, %v3084
      %v3086 = vadd.f32 %v3085, 0.05243302
      %v3087 = vmul.f32 %v3080, %v3086
      %v3088 = vadd.f32 %v3087, 0.18741608
      %v3089 = vmul.f32 %v3080, %v3088
      %v3090 = vadd.f32 %v3089, 1.1283791
      %v3091 = vmul.f32 %v3037, %v3090
      %v3092 = vmul.f32 %v3080, 3.8918573e-05
      %v3093 = vadd.f32 %v3092, 0.001143296
      %v3094 = vmul.f32 %v3080, %v3093
      %v3095 = vadd.f32 %v3094, 0.014752088
      %v3096 = vmul.f32 %v3080, %v3095
      %v3097 = vadd.f32 %v3096, 0.112945676
      %v3098 = vmul.f32 %v3080, %v3097
      %v3099 = vadd.f32 %v3098, 0.4994258
      %v3100 = vmul.f32 %v3080, %v3099
      %v3101 = vadd.f32 %v3100, 1.0
      %v3102 = vrcp.pop %v3101
      %v3103 = vmul.f32 %v3101, %v3102
      %v3104 = vsub.f32 1.0, %v3103
      %v3105 = vmul.f32 %v3102, %v3104
      %v3106 = vadd.f32 %v3102, %v3105
      %vm3107 = vweird.f32 %v3101
      %vm3108 = vweird.f32 %v3102
      %vm3109 = vmor %vm3107, %vm3108
      %v3110 = vsel %vm3109, %v3102, %v3106
      %v3111 = vand.u32 2147483647, %v3101
      %vm3112 = vcmp.eq.f32.partialorder %v3111, 8.507059e+37
      %v3113 = vand.u32 %v3101, 2147483648
      %v3114 = vor.u32 1.1754944e-38, %v3113
      %v3115 = vsel %vm3112, %v3114, %v3110
      %v3116 = vmul.f32 %v3091, %v3115
      %v3117 = vmin.f32 %v3116, 1.0
      %v3118 = vmax.f32 %v3117, -1.0
      %v3119 = vmul.f32 %v3038, %v3038
      %v3120 = vmin.f32 16.0, %v3119
      %v3121 = vmul.f32 %v3120, 2.1237322e-06
      %v3122 = vadd.f32 %v3121, 0.00028619796
      %v3123 = vmul.f32 %v3120, %v3122
      %v3124 = vadd.f32 %v3123, 0.0036580483
      %v3125 = vmul.f32 %v3120, %v3124
      %v3126 = vadd.f32 %v3125, 0.05243302
      %v3127 = vmul.f32 %v3120, %v3126
      %v3128 = vadd.f32 %v3127, 0.18741608
      %v3129 = vmul.f32 %v3120, %v3128
      %v3130 = vadd.f32 %v3129, 1.1283791
      %v3131 = vmul.f32 %v3038, %v3130
      %v3132 = vmul.f32 %v3120, 3.8918573e-05
      %v3133 = vadd.f32 %v3132, 0.001143296
      %v3134 = vmul.f32 %v3120, %v3133
      %v3135 = vadd.f32 %v3134, 0.014752088
      %v3136 = vmul.f32 %v3120, %v3135
      %v3137 = vadd.f32 %v3136, 0.112945676
      %v3138 = vmul.f32 %v3120, %v3137
      %v3139 = vadd.f32 %v3138, 0.4994258
      %v3140 = vmul.f32 %v3120, %v3139
      %v3141 = vadd.f32 %v3140, 1.0
      %v3142 = vrcp.pop %v3141
      %v3143 = vmul.f32 %v3141, %v3142
      %v3144 = vsub.f32 1.0, %v3143
      %v3145 = vmul.f32 %v3142, %v3144
      %v3146 = vadd.f32 %v3142, %v3145
      %vm3147 = vweird.f32 %v3141
      %vm3148 = vweird.f32 %v3142
      %vm3149 = vmor %vm3147, %vm3148
      %v3150 = vsel %vm3149, %v3142, %v3146
      %v3151 = vand.u32 2147483647, %v3141
      %vm3152 = vcmp.eq.f32.partialorder %v3151, 8.507059e+37
      %v3153 = vand.u32 %v3141, 2147483648
      %v3154 = vor.u32 1.1754944e-38, %v3153
      %v3155 = vsel %vm3152, %v3154, %v3150
      %v3156 = vmul.f32 %v3131, %v3155
      %v3157 = vmin.f32 %v3156, 1.0
      %v3158 = vmax.f32 %v3157, -1.0
      %v3159 = vadd.f32 %v3078, 1.0
      %v3160 = vadd.f32 %v3118, 1.0
      %v3161 = vadd.f32 %v3158, 1.0
      %v3162 = vmul.f32 %v3033, %v3159
      %v3163 = vmul.f32 %v3034, %v3160
      %v3164 = vmul.f32 %v3035, %v3161
      %v3165 = vld [vmem:[%s2869 + $0x20] sm:$0xff]
      %v3166 = vld [vmem:[%s2869 + $0x28] sm:$0xff]
      %v3167 = vld [vmem:[%s2869 + $0x30] sm:$0xff]
      %v3168 = vld [vmem:[%s2869 + $0x38] sm:$0xff]
      %v3169 = vld [vmem:[%s2869 + $0x40] sm:$0xff]
      %v3170 = vld [vmem:[%s2869 + $0x48] sm:$0xff]
      %v3171 = vld [vmem:[%s2869 + $0x50] sm:$0xff]
      %v3172 = vld [vmem:[%s2869 + $0x58] sm:$0xff]
      %v3173 = vld [vmem:[%s2869 + $0x60] sm:$0xff]
      %v3174 = vld [vmem:[%s2869 + $0x68] sm:$0xff]
      %v3175 = vld [vmem:[%s2869 + $0x70] sm:$0xff]
      %v3176 = vld [vmem:[%s2869 + $0x78] sm:$0xff]
      %v3177 = vld [vmem:[%s2869 + $0x80] sm:$0xff]
      %v3178 = vld [vmem:[%s2869 + $0x88] sm:$0xff]
      %v3179 = vld [vmem:[%s2869 + $0x90] sm:$0xff]
      %v3180 = vld [vmem:[%s2869 + $0x98] sm:$0xff]
      %3181 = vmatpush.msra.mxu0 %v3180
      %3182 = vmatpush.msra.mxu0 %v3179
      %3183 = vmatpush.msra.mxu0 %v3178
      %3184 = vmatpush.msra.mxu0 %v3177
      %3185 = vmatpush.msra.mxu0 %v3176
      %3186 = vmatpush.msra.mxu0 %v3175
      %3187 = vmatpush.msra.mxu0 %v3174
      %3188 = vmatpush.msra.mxu0 %v3173
      %3189 = vmatpush.msra.mxu0 %v3172
      %3190 = vmatpush.msra.mxu0 %v3171
      %3191 = vmatpush.msra.mxu0 %v3170
      %3192 = vmatpush.msra.mxu0 %v3169
      %3193 = vmatpush.msra.mxu0 %v3168
      %3194 = vmatpush.msra.mxu0 %v3167
      %3195 = vmatpush.msra.mxu0 %v3166
      %3196 = vmatpush.msra.mxu0 %v3165
      %3197 = vmatmul.f32.gmra.mxu0 %v3162
      %v3198 = vpop.f32.mrf.mxu0
      %3199 = vmatmul.f32.gmra.mxu0 %v3163
      %v3200 = vpop.f32.mrf.mxu0
      %v3201 = vadd.f32 0.0, %v3200
      %3202 = vmatmul.f32.gmra.mxu0 %v3164
      %v3203 = vpop.f32.mrf.mxu0
      %3204 = vdwg.mxu0
      %v3205 = vadd.f32 %v2914, %v3201
      %v3206 = vperm.slane %v2175, 0
      %v3207 = vadd.f32 %v3205, %v3206
      %v3208 = vld [vmem:[%s15] sm:$0x1]
      %v3209 = vld [vmem:[%s15 + $0x1] sm:$0x1]
      %v3210 = vsel %vm1124, %v3207, 0.0
      %3211 = vadd.xlane.f32.xlu0 %v3210
      %v3212 = vpop.xlane.xlu0 %3211
      %v3213 = vmul.f32 %v3212, %v1140
      %v3214 = vsub.f32 %v3207, %v3213
      %v3215 = vmul.f32 %v3214, %v3214
      %v3216 = vsel %vm1124, %v3215, 0.0
      %3217 = vadd.xlane.f32.xlu0 %v3216
      %v3218 = vpop.xlane.xlu0 %3217
      %v3219 = vmul.f32 %v3218, %v1140
      %v3220 = vadd.f32 %v3219, 1e-05
      %v3221 = vrsqrt.pop %v3220
      %v3222 = vmul.f32 %v3221, %v3220
      %v3223 = vmul.f32 %v3222, %v3221
      %v3224 = vmul.f32 0.5, %v3223
      %v3225 = vsub.f32 1.5, %v3224
      %v3226 = vmul.f32 %v3221, %v3225
      %vm3227 = vweird.f32 %v3220
      %vm3228 = vweird.f32 %v3221
      %vm3229 = vmor %vm3227, %vm3228
      %v3230 = vsel %vm3229, %v3221, %v3226
      %v3231 = vmul.f32 %v3214, %v3230
      %v3232 = vperm.slane %v3208, 0
      %v3233 = vmul.f32 %v3231, %v3232
      %v3234 = vperm.slane %v3209, 0
      %v3235 = vadd.f32 %v3233, %v3234
      %v3236 = vld [vmem:[%s16] sm:$0xff]
      %v3237 = vld [vmem:[%s16 + $0x8] sm:$0xff]
      %v3238 = vld [vmem:[%s16 + $0x10] sm:$0xff]
      %v3239 = vld [vmem:[%s16 + $0x18] sm:$0xff]
      %v3240 = vld [vmem:[%s16 + $0x20] sm:$0xff]
      %v3241 = vld [vmem:[%s16 + $0x28] sm:$0xff]
      %v3242 = vld [vmem:[%s16 + $0x30] sm:$0xff]
      %v3243 = vld [vmem:[%s16 + $0x38] sm:$0xff]
      %v3244 = vld [vmem:[%s19] ss:$2 sm:$0x3]
      %v3246 = vperm.slane %v3244, 0
      %v3247 = vperm.slane %v3244, 1
      %v3251 = vsel %vm1124, %v3235, 0
      %3253 = vmatpush.msra.mxu0 0.0
      %3254 = vmatpush.msra.mxu0 0.0
      %3255 = vmatpush.msra.mxu0 0.0
      %3256 = vmatpush.msra.mxu0 0.0
      %3257 = vmatpush.msra.mxu0 0.0
      %3258 = vmatpush.msra.mxu0 0.0
      %3259 = vmatpush.msra.mxu0 0.0
      %3260 = vmatpush.msra.mxu0 0.0
      %3261 = vmatpush.msra.mxu0 0.0
      %3262 = vmatpush.msra.mxu0 0.0
      %3263 = vmatpush.msra.mxu0 0.0
      %3264 = vmatpush.msra.mxu0 0.0
      %3265 = vmatpush.msra.mxu0 %v3242
      %3266 = vmatpush.msra.mxu0 %v3240
      %3267 = vmatpush.msra.mxu0 %v3238
      %3268 = vmatpush.msra.mxu0 %v3236
      %3269 = vmatmul.f32.gmra.mxu0 %v3251
      %v3270 = vpop.f32.mrf.mxu0
      %v3271 = vadd.f32 %v3246, %v3270
      %3272 = vdwg.mxu0
      %3273 = vmatpush.msra.mxu0 0.0
      %3274 = vmatpush.msra.mxu0 0.0
      %3275 = vmatpush.msra.mxu0 0.0
      %3276 = vmatpush.msra.mxu0 0.0
      %3277 = vmatpush.msra.mxu0 0.0
      %3278 = vmatpush.msra.mxu0 0.0
      %3279 = vmatpush.msra.mxu0 0.0
      %3280 = vmatpush.msra.mxu0 0.0
      %3281 = vmatpush.msra.mxu0 0.0
      %3282 = vmatpush.msra.mxu0 0.0
      %3283 = vmatpush.msra.mxu0 0.0
      %3284 = vmatpush.msra.mxu0 0.0
      %3285 = vmatpush.msra.mxu0 %v3243
      %3286 = vmatpush.msra.mxu0 %v3241
      %3287 = vmatpush.msra.mxu0 %v3239
      %3288 = vmatpush.msra.mxu0 %v3237
      %3289 = vmatmul.f32.gmra.mxu0 %v3251
      %v3290 = vpop.f32.mrf.mxu0
      %v3291 = vadd.f32 %v3247, %v3290
      %3292 = vdwg.mxu0
      %v3293 = vmax.f32 %v3271, 0.0
      %v3294 = vmax.f32 %v3291, 0.0
      %v3295 = vld [vmem:[%s17] sm:$0xff]
      %v3296 = vld [vmem:[%s17 + $0x8] sm:$0xff]
      %v3297 = vld [vmem:[%s17 + $0x10] sm:$0xff]
      %v3298 = vld [vmem:[%s17 + $0x18] sm:$0xff]
      %v3299 = vld [vmem:[%s17 + $0x20] sm:$0xff]
      %v3300 = vld [vmem:[%s17 + $0x28] sm:$0xff]
      %v3301 = vld [vmem:[%s17 + $0x30] sm:$0xff]
      %v3302 = vld [vmem:[%s17 + $0x38] sm:$0xff]
      %v3303 = vld [vmem:[%s17 + $0x40] sm:$0xff]
      %v3304 = vld [vmem:[%s17 + $0x48] sm:$0xff]
      %v3305 = vld [vmem:[%s17 + $0x50] sm:$0xff]
      %v3306 = vld [vmem:[%s17 + $0x58] sm:$0xff]
      %v3307 = vld [vmem:[%s17 + $0x60] sm:$0xff]
      %v3308 = vld [vmem:[%s17 + $0x68] sm:$0xff]
      %v3309 = vld [vmem:[%s17 + $0x70] sm:$0xff]
      %v3310 = vld [vmem:[%s17 + $0x78] sm:$0xff]
      %v3311 = vld [vmem:[%s17 + $0x80] sm:$0xff]
      %v3312 = vld [vmem:[%s17 + $0x88] sm:$0xff]
      %v3313 = vld [vmem:[%s17 + $0x90] sm:$0xff]
      %v3314 = vld [vmem:[%s17 + $0x98] sm:$0xff]
      %v3315 = vld [vmem:[%s17 + $0xa0] sm:$0xff]
      %v3316 = vld [vmem:[%s17 + $0xa8] sm:$0xff]
      %v3317 = vld [vmem:[%s17 + $0xb0] sm:$0xff]
      %v3318 = vld [vmem:[%s17 + $0xb8] sm:$0xff]
      %v3319 = vld [vmem:[%s17 + $0xc0] sm:$0xff]
      %v3320 = vld [vmem:[%s17 + $0xc8] sm:$0xff]
      %v3321 = vld [vmem:[%s17 + $0xd0] sm:$0xff]
      %v3322 = vld [vmem:[%s17 + $0xd8] sm:$0xff]
      %v3323 = vld [vmem:[%s17 + $0xe0] sm:$0xff]
      %v3324 = vld [vmem:[%s17 + $0xe8] sm:$0xff]
      %v3325 = vld [vmem:[%s17 + $0xf0] sm:$0xff]
      %v3326 = vld [vmem:[%s17 + $0xf8] sm:$0xff]
      %v3327 = vld [vmem:[%s17 + $0x100] sm:$0xff]
      %v3328 = vld [vmem:[%s17 + $0x108] sm:$0xff]
      %v3329 = vld [vmem:[%s17 + $0x110] sm:$0xff]
      %v3330 = vld [vmem:[%s17 + $0x118] sm:$0xff]
      %v3331 = vld [vmem:[%s17 + $0x120] sm:$0xff]
      %v3332 = vld [vmem:[%s17 + $0x128] sm:$0xff]
      %v3333 = vld [vmem:[%s17 + $0x130] sm:$0xff]
      %v3334 = vld [vmem:[%s17 + $0x138] sm:$0xff]
      %v3335 = vld [vmem:[%s17 + $0x140] sm:$0xff]
      %v3336 = vld [vmem:[%s17 + $0x148] sm:$0xff]
      %v3337 = vld [vmem:[%s17 + $0x150] sm:$0xff]
      %v3338 = vld [vmem:[%s17 + $0x158] sm:$0xff]
      %v3339 = vld [vmem:[%s17 + $0x160] sm:$0xff]
      %v3340 = vld [vmem:[%s17 + $0x168] sm:$0xff]
      %v3341 = vld [vmem:[%s17 + $0x170] sm:$0xff]
      %v3342 = vld [vmem:[%s17 + $0x178] sm:$0xff]
      %v3343 = vld [vmem:[%s17 + $0x180] sm:$0xff]
      %v3344 = vld [vmem:[%s17 + $0x188] sm:$0xff]
      %v3345 = vld [vmem:[%s17 + $0x190] sm:$0xff]
      %v3346 = vld [vmem:[%s17 + $0x198] sm:$0xff]
      %v3347 = vld [vmem:[%s17 + $0x1a0] sm:$0xff]
      %v3348 = vld [vmem:[%s17 + $0x1a8] sm:$0xff]
      %v3349 = vld [vmem:[%s17 + $0x1b0] sm:$0xff]
      %v3350 = vld [vmem:[%s17 + $0x1b8] sm:$0xff]
      %v3351 = vld [vmem:[%s17 + $0x1c0] sm:$0xff]
      %v3352 = vld [vmem:[%s17 + $0x1c8] sm:$0xff]
      %v3353 = vld [vmem:[%s17 + $0x1d0] sm:$0xff]
      %v3354 = vld [vmem:[%s17 + $0x1d8] sm:$0xff]
      %v3355 = vld [vmem:[%s17 + $0x1e0] sm:$0xff]
      %v3356 = vld [vmem:[%s17 + $0x1e8] sm:$0xff]
      %v3357 = vld [vmem:[%s17 + $0x1f0] sm:$0xff]
      %v3358 = vld [vmem:[%s17 + $0x1f8] sm:$0xff]
      %s3359 = scalar_lea.vmem %s19, 1
      %v3360 = vld [vmem:[%s3359] ss:$2 sm:$0x3]
      %v3362 = vperm.slane %v3360, 0
      %v3363 = vperm.slane %v3360, 1
      %3366 = vmatpush.msra.mxu0 %v3325
      %3367 = vmatpush.msra.mxu0 %v3323
      %3368 = vmatpush.msra.mxu0 %v3321
      %3369 = vmatpush.msra.mxu0 %v3319
      %3370 = vmatpush.msra.mxu0 %v3317
      %3371 = vmatpush.msra.mxu0 %v3315
      %3372 = vmatpush.msra.mxu0 %v3313
      %3373 = vmatpush.msra.mxu0 %v3311
      %3374 = vmatpush.msra.mxu0 %v3309
      %3375 = vmatpush.msra.mxu0 %v3307
      %3376 = vmatpush.msra.mxu0 %v3305
      %3377 = vmatpush.msra.mxu0 %v3303
      %3378 = vmatpush.msra.mxu0 %v3301
      %3379 = vmatpush.msra.mxu0 %v3299
      %3380 = vmatpush.msra.mxu0 %v3297
      %3381 = vmatpush.msra.mxu0 %v3295
      %3382 = vmatmul.f32.gmra.mxu0 %v3293
      %v3383 = vpop.f32.mrf.mxu0
      %v3384 = vadd.f32 %v3362, %v3383
      %3385 = vdwg.mxu0
      %3386 = vmatpush.msra.mxu0 %v3357
      %3387 = vmatpush.msra.mxu0 %v3355
      %3388 = vmatpush.msra.mxu0 %v3353
      %3389 = vmatpush.msra.mxu0 %v3351
      %3390 = vmatpush.msra.mxu0 %v3349
      %3391 = vmatpush.msra.mxu0 %v3347
      %3392 = vmatpush.msra.mxu0 %v3345
      %3393 = vmatpush.msra.mxu0 %v3343
      %3394 = vmatpush.msra.mxu0 %v3341
      %3395 = vmatpush.msra.mxu0 %v3339
      %3396 = vmatpush.msra.mxu0 %v3337
      %3397 = vmatpush.msra.mxu0 %v3335
      %3398 = vmatpush.msra.mxu0 %v3333
      %3399 = vmatpush.msra.mxu0 %v3331
      %3400 = vmatpush.msra.mxu0 %v3329
      %3401 = vmatpush.msra.mxu0 %v3327
      %3402 = vmatmul.f32.gmra.mxu0 %v3294
      %v3403 = vpop.f32.mrf.mxu0
      %v3404 = vadd.f32 %v3384, %v3403
      %3405 = vdwg.mxu0
      %3406 = vmatpush.msra.mxu0 %v3326
      %3407 = vmatpush.msra.mxu0 %v3324
      %3408 = vmatpush.msra.mxu0 %v3322
      %3409 = vmatpush.msra.mxu0 %v3320
      %3410 = vmatpush.msra.mxu0 %v3318
      %3411 = vmatpush.msra.mxu0 %v3316
      %3412 = vmatpush.msra.mxu0 %v3314
      %3413 = vmatpush.msra.mxu0 %v3312
      %3414 = vmatpush.msra.mxu0 %v3310
      %3415 = vmatpush.msra.mxu0 %v3308
      %3416 = vmatpush.msra.mxu0 %v3306
      %3417 = vmatpush.msra.mxu0 %v3304
      %3418 = vmatpush.msra.mxu0 %v3302
      %3419 = vmatpush.msra.mxu0 %v3300
      %3420 = vmatpush.msra.mxu0 %v3298
      %3421 = vmatpush.msra.mxu0 %v3296
      %3422 = vmatmul.f32.gmra.mxu0 %v3293
      %v3423 = vpop.f32.mrf.mxu0
      %v3424 = vadd.f32 %v3363, %v3423
      %3425 = vdwg.mxu0
      %3426 = vmatpush.msra.mxu0 %v3358
      %3427 = vmatpush.msra.mxu0 %v3356
      %3428 = vmatpush.msra.mxu0 %v3354
      %3429 = vmatpush.msra.mxu0 %v3352
      %3430 = vmatpush.msra.mxu0 %v3350
      %3431 = vmatpush.msra.mxu0 %v3348
      %3432 = vmatpush.msra.mxu0 %v3346
      %3433 = vmatpush.msra.mxu0 %v3344
      %3434 = vmatpush.msra.mxu0 %v3342
      %3435 = vmatpush.msra.mxu0 %v3340
      %3436 = vmatpush.msra.mxu0 %v3338
      %3437 = vmatpush.msra.mxu0 %v3336
      %3438 = vmatpush.msra.mxu0 %v3334
      %3439 = vmatpush.msra.mxu0 %v3332
      %3440 = vmatpush.msra.mxu0 %v3330
      %3441 = vmatpush.msra.mxu0 %v3328
      %3442 = vmatmul.f32.gmra.mxu0 %v3294
      %v3443 = vpop.f32.mrf.mxu0
      %v3444 = vadd.f32 %v3424, %v3443
      %3445 = vdwg.mxu0
      %v3446 = vmax.f32 %v3404, 0.0
      %v3447 = vmax.f32 %v3444, 0.0
      %v3448 = vld [vmem:[%s18] sm:$0xff]
      %v3449 = vld [vmem:[%s18 + $0x8] sm:$0xff]
      %v3450 = vld [vmem:[%s18 + $0x10] sm:$0xff]
      %v3451 = vld [vmem:[%s18 + $0x18] sm:$0xff]
      %v3452 = vld [vmem:[%s18 + $0x20] sm:$0xff]
      %v3453 = vld [vmem:[%s18 + $0x28] sm:$0xff]
      %v3454 = vld [vmem:[%s18 + $0x30] sm:$0xff]
      %v3455 = vld [vmem:[%s18 + $0x38] sm:$0xff]
      %v3456 = vld [vmem:[%s18 + $0x40] sm:$0xff]
      %v3457 = vld [vmem:[%s18 + $0x48] sm:$0xff]
      %v3458 = vld [vmem:[%s18 + $0x50] sm:$0xff]
      %v3459 = vld [vmem:[%s18 + $0x58] sm:$0xff]
      %v3460 = vld [vmem:[%s18 + $0x60] sm:$0xff]
      %v3461 = vld [vmem:[%s18 + $0x68] sm:$0xff]
      %v3462 = vld [vmem:[%s18 + $0x70] sm:$0xff]
      %v3463 = vld [vmem:[%s18 + $0x78] sm:$0xff]
      %v3464 = vld [vmem:[%s18 + $0x80] sm:$0xff]
      %v3465 = vld [vmem:[%s18 + $0x88] sm:$0xff]
      %v3466 = vld [vmem:[%s18 + $0x90] sm:$0xff]
      %v3467 = vld [vmem:[%s18 + $0x98] sm:$0xff]
      %v3468 = vld [vmem:[%s18 + $0xa0] sm:$0xff]
      %v3469 = vld [vmem:[%s18 + $0xa8] sm:$0xff]
      %v3470 = vld [vmem:[%s18 + $0xb0] sm:$0xff]
      %v3471 = vld [vmem:[%s18 + $0xb8] sm:$0xff]
      %v3472 = vld [vmem:[%s18 + $0xc0] sm:$0xff]
      %v3473 = vld [vmem:[%s18 + $0xc8] sm:$0xff]
      %v3474 = vld [vmem:[%s18 + $0xd0] sm:$0xff]
      %v3475 = vld [vmem:[%s18 + $0xd8] sm:$0xff]
      %v3476 = vld [vmem:[%s18 + $0xe0] sm:$0xff]
      %v3477 = vld [vmem:[%s18 + $0xe8] sm:$0xff]
      %v3478 = vld [vmem:[%s18 + $0xf0] sm:$0xff]
      %v3479 = vld [vmem:[%s18 + $0xf8] sm:$0xff]
      %v3480 = vld [vmem:[%s20] sm:$0x1]
      %v3482 = vperm.slane %v3480, 0
      %3484 = vmatpush.msra.mxu0 %v3463
      %3485 = vmatpush.msra.mxu0 %v3462
      %3486 = vmatpush.msra.mxu0 %v3461
      %3487 = vmatpush.msra.mxu0 %v3460
      %3488 = vmatpush.msra.mxu0 %v3459
      %3489 = vmatpush.msra.mxu0 %v3458
      %3490 = vmatpush.msra.mxu0 %v3457
      %3491 = vmatpush.msra.mxu0 %v3456
      %3492 = vmatpush.msra.mxu0 %v3455
      %3493 = vmatpush.msra.mxu0 %v3454
      %3494 = vmatpush.msra.mxu0 %v3453
      %3495 = vmatpush.msra.mxu0 %v3452
      %3496 = vmatpush.msra.mxu0 %v3451
      %3497 = vmatpush.msra.mxu0 %v3450
      %3498 = vmatpush.msra.mxu0 %v3449
      %3499 = vmatpush.msra.mxu0 %v3448
      %3500 = vmatmul.f32.gmra.mxu0 %v3446
      %v3501 = vpop.f32.mrf.mxu0
      %v3502 = vadd.f32 %v3482, %v3501
      %3503 = vdwg.mxu0
      %3504 = vmatpush.msra.mxu0 %v3479
      %3505 = vmatpush.msra.mxu0 %v3478
      %3506 = vmatpush.msra.mxu0 %v3477
      %3507 = vmatpush.msra.mxu0 %v3476
      %3508 = vmatpush.msra.mxu0 %v3475
      %3509 = vmatpush.msra.mxu0 %v3474
      %3510 = vmatpush.msra.mxu0 %v3473
      %3511 = vmatpush.msra.mxu0 %v3472
      %3512 = vmatpush.msra.mxu0 %v3471
      %3513 = vmatpush.msra.mxu0 %v3470
      %3514 = vmatpush.msra.mxu0 %v3469
      %3515 = vmatpush.msra.mxu0 %v3468
      %3516 = vmatpush.msra.mxu0 %v3467
      %3517 = vmatpush.msra.mxu0 %v3466
      %3518 = vmatpush.msra.mxu0 %v3465
      %3519 = vmatpush.msra.mxu0 %v3464
      %3520 = vmatmul.f32.gmra.mxu0 %v3447
      %v3521 = vpop.f32.mrf.mxu0
      %v3522 = vadd.f32 %v3502, %v3521
      %3523 = vdwg.mxu0
      %3524 = vst [vmem:[%s699] sm:$0xff] %v3522
      %p3525 = scmp.lt.s32.totalorder %s32, 1
      %s3526 = scalar_select %p3525, %s32, 1
      %s3527 = smul.addr %s3526, 8
      %s3528 = scalar_lea.vmem %s21, %s3527
      // Predicated region
      $region105: #{act_commit_net_forward.1} parent=103 // pred_check
        %p3529 = pneg %p511
      $region106: #{act_commit_net_forward.1} parent=103 // pred_check_branch
        %3531 = sbr.rel (%p3529) target = $region108
      $region107: #{act_commit_net_forward.1} parent=103 // pred_region
        _
      $region108: #{act_commit_net_forward.1} parent=103 // pred_fallthru
        _
    $region104: #{act_commit_net_forward.1} parent=5 // pred_fallthru
      _
    %p3532 = scmp.le.s32.totalorder 2, %s27
    // Predicated region
    $region109: #{act_commit_net_forward.1} parent=5 // pred_check
      %p3533 = pneg %p3532
    $region110: #{act_commit_net_forward.1} parent=5 // pred_check_branch
      %3535 = sbr.rel (%p3533) target = $region112
    $region111: #{act_commit_net_forward.1} parent=5 // pred_region
      %s3536 = ssub.s32 %s27, 2
      // Predicated region
      $region113: #{act_commit_net_forward.1} parent=111 // pred_check
        %p3537 = pneg %p517
      $region114: #{act_commit_net_forward.1} parent=111 // pred_check_branch
        %3539 = sbr.rel (%p3537) target = $region116
      $region115: #{act_commit_net_forward.1} parent=111 // pred_region
        %p3540 = scmp.lt.s32.totalorder %s33, 1
        %s3541 = scalar_select %p3540, %s33, 1
        %s3542 = smul.addr %s3541, 8
        %s3543 = scalar_lea.vmem %s21, %s3542
      $region116: #{act_commit_net_forward.1} parent=111 // pred_fallthru
        _
    $region112: #{act_commit_net_forward.1} parent=5 // pred_fallthru
      _
  $region6: #{act_commit_net_forward.1} parent=0 // loop_footer
    %s31 = sadd.s32 1, %s27
  $region7: #{act_commit_net_forward.1} parent=0 // loop_footer_branch
    %26 = sbr.rel target = $region3
  $region8: #{act_commit_net_forward.1} parent=0 // loop_exit
    _

</llo_original>
